<compile_context>
chip_gen: v6e
topology: v6e:2x2x1
jax: 0.10.0
libtpu: 0.0.40
codegen_flags: <defaults>
</compile_context>

<pallas_src>
import jax
import jax.numpy as jnp
import numpy as np
from jax.experimental import pallas as pl
from jax.experimental.pallas import tpu as pltpu


def _round_up(x, m):
    return (x + m - 1) // m * m


def _sine_layer_kernel(x_ref, w_ref, b_ref, o_ref):
    """y = sin(x @ (omega*W^T) + omega*b); omega pre-folded into W and b."""
    # Cast the activation tile to the weight dtype (bf16 by default) in VMEM
    # so the MXU runs its native bf16 path; accumulate in f32; bias + sin f32.
    x = x_ref[...].astype(w_ref.dtype)
    z = jnp.dot(x, w_ref[...], preferred_element_type=jnp.float32)
    z = z + b_ref[...]                      # broadcast bias over rows (VPU)
    o_ref[...] = jnp.sin(z).astype(o_ref.dtype)


def prepare_sine_layer_params(weight, bias, omega, *, param_dtype=jnp.bfloat16):
    """One-time parameter transform (amortized over all forward calls).

    * Transposes the PyTorch-layout weight (out, in) -> (in, out).
    * Folds omega into W and b:  sin(omega*(x W^T + b)) == sin(x (omega W)^T + omega b).
    * Pads the output dim to a multiple of 128 only when out_features >= 128
      and misaligned (lane-dense unmasked stores); small widths stay exact.
    * Stores W in bf16 by default (halves weight DMA, native MXU path).
      Pass param_dtype=jnp.float32 for a bit-exact f32 matmul path.
    """
    m, k = weight.shape
    if m >= 128 and m % 128 != 0:
        m_store = _round_up(m, 128)
    else:
        m_store = m

    w_t = jnp.asarray(weight, jnp.float32).T * jnp.float32(omega)   # (k, m)
    b = jnp.asarray(bias, jnp.float32) * jnp.float32(omega)         # (m,)
    if m_store != m:
        w_t = jnp.pad(w_t, ((0, 0), (0, m_store - m)))
        b = jnp.pad(b, (0, m_store - m))
    return w_t.astype(param_dtype), b.reshape(1, m_store)


def _vmem_bytes(tn, k, m_store, x_itemsize, w_itemsize, out_itemsize):
    return (2 * tn * k * x_itemsize            # double-buffered x tile
            + 2 * tn * m_store * out_itemsize  # double-buffered output tile
            + k * m_store * w_itemsize         # resident weight (1 buffer)
            + m_store * 4)                     # resident bias


def sine_layer(x, w_t, b, out_features, *, tn=1024):
    """Pallas SineLayer forward.

    Args:
      x:            (..., in_features) float32 or bfloat16
      w_t:          (in_features, M_store) from prepare_sine_layer_params
      b:            (1, M_store)           from prepare_sine_layer_params
      out_features: true output width (<= M_store)
      tn:           row tile size (multiple of 8), clamped by a VMEM budget
    Returns:
      (..., out_features) in x's floating dtype.
    """
    lead = x.shape[:-1]
    k = x.shape[-1]
    k_w, m_store = w_t.shape
    assert k == k_w, (k, k_w)
    assert out_features <= m_store, (out_features, m_store)

    if x.dtype not in (jnp.float32, jnp.bfloat16):
        x = x.astype(jnp.float32)
    out_dtype = x.dtype

    n = int(np.prod(lead, dtype=np.int64)) if lead else 1
    if n == 0 or out_features == 0:
        return jnp.zeros((*lead, out_features), out_dtype)

    x2 = x.reshape(n, k)
    out_itemsize = x2.dtype.itemsize

    # Row tile: multiple of 8 sublanes, clamped for small N, sized so the
    # double-buffered tiles fit under the default scoped-VMEM limit on every
    # generation (v7x: 32 MiB scoped / 64 MiB physical).
    tn = max(8, min(_round_up(tn, 8), _round_up(n, 8)))
    vmem_budget = 28 * 1024 * 1024
    while tn > 8 and _vmem_bytes(tn, k, m_store, x2.dtype.itemsize,
                                 w_t.dtype.itemsize, out_itemsize) > vmem_budget:
        tn = max(8, _round_up(tn // 2, 8))

    grid = (pl.cdiv(n, tn),)   # partial last row tile handled by Pallas masking

    cost = pl.CostEstimate(
        flops=2 * n * out_features * k,
        transcendentals=n * out_features,
        bytes_accessed=(x2.size * x2.dtype.itemsize
                        + w_t.size * w_t.dtype.itemsize
                        + b.size * b.dtype.itemsize
                        + n * out_features * out_itemsize),
    )

    def _build_in_specs(resident_pipeline_mode):
        resident_kwargs = ({} if resident_pipeline_mode is None
                           else {"pipeline_mode": resident_pipeline_mode})
        return [
            # x: row-tiled, auto double-buffered (DMA overlaps MXU compute).
            pl.BlockSpec((tn, k), lambda i: (i, 0)),
            # W / b: constant index_map -> VMEM-resident, DMA'd once;
            # single-buffered (no prefetch overlap needed) to free VMEM.
            pl.BlockSpec((k, m_store), lambda i: (0, 0), **resident_kwargs),
            pl.BlockSpec((1, m_store), lambda i: (0, 0), **resident_kwargs),
        ]

    def _run(in_specs):
        return pl.pallas_call(
            _sine_layer_kernel,
            out_shape=jax.ShapeDtypeStruct((n, m_store), out_dtype),
            grid_spec=pltpu.PrefetchScalarGridSpec(
                num_scalar_prefetch=0,
                grid=grid,
                in_specs=in_specs,
                out_specs=pl.BlockSpec((tn, m_store), lambda i: (i, 0)),
            ),
            compiler_params=pltpu.CompilerParams(
                # Independent row tiles -> megacore sharding on v7x.
                dimension_semantics=("parallel",),
                vmem_limit_bytes=32 * 1024 * 1024,
            ),
            cost_estimate=cost,
        )(x2, w_t, b)

    try:
        out = _run(_build_in_specs(pl.Buffered(1)))
    except Exception:
        # Fallback for jax versions without BlockSpec.pipeline_mode support.
        out = _run(_build_in_specs(None))

    if m_store != out_features:
        out = out[:, :out_features]
    return out.reshape(*lead, out_features)


def init_sine_layer_params(key, in_features, out_features, is_first, omega):
    """Deterministic parameter init matching SineLayer.init_weights."""
    kw, kb = jax.random.split(key)
    if is_first:
        bound_w = 1.0 / in_features
    else:
        bound_w = np.sqrt(6.0 / in_features) / omega
    weight = jax.random.uniform(
        kw, (out_features, in_features), jnp.float32,
        minval=-bound_w, maxval=bound_w)
    # PyTorch nn.Linear default bias init: U(-1/sqrt(in), 1/sqrt(in))
    bound_b = 1.0 / np.sqrt(in_features)
    bias = jax.random.uniform(
        kb, (out_features,), jnp.float32, minval=-bound_b, maxval=bound_b)
    return weight, bias


if __name__ == "__main__":
    key = jax.random.PRNGKey(0)
    k_x, k_p = jax.random.split(key)

    batch = 2
    seq = 64
    in_features = 16
    out_features = 32
    omega = 10.0
    is_first = True

    x = jax.random.normal(k_x, (batch, seq, in_features), jnp.float32)
    weight, bias = init_sine_layer_params(
        k_p, in_features, out_features, is_first, omega)

    # Reference in plain JAX (f32, PyTorch expression order).
    y_ref = jnp.sin(omega * (x @ weight.T + bias))

    # Default fast path: bf16 matmul operands, omega folded into params.
    w_t, b = prepare_sine_layer_params(weight, bias, omega)
    y = sine_layer(x, w_t, b, out_features)
    y = jax.block_until_ready(y)
    np.testing.assert_allclose(np.asarray(y), np.asarray(y_ref),
                               rtol=5e-2, atol=5e-2)
    assert y.shape == (batch, seq, out_features)

    # Exact path: f32 params reproduce the reference tightly.
    w_t32, b32 = prepare_sine_layer_params(weight, bias, omega,
                                           param_dtype=jnp.float32)
    y32 = jax.block_until_ready(sine_layer(x, w_t32, b32, out_features))
    np.testing.assert_allclose(np.asarray(y32), np.asarray(y_ref),
                               rtol=1e-4, atol=1e-4)

    print("KERNEL_OK")
</pallas_src>

<mosaic_0001>
module attributes {stable_mosaic.version = 11 : i64} {
  func.func @_sine_layer_kernel(%arg0: i32, %arg1: memref<128x16xf32, #tpu.memory_space<vmem>>, %arg2: memref<16x32xbf16, #tpu.memory_space<vmem>>, %arg3: memref<1x32xf32, #tpu.memory_space<vmem>>, %arg4: memref<128x32xf32, #tpu.memory_space<vmem>>) attributes {dimension_semantics = [#tpu.dimension_semantics<parallel>], iteration_bounds = array<i64: 1>, scalar_prefetch = 0 : i64, scratch_operands = 0 : i64, tpu.core_type = #tpu.core_type<tc>, window_params = [{transform_indices = @transform_0, window_bounds = array<i64: 128, 16>}, {pipeline_mode = #tpu.pipeline_mode<synchronous>, transform_indices = @transform_1, window_bounds = array<i64: 16, 32>}, {pipeline_mode = #tpu.pipeline_mode<synchronous>, transform_indices = @transform_2, window_bounds = array<i64: 1, 32>}, {transform_indices = @transform_3, window_bounds = array<i64: 128, 32>}]} {
    %c0 = arith.constant 0 : index
    %c0_0 = arith.constant 0 : index
    %0 = vector.load %arg1[%c0, %c0_0] : memref<128x16xf32, #tpu.memory_space<vmem>>, vector<128x16xf32>
    %1 = arith.truncf %0 : vector<128x16xf32> to vector<128x16xbf16>
    %c0_1 = arith.constant 0 : index
    %c0_2 = arith.constant 0 : index
    %2 = vector.load %arg2[%c0_1, %c0_2] : memref<16x32xbf16, #tpu.memory_space<vmem>>, vector<16x32xbf16>
    %cst = arith.constant dense<0.000000e+00> : vector<128x32xf32>
    %3 = tpu.matmul %1, %2, %cst {dimension_numbers = #tpu.dot_dimension_numbers<[1], [0], [0], [1], [0, 0, 1, 1], [], []>} : vector<128x16xbf16>, vector<16x32xbf16>, vector<128x32xf32> -> vector<128x32xf32>
    %c0_3 = arith.constant 0 : index
    %c0_4 = arith.constant 0 : index
    %4 = vector.load %arg3[%c0_3, %c0_4] : memref<1x32xf32, #tpu.memory_space<vmem>>, vector<1x32xf32>
    %5 = vector.broadcast %4 : vector<1x32xf32> to vector<128x32xf32>
    %6 = arith.addf %3, %5 : vector<128x32xf32>
    %7 = math.sin %6 : vector<128x32xf32>
    %c0_5 = arith.constant 0 : index
    %c0_6 = arith.constant 0 : index
    %8 = vector.load %arg4[%c0_5, %c0_6] : memref<128x32xf32, #tpu.memory_space<vmem>>, vector<128x32xf32>
    tpu.vector_store %arg4[%c0_5, %c0_6], %7 {strides = array<i32>} : memref<128x32xf32, #tpu.memory_space<vmem>>, vector<128x32xf32>,
    return
  }
  func.func @transform_0(%arg0: i32) -> (i32, i32) {
    %c0_i32 = arith.constant 0 : i32
    %c0_i32_0 = arith.constant 0 : i32
    return %arg0, %c0_i32 : i32, i32
  }
  func.func @transform_1(%arg0: i32) -> (i32, i32) {
    %c0_i32 = arith.constant 0 : i32
    %c0_i32_0 = arith.constant 0 : i32
    %c0_i32_1 = arith.constant 0 : i32
    return %c0_i32, %c0_i32_0 : i32, i32
  }
  func.func @transform_2(%arg0: i32) -> (i32, i32) {
    %c0_i32 = arith.constant 0 : i32
    %c0_i32_0 = arith.constant 0 : i32
    %c0_i32_1 = arith.constant 0 : i32
    return %c0_i32, %c0_i32_0 : i32, i32
  }
  func.func @transform_3(%arg0: i32) -> (i32, i32) {
    %c0_i32 = arith.constant 0 : i32
    %c0_i32_0 = arith.constant 0 : i32
    return %arg0, %c0_i32 : i32, i32
  }
}

module attributes {stable_mosaic.version = 11 : i64} {
  func.func @_sine_layer_kernel(%arg0: i32, %arg1: memref<128x16xf32, #tpu.memory_space<vmem>>, %arg2: memref<16x32xbf16, #tpu.memory_space<vmem>>, %arg3: memref<1x32xf32, #tpu.memory_space<vmem>>, %arg4: memref<128x32xf32, #tpu.memory_space<vmem>>) attributes {dimension_semantics = [#tpu.dimension_semantics<parallel>], iteration_bounds = array<i64: 1>, scalar_prefetch = 0 : i64, scratch_operands = 0 : i64, tpu.core_type = #tpu.core_type<tc>, window_params = [{transform_indices = @transform_0, window_bounds = array<i64: 128, 16>}, {pipeline_mode = #tpu.pipeline_mode<synchronous>, transform_indices = @transform_1, window_bounds = array<i64: 16, 32>}, {pipeline_mode = #tpu.pipeline_mode<synchronous>, transform_indices = @transform_2, window_bounds = array<i64: 1, 32>}, {transform_indices = @transform_3, window_bounds = array<i64: 128, 32>}]} {
    %c0 = arith.constant 0 : index
    %c0_0 = arith.constant 0 : index
    %0 = vector.load %arg1[%c0, %c0_0] : memref<128x16xf32, #tpu.memory_space<vmem>>, vector<128x16xf32>
    %1 = arith.truncf %0 : vector<128x16xf32> to vector<128x16xbf16>
    %c0_1 = arith.constant 0 : index
    %c0_2 = arith.constant 0 : index
    %2 = vector.load %arg2[%c0_1, %c0_2] : memref<16x32xbf16, #tpu.memory_space<vmem>>, vector<16x32xbf16>
    %cst = arith.constant dense<0.000000e+00> : vector<128x32xf32>
    %3 = tpu.matmul %1, %2, %cst {dimension_numbers = #tpu.dot_dimension_numbers<[1], [0], [0], [1], [0, 0, 1, 1], [], []>} : vector<128x16xbf16>, vector<16x32xbf16>, vector<128x32xf32> -> vector<128x32xf32>
    %c0_3 = arith.constant 0 : index
    %c0_4 = arith.constant 0 : index
    %4 = vector.load %arg3[%c0_3, %c0_4] : memref<1x32xf32, #tpu.memory_space<vmem>>, vector<1x32xf32>
    %5 = vector.broadcast %4 : vector<1x32xf32> to vector<128x32xf32>
    %6 = arith.addf %3, %5 : vector<128x32xf32>
    %7 = math.sin %6 : vector<128x32xf32>
    %c0_5 = arith.constant 0 : index
    %c0_6 = arith.constant 0 : index
    %8 = vector.load %arg4[%c0_5, %c0_6] : memref<128x32xf32, #tpu.memory_space<vmem>>, vector<128x32xf32>
    tpu.vector_store %arg4[%c0_5, %c0_6], %7 {strides = array<i32>} : memref<128x32xf32, #tpu.memory_space<vmem>>, vector<128x32xf32>,
    return
  }
  func.func @transform_0(%arg0: i32) -> (i32, i32) {
    %c0_i32 = arith.constant 0 : i32
    %c0_i32_0 = arith.constant 0 : i32
    return %arg0, %c0_i32 : i32, i32
  }
  func.func @transform_1(%arg0: i32) -> (i32, i32) {
    %c0_i32 = arith.constant 0 : i32
    %c0_i32_0 = arith.constant 0 : i32
    %c0_i32_1 = arith.constant 0 : i32
    return %c0_i32, %c0_i32_0 : i32, i32
  }
  func.func @transform_2(%arg0: i32) -> (i32, i32) {
    %c0_i32 = arith.constant 0 : i32
    %c0_i32_0 = arith.constant 0 : i32
    %c0_i32_1 = arith.constant 0 : i32
    return %c0_i32, %c0_i32_0 : i32, i32
  }
  func.func @transform_3(%arg0: i32) -> (i32, i32) {
    %c0_i32 = arith.constant 0 : i32
    %c0_i32_0 = arith.constant 0 : i32
    return %arg0, %c0_i32 : i32, i32
  }
}

</mosaic_0001>

<llo_original>
// kernel: tpu_custom_call.1
$region0: #{tpu_custom_call.1}
  #allocation0 [shape = 'u32[]', space=smem, size = 0x4, offset = 0x4, fixed_abs, tag = 'smem constant byte address 0x4 - core index']
  #allocation1 [shape = 'u32[144,128]{1,0:T(1,128)}', space=vmem, size = 0x12000, scoped, tag = 'internal scratch']
  %s0 = inlined_call_operand.vmem [shape: f32[128,16], index: 0, kind: input, shape index: {}]
  %s1 = inlined_call_operand.vmem [shape: bf16[16,32], index: 1, kind: input, shape index: {}]
  %s2 = inlined_call_operand.vmem [shape: f32[1,32], index: 2, kind: input, shape index: {}]
  %s3 = inlined_call_operand.vmem [shape: f32[128,32], index: 3, kind: output, shape index: {}]
  %s4 = sld [smem:[#allocation0]]
  $region22: #{tpu_custom_call.1} parent=0
    _
  %s6 = ssub.s32 1, %s4
  %s7 = scalar_select 0, %s6, %s4
  // Predicated region
  $region2: #{tpu_custom_call.1} parent=0 // pred_check
    _
  $region3: #{tpu_custom_call.1} parent=0 // pred_check_branch
    %9 = sbr.rel (0) target = $region5
  $region4: #{tpu_custom_call.1} parent=0 // pred_region
    _
  $region5: #{tpu_custom_call.1} parent=0 // pred_fallthru
    _
  // Predicated region
  $region6: #{tpu_custom_call.1} parent=0 // pred_check
    _
  $region7: #{tpu_custom_call.1} parent=0 // pred_check_branch
    %11 = sbr.rel (0) target = $region9
  $region8: #{tpu_custom_call.1} parent=0 // pred_region
    _
  $region9: #{tpu_custom_call.1} parent=0 // pred_fallthru
    _
  // Predicated region
  $region10: #{tpu_custom_call.1} parent=0 // pred_check
    _
  $region11: #{tpu_custom_call.1} parent=0 // pred_check_branch
    %13 = sbr.rel (0) target = $region13
  $region12: #{tpu_custom_call.1} parent=0 // pred_region
    _
  $region13: #{tpu_custom_call.1} parent=0 // pred_fallthru
    _
  %v15 = vld [vmem:[%s0] sm:$0xff]
  %v16 = vld [vmem:[%s0 + $0x8] sm:$0xff]
  %v17 = vld [vmem:[%s0 + $0x10] sm:$0xff]
  %v18 = vld [vmem:[%s0 + $0x18] sm:$0xff]
  %v19 = vld [vmem:[%s0 + $0x20] sm:$0xff]
  %v20 = vld [vmem:[%s0 + $0x28] sm:$0xff]
  %v21 = vld [vmem:[%s0 + $0x30] sm:$0xff]
  %v22 = vld [vmem:[%s0 + $0x38] sm:$0xff]
  %v23 = vld [vmem:[%s0 + $0x40] sm:$0xff]
  %v24 = vld [vmem:[%s0 + $0x48] sm:$0xff]
  %v25 = vld [vmem:[%s0 + $0x50] sm:$0xff]
  %v26 = vld [vmem:[%s0 + $0x58] sm:$0xff]
  %v27 = vld [vmem:[%s0 + $0x60] sm:$0xff]
  %v28 = vld [vmem:[%s0 + $0x68] sm:$0xff]
  %v29 = vld [vmem:[%s0 + $0x70] sm:$0xff]
  %v30 = vld [vmem:[%s0 + $0x78] sm:$0xff]
  %v31 = vpack.c.bf16 %v16, %v15
  %v32 = vpack.c.bf16 %v18, %v17
  %v33 = vpack.c.bf16 %v20, %v19
  %v34 = vpack.c.bf16 %v22, %v21
  %v35 = vpack.c.bf16 %v24, %v23
  %v36 = vpack.c.bf16 %v26, %v25
  %v37 = vpack.c.bf16 %v28, %v27
  %v38 = vpack.c.bf16 %v30, %v29
  %v39 = vld [vmem:[%s1] sm:$0xf]
  %v40 = vld [vmem:[%s1 + $0x4] sm:$0xf]
  %v41 = vld [vmem:[%s2] sm:$0x1]
  %v43 = vlaneseq
  %v44 = vshrl.u32 %v43, 7
  %v45 = vsub.s32 0, %v44
  %v46 = vrot.slane %v41, %v45
  %v50 = vunpack.c.l.b16 %v39
  %v51 = vunpack.c.l.b16 %v40
  %v52 = vpack.c.b16 %v51, %v50
  %vm54 = vcmask 130048
  %v56 = vsel %vm54, %v31, 0
  %v59 = vsel %vm54, %v32, 0
  %v62 = vsel %vm54, %v33, 0
  %v65 = vsel %vm54, %v34, 0
  %v68 = vsel %vm54, %v35, 0
  %v71 = vsel %vm54, %v36, 0
  %v74 = vsel %vm54, %v37, 0
  %v77 = vsel %vm54, %v38, 0
  %79 = vmatprep.subr.bf16.mxu0 0
  %80 = vmatpush1.bf16.msra.mxu0 0
  %81 = vmatprep.subr.bf16.mxu0 0
  %82 = vmatpush1.bf16.msra.mxu0 0
  %83 = vmatprep.subr.bf16.mxu0 0
  %84 = vmatpush1.bf16.msra.mxu0 0
  %85 = vmatprep.subr.bf16.mxu0 0
  %86 = vmatpush1.bf16.msra.mxu0 0
  %87 = vmatprep.subr.bf16.mxu0 0
  %88 = vmatpush1.bf16.msra.mxu0 0
  %89 = vmatprep.subr.bf16.mxu0 0
  %90 = vmatpush1.bf16.msra.mxu0 0
  %91 = vmatprep.subr.bf16.mxu0 0
  %92 = vmatpush1.bf16.msra.mxu0 0
  %93 = vmatprep.subr.bf16.mxu0 0
  %94 = vmatpush1.bf16.msra.mxu0 %v52
  %95 = vmatprep.subr.bf16.mxu0 0
  %96 = vmatpush2.bf16.msra.mxu0 0
  %97 = vmatprep.subr.bf16.mxu0 0
  %98 = vmatpush2.bf16.msra.mxu0 0
  %99 = vmatprep.subr.bf16.mxu0 0
  %100 = vmatpush2.bf16.msra.mxu0 0
  %101 = vmatprep.subr.bf16.mxu0 0
  %102 = vmatpush2.bf16.msra.mxu0 0
  %103 = vmatprep.subr.bf16.mxu0 0
  %104 = vmatpush2.bf16.msra.mxu0 0
  %105 = vmatprep.subr.bf16.mxu0 0
  %106 = vmatpush2.bf16.msra.mxu0 0
  %107 = vmatprep.subr.bf16.mxu0 0
  %108 = vmatpush2.bf16.msra.mxu0 0
  %109 = vmatprep.subr.bf16.mxu0 0
  %110 = vmatpush2.bf16.msra.mxu0 0
  %111 = vmatprep.mubr.bf16.mxu0 0
  %112 = vmatmul.mubr.bf16.gmra.mxu0 %v56
  %v113 = vpop.f32.mrf.mxu0
  %v114 = vadd.f32 %v46, %v113
  %v115 = vpop.f32.mrf.mxu0
  %v116 = vpop.f32.mrf.mxu0
  %v117 = vadd.f32 %v46, %v116
  %v118 = vpop.f32.mrf.mxu0
  %119 = vmatprep.mubr.bf16.mxu0 0
  %120 = vmatmul.mubr.bf16.gmra.mxu0 %v59
  %v121 = vpop.f32.mrf.mxu0
  %v122 = vadd.f32 %v46, %v121
  %v123 = vpop.f32.mrf.mxu0
  %v124 = vpop.f32.mrf.mxu0
  %v125 = vadd.f32 %v46, %v124
  %v126 = vpop.f32.mrf.mxu0
  %127 = vmatprep.mubr.bf16.mxu0 0
  %128 = vmatmul.mubr.bf16.gmra.mxu0 %v62
  %v129 = vpop.f32.mrf.mxu0
  %v130 = vadd.f32 %v46, %v129
  %v131 = vpop.f32.mrf.mxu0
  %v132 = vpop.f32.mrf.mxu0
  %v133 = vadd.f32 %v46, %v132
  %v134 = vpop.f32.mrf.mxu0
  %135 = vmatprep.mubr.bf16.mxu0 0
  %136 = vmatmul.mubr.bf16.gmra.mxu0 %v65
  %v137 = vpop.f32.mrf.mxu0
  %v138 = vadd.f32 %v46, %v137
  %v139 = vpop.f32.mrf.mxu0
  %v140 = vpop.f32.mrf.mxu0
  %v141 = vadd.f32 %v46, %v140
  %v142 = vpop.f32.mrf.mxu0
  %143 = vmatprep.mubr.bf16.mxu0 0
  %144 = vmatmul.mubr.bf16.gmra.mxu0 %v68
  %v145 = vpop.f32.mrf.mxu0
  %v146 = vadd.f32 %v46, %v145
  %v147 = vpop.f32.mrf.mxu0
  %v148 = vpop.f32.mrf.mxu0
  %v149 = vadd.f32 %v46, %v148
  %v150 = vpop.f32.mrf.mxu0
  %151 = vmatprep.mubr.bf16.mxu0 0
  %152 = vmatmul.mubr.bf16.gmra.mxu0 %v71
  %v153 = vpop.f32.mrf.mxu0
  %v154 = vadd.f32 %v46, %v153
  %v155 = vpop.f32.mrf.mxu0
  %v156 = vpop.f32.mrf.mxu0
  %v157 = vadd.f32 %v46, %v156
  %v158 = vpop.f32.mrf.mxu0
  %159 = vmatprep.mubr.bf16.mxu0 0
  %160 = vmatmul.mubr.bf16.gmra.mxu0 %v74
  %v161 = vpop.f32.mrf.mxu0
  %v162 = vadd.f32 %v46, %v161
  %v163 = vpop.f32.mrf.mxu0
  %v164 = vpop.f32.mrf.mxu0
  %v165 = vadd.f32 %v46, %v164
  %v166 = vpop.f32.mrf.mxu0
  %167 = vmatprep.mubr.bf16.mxu0 0
  %168 = vmatmul.mubr.bf16.gmra.mxu0 %v77
  %v169 = vpop.f32.mrf.mxu0
  %v170 = vadd.f32 %v46, %v169
  %v171 = vpop.f32.mrf.mxu0
  %v172 = vpop.f32.mrf.mxu0
  %v173 = vadd.f32 %v46, %v172
  %v174 = vpop.f32.mrf.mxu0
  %175 = vdwg.mxu0
  %v176 = vand.u32 2147483647, %v114
  %vm177 = vcmp.le.f32.partialorder %v176, 0.7853982
  %vm178 = vcmp.lt.s32.totalorder %v114, 0
  %v179 = vand.u32 %v114, 2139095040
  %v180 = vshrl.u32 %v179, 23
  %v181 = vsub.s32 %v180, 127
  %v182 = vand.u32 2147483647, %v114
  %v183 = vand.u32 %v182, 8388607
  %v184 = vor.u32 %v183, 8388608
  %v185 = vsub.s32 0, %v184
  %v186 = vadd.s32 %v181, 1
  %vm187 = vcmp.gt.s32.totalorder %v186, 0
  %v188 = vsel %vm187, %v186, 0
  %v189 = vshrl.u32 %v188, 5
  %v190 = vand.u32 %v188, 31
  %v191 = vsub.s32 32, %v190
  %v192 = vshrl.u32 683565275, %v191
  %v193 = vshll.u32 683565275, %v190
  %v194 = vshrl.u32 2475754826, %v191
  %v195 = vor.u32 %v193, %v194
  %v196 = vshll.u32 2475754826, %v190
  %v197 = vshrl.u32 2131351028, %v191
  %v198 = vor.u32 %v196, %v197
  %v199 = vshll.u32 2131351028, %v190
  %v200 = vshrl.u32 2102212464, %v191
  %v201 = vor.u32 %v199, %v200
  %v202 = vshll.u32 2102212464, %v190
  %v203 = vshrl.u32 920167782, %v191
  %v204 = vor.u32 %v202, %v203
  %v205 = vshll.u32 920167782, %v190
  %v206 = vshrl.u32 1326507024, %v191
  %v207 = vor.u32 %v205, %v206
  %vm208 = vcmp.lt.s32.totalorder %v189, 1
  %vm209 = vcmp.lt.s32.totalorder %v189, 2
  %vm210 = vcmp.lt.s32.totalorder %v189, 3
  %vm211 = vcmp.lt.s32.totalorder %v189, 4
  %v212 = vsel %vm208, %v192, %v195
  %v213 = vsel %vm211, %v201, 2102212464
  %v214 = vsel %vm210, %v198, %v213
  %v215 = vsel %vm209, %v212, %v214
  %v216 = vsel %vm208, %v195, %v198
  %v217 = vsel %vm211, %v204, 920167782
  %v218 = vsel %vm210, %v201, %v217
  %v219 = vsel %vm209, %v216, %v218
  %v220 = vsel %vm208, %v198, %v201
  %v221 = vsel %vm211, %v207, 1326507024
  %v222 = vsel %vm210, %v204, %v221
  %v223 = vsel %vm209, %v220, %v222
  %v224 = vshll.u32 %v184, 8
  %v225 = vmul.u32.u64.compose %v224, %v223
  %v226 = vextract.low.u32 %v225
  %v227 = vextract.high.u32 %v225
  %v228 = vmul.u32.u64.compose %v224, %v219
  %v229 = vextract.low.u32 %v228
  %v230 = vextract.high.u32 %v228
  %v231 = vmul.u32 %v224, %v215
  %v232 = vadd.s32 %v227, %v229
  %vm233 = vc.u32 %v227, %v229
  %v234 = vadd.s32 %v230, 1
  %v235 = vsel %vm233, %v234, %v230
  %v236 = vadd.s32 %v231, %v235
  %v237 = vadd.s32 %v236, 536870912
  %v238 = vshrl.u32 %v237, 30
  %v239 = vshll.u32 %v238, 30
  %v240 = vsub.s32 %v236, %v239
  %vm241 = vcmp.lt.s32.totalorder %v240, 0
  %v242 = vsub.s32 0, %v240
  %v243 = vsel %vm241, %v242, %v240
  %v244 = vclz %v243
  %v245 = vsub.s32 %v244, 2
  %vm246 = vcmp.gt.s32.totalorder 0, %v245
  %v247 = vsel %vm246, 0, %v245
  %v248 = vsub.s32 32, %v247
  %v249 = vshll.u32 %v240, %v247
  %v250 = vshrl.u32 %v232, %v248
  %v251 = vor.u32 %v249, %v250
  %v252 = vsub.s32 4294967266, %v247
  %v253 = vadd.s32 %v252, 127
  %v254 = vshll.u32 %v253, 23
  %v255 = vor.u32 4788187, %v254
  %v256 = vand.u32 2147483647, %v255
  %v258 = vcvt.s32.f32 %v251
  %v259 = vmul.f32 %v258, %v256
  %v260 = vxor.u32 %v259, 2147483648
  %v261 = vsel %vm178, %v260, %v259
  %v262 = vsub.s32 4, %v238
  %v263 = vsel %vm178, %v262, %v238
  %v264 = vsel %vm177, %v114, %v261
  %v265 = vsel %vm177, 0, %v263
  %v266 = vcosq.f32.pop %v264
  %v267 = vsinq.f32.pop %v264
  %vm268 = vweird.f32 %v114
  %v269 = vadd.s32 %v265, 3
  %v270 = vand.u32 %v269, 3
  %vm271 = vcmp.lt.s32.totalorder %v270, 2
  %vm272 = vcmp.eq.s32.totalorder %v270, 0
  %v273 = vxor.u32 %v267, 2147483648
  %v274 = vsel %vm272, %v266, %v273
  %vm275 = vcmp.eq.s32.totalorder %v270, 2
  %v276 = vxor.u32 %v266, 2147483648
  %v277 = vsel %vm275, %v276, %v267
  %v278 = vsel %vm271, %v274, %v277
  %v279 = vsel %vm268, nan, %v278
  %v280 = vand.u32 2147483647, %v117
  %vm281 = vcmp.le.f32.partialorder %v280, 0.7853982
  %vm282 = vcmp.lt.s32.totalorder %v117, 0
  %v283 = vand.u32 %v117, 2139095040
  %v284 = vshrl.u32 %v283, 23
  %v285 = vsub.s32 %v284, 127
  %v286 = vand.u32 2147483647, %v117
  %v287 = vand.u32 %v286, 8388607
  %v288 = vor.u32 %v287, 8388608
  %v289 = vsub.s32 0, %v288
  %v290 = vadd.s32 %v285, 1
  %vm291 = vcmp.gt.s32.totalorder %v290, 0
  %v292 = vsel %vm291, %v290, 0
  %v293 = vshrl.u32 %v292, 5
  %v294 = vand.u32 %v292, 31
  %v295 = vsub.s32 32, %v294
  %v296 = vshrl.u32 683565275, %v295
  %v297 = vshll.u32 683565275, %v294
  %v298 = vshrl.u32 2475754826, %v295
  %v299 = vor.u32 %v297, %v298
  %v300 = vshll.u32 2475754826, %v294
  %v301 = vshrl.u32 2131351028, %v295
  %v302 = vor.u32 %v300, %v301
  %v303 = vshll.u32 2131351028, %v294
  %v304 = vshrl.u32 2102212464, %v295
  %v305 = vor.u32 %v303, %v304
  %v306 = vshll.u32 2102212464, %v294
  %v307 = vshrl.u32 920167782, %v295
  %v308 = vor.u32 %v306, %v307
  %v309 = vshll.u32 920167782, %v294
  %v310 = vshrl.u32 1326507024, %v295
  %v311 = vor.u32 %v309, %v310
  %vm312 = vcmp.lt.s32.totalorder %v293, 1
  %vm313 = vcmp.lt.s32.totalorder %v293, 2
  %vm314 = vcmp.lt.s32.totalorder %v293, 3
  %vm315 = vcmp.lt.s32.totalorder %v293, 4
  %v316 = vsel %vm312, %v296, %v299
  %v317 = vsel %vm315, %v305, 2102212464
  %v318 = vsel %vm314, %v302, %v317
  %v319 = vsel %vm313, %v316, %v318
  %v320 = vsel %vm312, %v299, %v302
  %v321 = vsel %vm315, %v308, 920167782
  %v322 = vsel %vm314, %v305, %v321
  %v323 = vsel %vm313, %v320, %v322
  %v324 = vsel %vm312, %v302, %v305
  %v325 = vsel %vm315, %v311, 1326507024
  %v326 = vsel %vm314, %v308, %v325
  %v327 = vsel %vm313, %v324, %v326
  %v328 = vshll.u32 %v288, 8
  %v329 = vmul.u32.u64.compose %v328, %v327
  %v330 = vextract.low.u32 %v329
  %v331 = vextract.high.u32 %v329
  %v332 = vmul.u32.u64.compose %v328, %v323
  %v333 = vextract.low.u32 %v332
  %v334 = vextract.high.u32 %v332
  %v335 = vmul.u32 %v328, %v319
  %v336 = vadd.s32 %v331, %v333
  %vm337 = vc.u32 %v331, %v333
  %v338 = vadd.s32 %v334, 1
  %v339 = vsel %vm337, %v338, %v334
  %v340 = vadd.s32 %v335, %v339
  %v341 = vadd.s32 %v340, 536870912
  %v342 = vshrl.u32 %v341, 30
  %v343 = vshll.u32 %v342, 30
  %v344 = vsub.s32 %v340, %v343
  %vm345 = vcmp.lt.s32.totalorder %v344, 0
  %v346 = vsub.s32 0, %v344
  %v347 = vsel %vm345, %v346, %v344
  %v348 = vclz %v347
  %v349 = vsub.s32 %v348, 2
  %vm350 = vcmp.gt.s32.totalorder 0, %v349
  %v351 = vsel %vm350, 0, %v349
  %v352 = vsub.s32 32, %v351
  %v353 = vshll.u32 %v344, %v351
  %v354 = vshrl.u32 %v336, %v352
  %v355 = vor.u32 %v353, %v354
  %v356 = vsub.s32 4294967266, %v351
  %v357 = vadd.s32 %v356, 127
  %v358 = vshll.u32 %v357, 23
  %v359 = vor.u32 4788187, %v358
  %v360 = vand.u32 2147483647, %v359
  %v362 = vcvt.s32.f32 %v355
  %v363 = vmul.f32 %v362, %v360
  %v364 = vxor.u32 %v363, 2147483648
  %v365 = vsel %vm282, %v364, %v363
  %v366 = vsub.s32 4, %v342
  %v367 = vsel %vm282, %v366, %v342
  %v368 = vsel %vm281, %v117, %v365
  %v369 = vsel %vm281, 0, %v367
  %v370 = vcosq.f32.pop %v368
  %v371 = vsinq.f32.pop %v368
  %vm372 = vweird.f32 %v117
  %v373 = vadd.s32 %v369, 3
  %v374 = vand.u32 %v373, 3
  %vm375 = vcmp.lt.s32.totalorder %v374, 2
  %vm376 = vcmp.eq.s32.totalorder %v374, 0
  %v377 = vxor.u32 %v371, 2147483648
  %v378 = vsel %vm376, %v370, %v377
  %vm379 = vcmp.eq.s32.totalorder %v374, 2
  %v380 = vxor.u32 %v370, 2147483648
  %v381 = vsel %vm379, %v380, %v371
  %v382 = vsel %vm375, %v378, %v381
  %v383 = vsel %vm372, nan, %v382
  %v384 = vand.u32 2147483647, %v122
  %vm385 = vcmp.le.f32.partialorder %v384, 0.7853982
  %vm386 = vcmp.lt.s32.totalorder %v122, 0
  %v387 = vand.u32 %v122, 2139095040
  %v388 = vshrl.u32 %v387, 23
  %v389 = vsub.s32 %v388, 127
  %v390 = vand.u32 2147483647, %v122
  %v391 = vand.u32 %v390, 8388607
  %v392 = vor.u32 %v391, 8388608
  %v393 = vsub.s32 0, %v392
  %v394 = vadd.s32 %v389, 1
  %vm395 = vcmp.gt.s32.totalorder %v394, 0
  %v396 = vsel %vm395, %v394, 0
  %v397 = vshrl.u32 %v396, 5
  %v398 = vand.u32 %v396, 31
  %v399 = vsub.s32 32, %v398
  %v400 = vshrl.u32 683565275, %v399
  %v401 = vshll.u32 683565275, %v398
  %v402 = vshrl.u32 2475754826, %v399
  %v403 = vor.u32 %v401, %v402
  %v404 = vshll.u32 2475754826, %v398
  %v405 = vshrl.u32 2131351028, %v399
  %v406 = vor.u32 %v404, %v405
  %v407 = vshll.u32 2131351028, %v398
  %v408 = vshrl.u32 2102212464, %v399
  %v409 = vor.u32 %v407, %v408
  %v410 = vshll.u32 2102212464, %v398
  %v411 = vshrl.u32 920167782, %v399
  %v412 = vor.u32 %v410, %v411
  %v413 = vshll.u32 920167782, %v398
  %v414 = vshrl.u32 1326507024, %v399
  %v415 = vor.u32 %v413, %v414
  %vm416 = vcmp.lt.s32.totalorder %v397, 1
  %vm417 = vcmp.lt.s32.totalorder %v397, 2
  %vm418 = vcmp.lt.s32.totalorder %v397, 3
  %vm419 = vcmp.lt.s32.totalorder %v397, 4
  %v420 = vsel %vm416, %v400, %v403
  %v421 = vsel %vm419, %v409, 2102212464
  %v422 = vsel %vm418, %v406, %v421
  %v423 = vsel %vm417, %v420, %v422
  %v424 = vsel %vm416, %v403, %v406
  %v425 = vsel %vm419, %v412, 920167782
  %v426 = vsel %vm418, %v409, %v425
  %v427 = vsel %vm417, %v424, %v426
  %v428 = vsel %vm416, %v406, %v409
  %v429 = vsel %vm419, %v415, 1326507024
  %v430 = vsel %vm418, %v412, %v429
  %v431 = vsel %vm417, %v428, %v430
  %v432 = vshll.u32 %v392, 8
  %v433 = vmul.u32.u64.compose %v432, %v431
  %v434 = vextract.low.u32 %v433
  %v435 = vextract.high.u32 %v433
  %v436 = vmul.u32.u64.compose %v432, %v427
  %v437 = vextract.low.u32 %v436
  %v438 = vextract.high.u32 %v436
  %v439 = vmul.u32 %v432, %v423
  %v440 = vadd.s32 %v435, %v437
  %vm441 = vc.u32 %v435, %v437
  %v442 = vadd.s32 %v438, 1
  %v443 = vsel %vm441, %v442, %v438
  %v444 = vadd.s32 %v439, %v443
  %v445 = vadd.s32 %v444, 536870912
  %v446 = vshrl.u32 %v445, 30
  %v447 = vshll.u32 %v446, 30
  %v448 = vsub.s32 %v444, %v447
  %vm449 = vcmp.lt.s32.totalorder %v448, 0
  %v450 = vsub.s32 0, %v448
  %v451 = vsel %vm449, %v450, %v448
  %v452 = vclz %v451
  %v453 = vsub.s32 %v452, 2
  %vm454 = vcmp.gt.s32.totalorder 0, %v453
  %v455 = vsel %vm454, 0, %v453
  %v456 = vsub.s32 32, %v455
  %v457 = vshll.u32 %v448, %v455
  %v458 = vshrl.u32 %v440, %v456
  %v459 = vor.u32 %v457, %v458
  %v460 = vsub.s32 4294967266, %v455
  %v461 = vadd.s32 %v460, 127
  %v462 = vshll.u32 %v461, 23
  %v463 = vor.u32 4788187, %v462
  %v464 = vand.u32 2147483647, %v463
  %v466 = vcvt.s32.f32 %v459
  %v467 = vmul.f32 %v466, %v464
  %v468 = vxor.u32 %v467, 2147483648
  %v469 = vsel %vm386, %v468, %v467
  %v470 = vsub.s32 4, %v446
  %v471 = vsel %vm386, %v470, %v446
  %v472 = vsel %vm385, %v122, %v469
  %v473 = vsel %vm385, 0, %v471
  %v474 = vcosq.f32.pop %v472
  %v475 = vsinq.f32.pop %v472
  %vm476 = vweird.f32 %v122
  %v477 = vadd.s32 %v473, 3
  %v478 = vand.u32 %v477, 3
  %vm479 = vcmp.lt.s32.totalorder %v478, 2
  %vm480 = vcmp.eq.s32.totalorder %v478, 0
  %v481 = vxor.u32 %v475, 2147483648
  %v482 = vsel %vm480, %v474, %v481
  %vm483 = vcmp.eq.s32.totalorder %v478, 2
  %v484 = vxor.u32 %v474, 2147483648
  %v485 = vsel %vm483, %v484, %v475
  %v486 = vsel %vm479, %v482, %v485
  %v487 = vsel %vm476, nan, %v486
  %v488 = vand.u32 2147483647, %v125
  %vm489 = vcmp.le.f32.partialorder %v488, 0.7853982
  %vm490 = vcmp.lt.s32.totalorder %v125, 0
  %v491 = vand.u32 %v125, 2139095040
  %v492 = vshrl.u32 %v491, 23
  %v493 = vsub.s32 %v492, 127
  %v494 = vand.u32 2147483647, %v125
  %v495 = vand.u32 %v494, 8388607
  %v496 = vor.u32 %v495, 8388608
  %v497 = vsub.s32 0, %v496
  %v498 = vadd.s32 %v493, 1
  %vm499 = vcmp.gt.s32.totalorder %v498, 0
  %v500 = vsel %vm499, %v498, 0
  %v501 = vshrl.u32 %v500, 5
  %v502 = vand.u32 %v500, 31
  %v503 = vsub.s32 32, %v502
  %v504 = vshrl.u32 683565275, %v503
  %v505 = vshll.u32 683565275, %v502
  %v506 = vshrl.u32 2475754826, %v503
  %v507 = vor.u32 %v505, %v506
  %v508 = vshll.u32 2475754826, %v502
  %v509 = vshrl.u32 2131351028, %v503
  %v510 = vor.u32 %v508, %v509
  %v511 = vshll.u32 2131351028, %v502
  %v512 = vshrl.u32 2102212464, %v503
  %v513 = vor.u32 %v511, %v512
  %v514 = vshll.u32 2102212464, %v502
  %v515 = vshrl.u32 920167782, %v503
  %v516 = vor.u32 %v514, %v515
  %v517 = vshll.u32 920167782, %v502
  %v518 = vshrl.u32 1326507024, %v503
  %v519 = vor.u32 %v517, %v518
  %vm520 = vcmp.lt.s32.totalorder %v501, 1
  %vm521 = vcmp.lt.s32.totalorder %v501, 2
  %vm522 = vcmp.lt.s32.totalorder %v501, 3
  %vm523 = vcmp.lt.s32.totalorder %v501, 4
  %v524 = vsel %vm520, %v504, %v507
  %v525 = vsel %vm523, %v513, 2102212464
  %v526 = vsel %vm522, %v510, %v525
  %v527 = vsel %vm521, %v524, %v526
  %v528 = vsel %vm520, %v507, %v510
  %v529 = vsel %vm523, %v516, 920167782
  %v530 = vsel %vm522, %v513, %v529
  %v531 = vsel %vm521, %v528, %v530
  %v532 = vsel %vm520, %v510, %v513
  %v533 = vsel %vm523, %v519, 1326507024
  %v534 = vsel %vm522, %v516, %v533
  %v535 = vsel %vm521, %v532, %v534
  %v536 = vshll.u32 %v496, 8
  %v537 = vmul.u32.u64.compose %v536, %v535
  %v538 = vextract.low.u32 %v537
  %v539 = vextract.high.u32 %v537
  %v540 = vmul.u32.u64.compose %v536, %v531
  %v541 = vextract.low.u32 %v540
  %v542 = vextract.high.u32 %v540
  %v543 = vmul.u32 %v536, %v527
  %v544 = vadd.s32 %v539, %v541
  %vm545 = vc.u32 %v539, %v541
  %v546 = vadd.s32 %v542, 1
  %v547 = vsel %vm545, %v546, %v542
  %v548 = vadd.s32 %v543, %v547
  %v549 = vadd.s32 %v548, 536870912
  %v550 = vshrl.u32 %v549, 30
  %v551 = vshll.u32 %v550, 30
  %v552 = vsub.s32 %v548, %v551
  %vm553 = vcmp.lt.s32.totalorder %v552, 0
  %v554 = vsub.s32 0, %v552
  %v555 = vsel %vm553, %v554, %v552
  %v556 = vclz %v555
  %v557 = vsub.s32 %v556, 2
  %vm558 = vcmp.gt.s32.totalorder 0, %v557
  %v559 = vsel %vm558, 0, %v557
  %v560 = vsub.s32 32, %v559
  %v561 = vshll.u32 %v552, %v559
  %v562 = vshrl.u32 %v544, %v560
  %v563 = vor.u32 %v561, %v562
  %v564 = vsub.s32 4294967266, %v559
  %v565 = vadd.s32 %v564, 127
  %v566 = vshll.u32 %v565, 23
  %v567 = vor.u32 4788187, %v566
  %v568 = vand.u32 2147483647, %v567
  %v570 = vcvt.s32.f32 %v563
  %v571 = vmul.f32 %v570, %v568
  %v572 = vxor.u32 %v571, 2147483648
  %v573 = vsel %vm490, %v572, %v571
  %v574 = vsub.s32 4, %v550
  %v575 = vsel %vm490, %v574, %v550
  %v576 = vsel %vm489, %v125, %v573
  %v577 = vsel %vm489, 0, %v575
  %v578 = vcosq.f32.pop %v576
  %v579 = vsinq.f32.pop %v576
  %vm580 = vweird.f32 %v125
  %v581 = vadd.s32 %v577, 3
  %v582 = vand.u32 %v581, 3
  %vm583 = vcmp.lt.s32.totalorder %v582, 2
  %vm584 = vcmp.eq.s32.totalorder %v582, 0
  %v585 = vxor.u32 %v579, 2147483648
  %v586 = vsel %vm584, %v578, %v585
  %vm587 = vcmp.eq.s32.totalorder %v582, 2
  %v588 = vxor.u32 %v578, 2147483648
  %v589 = vsel %vm587, %v588, %v579
  %v590 = vsel %vm583, %v586, %v589
  %v591 = vsel %vm580, nan, %v590
  %v592 = vand.u32 2147483647, %v130
  %vm593 = vcmp.le.f32.partialorder %v592, 0.7853982
  %vm594 = vcmp.lt.s32.totalorder %v130, 0
  %v595 = vand.u32 %v130, 2139095040
  %v596 = vshrl.u32 %v595, 23
  %v597 = vsub.s32 %v596, 127
  %v598 = vand.u32 2147483647, %v130
  %v599 = vand.u32 %v598, 8388607
  %v600 = vor.u32 %v599, 8388608
  %v601 = vsub.s32 0, %v600
  %v602 = vadd.s32 %v597, 1
  %vm603 = vcmp.gt.s32.totalorder %v602, 0
  %v604 = vsel %vm603, %v602, 0
  %v605 = vshrl.u32 %v604, 5
  %v606 = vand.u32 %v604, 31
  %v607 = vsub.s32 32, %v606
  %v608 = vshrl.u32 683565275, %v607
  %v609 = vshll.u32 683565275, %v606
  %v610 = vshrl.u32 2475754826, %v607
  %v611 = vor.u32 %v609, %v610
  %v612 = vshll.u32 2475754826, %v606
  %v613 = vshrl.u32 2131351028, %v607
  %v614 = vor.u32 %v612, %v613
  %v615 = vshll.u32 2131351028, %v606
  %v616 = vshrl.u32 2102212464, %v607
  %v617 = vor.u32 %v615, %v616
  %v618 = vshll.u32 2102212464, %v606
  %v619 = vshrl.u32 920167782, %v607
  %v620 = vor.u32 %v618, %v619
  %v621 = vshll.u32 920167782, %v606
  %v622 = vshrl.u32 1326507024, %v607
  %v623 = vor.u32 %v621, %v622
  %vm624 = vcmp.lt.s32.totalorder %v605, 1
  %vm625 = vcmp.lt.s32.totalorder %v605, 2
  %vm626 = vcmp.lt.s32.totalorder %v605, 3
  %vm627 = vcmp.lt.s32.totalorder %v605, 4
  %v628 = vsel %vm624, %v608, %v611
  %v629 = vsel %vm627, %v617, 2102212464
  %v630 = vsel %vm626, %v614, %v629
  %v631 = vsel %vm625, %v628, %v630
  %v632 = vsel %vm624, %v611, %v614
  %v633 = vsel %vm627, %v620, 920167782
  %v634 = vsel %vm626, %v617, %v633
  %v635 = vsel %vm625, %v632, %v634
  %v636 = vsel %vm624, %v614, %v617
  %v637 = vsel %vm627, %v623, 1326507024
  %v638 = vsel %vm626, %v620, %v637
  %v639 = vsel %vm625, %v636, %v638
  %v640 = vshll.u32 %v600, 8
  %v641 = vmul.u32.u64.compose %v640, %v639
  %v642 = vextract.low.u32 %v641
  %v643 = vextract.high.u32 %v641
  %v644 = vmul.u32.u64.compose %v640, %v635
  %v645 = vextract.low.u32 %v644
  %v646 = vextract.high.u32 %v644
  %v647 = vmul.u32 %v640, %v631
  %v648 = vadd.s32 %v643, %v645
  %vm649 = vc.u32 %v643, %v645
  %v650 = vadd.s32 %v646, 1
  %v651 = vsel %vm649, %v650, %v646
  %v652 = vadd.s32 %v647, %v651
  %v653 = vadd.s32 %v652, 536870912
  %v654 = vshrl.u32 %v653, 30
  %v655 = vshll.u32 %v654, 30
  %v656 = vsub.s32 %v652, %v655
  %vm657 = vcmp.lt.s32.totalorder %v656, 0
  %v658 = vsub.s32 0, %v656
  %v659 = vsel %vm657, %v658, %v656
  %v660 = vclz %v659
  %v661 = vsub.s32 %v660, 2
  %vm662 = vcmp.gt.s32.totalorder 0, %v661
  %v663 = vsel %vm662, 0, %v661
  %v664 = vsub.s32 32, %v663
  %v665 = vshll.u32 %v656, %v663
  %v666 = vshrl.u32 %v648, %v664
  %v667 = vor.u32 %v665, %v666
  %v668 = vsub.s32 4294967266, %v663
  %v669 = vadd.s32 %v668, 127
  %v670 = vshll.u32 %v669, 23
  %v671 = vor.u32 4788187, %v670
  %v672 = vand.u32 2147483647, %v671
  %v674 = vcvt.s32.f32 %v667
  %v675 = vmul.f32 %v674, %v672
  %v676 = vxor.u32 %v675, 2147483648
  %v677 = vsel %vm594, %v676, %v675
  %v678 = vsub.s32 4, %v654
  %v679 = vsel %vm594, %v678, %v654
  %v680 = vsel %vm593, %v130, %v677
  %v681 = vsel %vm593, 0, %v679
  %v682 = vcosq.f32.pop %v680
  %v683 = vsinq.f32.pop %v680
  %vm684 = vweird.f32 %v130
  %v685 = vadd.s32 %v681, 3
  %v686 = vand.u32 %v685, 3
  %vm687 = vcmp.lt.s32.totalorder %v686, 2
  %vm688 = vcmp.eq.s32.totalorder %v686, 0
  %v689 = vxor.u32 %v683, 2147483648
  %v690 = vsel %vm688, %v682, %v689
  %vm691 = vcmp.eq.s32.totalorder %v686, 2
  %v692 = vxor.u32 %v682, 2147483648
  %v693 = vsel %vm691, %v692, %v683
  %v694 = vsel %vm687, %v690, %v693
  %v695 = vsel %vm684, nan, %v694
  %v696 = vand.u32 2147483647, %v133
  %vm697 = vcmp.le.f32.partialorder %v696, 0.7853982
  %vm698 = vcmp.lt.s32.totalorder %v133, 0
  %v699 = vand.u32 %v133, 2139095040
  %v700 = vshrl.u32 %v699, 23
  %v701 = vsub.s32 %v700, 127
  %v702 = vand.u32 2147483647, %v133
  %v703 = vand.u32 %v702, 8388607
  %v704 = vor.u32 %v703, 8388608
  %v705 = vsub.s32 0, %v704
  %v706 = vadd.s32 %v701, 1
  %vm707 = vcmp.gt.s32.totalorder %v706, 0
  %v708 = vsel %vm707, %v706, 0
  %v709 = vshrl.u32 %v708, 5
  %v710 = vand.u32 %v708, 31
  %v711 = vsub.s32 32, %v710
  %v712 = vshrl.u32 683565275, %v711
  %v713 = vshll.u32 683565275, %v710
  %v714 = vshrl.u32 2475754826, %v711
  %v715 = vor.u32 %v713, %v714
  %v716 = vshll.u32 2475754826, %v710
  %v717 = vshrl.u32 2131351028, %v711
  %v718 = vor.u32 %v716, %v717
  %v719 = vshll.u32 2131351028, %v710
  %v720 = vshrl.u32 2102212464, %v711
  %v721 = vor.u32 %v719, %v720
  %v722 = vshll.u32 2102212464, %v710
  %v723 = vshrl.u32 920167782, %v711
  %v724 = vor.u32 %v722, %v723
  %v725 = vshll.u32 920167782, %v710
  %v726 = vshrl.u32 1326507024, %v711
  %v727 = vor.u32 %v725, %v726
  %vm728 = vcmp.lt.s32.totalorder %v709, 1
  %vm729 = vcmp.lt.s32.totalorder %v709, 2
  %vm730 = vcmp.lt.s32.totalorder %v709, 3
  %vm731 = vcmp.lt.s32.totalorder %v709, 4
  %v732 = vsel %vm728, %v712, %v715
  %v733 = vsel %vm731, %v721, 2102212464
  %v734 = vsel %vm730, %v718, %v733
  %v735 = vsel %vm729, %v732, %v734
  %v736 = vsel %vm728, %v715, %v718
  %v737 = vsel %vm731, %v724, 920167782
  %v738 = vsel %vm730, %v721, %v737
  %v739 = vsel %vm729, %v736, %v738
  %v740 = vsel %vm728, %v718, %v721
  %v741 = vsel %vm731, %v727, 1326507024
  %v742 = vsel %vm730, %v724, %v741
  %v743 = vsel %vm729, %v740, %v742
  %v744 = vshll.u32 %v704, 8
  %v745 = vmul.u32.u64.compose %v744, %v743
  %v746 = vextract.low.u32 %v745
  %v747 = vextract.high.u32 %v745
  %v748 = vmul.u32.u64.compose %v744, %v739
  %v749 = vextract.low.u32 %v748
  %v750 = vextract.high.u32 %v748
  %v751 = vmul.u32 %v744, %v735
  %v752 = vadd.s32 %v747, %v749
  %vm753 = vc.u32 %v747, %v749
  %v754 = vadd.s32 %v750, 1
  %v755 = vsel %vm753, %v754, %v750
  %v756 = vadd.s32 %v751, %v755
  %v757 = vadd.s32 %v756, 536870912
  %v758 = vshrl.u32 %v757, 30
  %v759 = vshll.u32 %v758, 30
  %v760 = vsub.s32 %v756, %v759
  %vm761 = vcmp.lt.s32.totalorder %v760, 0
  %v762 = vsub.s32 0, %v760
  %v763 = vsel %vm761, %v762, %v760
  %v764 = vclz %v763
  %v765 = vsub.s32 %v764, 2
  %vm766 = vcmp.gt.s32.totalorder 0, %v765
  %v767 = vsel %vm766, 0, %v765
  %v768 = vsub.s32 32, %v767
  %v769 = vshll.u32 %v760, %v767
  %v770 = vshrl.u32 %v752, %v768
  %v771 = vor.u32 %v769, %v770
  %v772 = vsub.s32 4294967266, %v767
  %v773 = vadd.s32 %v772, 127
  %v774 = vshll.u32 %v773, 23
  %v775 = vor.u32 4788187, %v774
  %v776 = vand.u32 2147483647, %v775
  %v778 = vcvt.s32.f32 %v771
  %v779 = vmul.f32 %v778, %v776
  %v780 = vxor.u32 %v779, 2147483648
  %v781 = vsel %vm698, %v780, %v779
  %v782 = vsub.s32 4, %v758
  %v783 = vsel %vm698, %v782, %v758
  %v784 = vsel %vm697, %v133, %v781
  %v785 = vsel %vm697, 0, %v783
  %v786 = vcosq.f32.pop %v784
  %v787 = vsinq.f32.pop %v784
  %vm788 = vweird.f32 %v133
  %v789 = vadd.s32 %v785, 3
  %v790 = vand.u32 %v789, 3
  %vm791 = vcmp.lt.s32.totalorder %v790, 2
  %vm792 = vcmp.eq.s32.totalorder %v790, 0
  %v793 = vxor.u32 %v787, 2147483648
  %v794 = vsel %vm792, %v786, %v793
  %vm795 = vcmp.eq.s32.totalorder %v790, 2
  %v796 = vxor.u32 %v786, 2147483648
  %v797 = vsel %vm795, %v796, %v787
  %v798 = vsel %vm791, %v794, %v797
  %v799 = vsel %vm788, nan, %v798
  %v800 = vand.u32 2147483647, %v138
  %vm801 = vcmp.le.f32.partialorder %v800, 0.7853982
  %vm802 = vcmp.lt.s32.totalorder %v138, 0
  %v803 = vand.u32 %v138, 2139095040
  %v804 = vshrl.u32 %v803, 23
  %v805 = vsub.s32 %v804, 127
  %v806 = vand.u32 2147483647, %v138
  %v807 = vand.u32 %v806, 8388607
  %v808 = vor.u32 %v807, 8388608
  %v809 = vsub.s32 0, %v808
  %v810 = vadd.s32 %v805, 1
  %vm811 = vcmp.gt.s32.totalorder %v810, 0
  %v812 = vsel %vm811, %v810, 0
  %v813 = vshrl.u32 %v812, 5
  %v814 = vand.u32 %v812, 31
  %v815 = vsub.s32 32, %v814
  %v816 = vshrl.u32 683565275, %v815
  %v817 = vshll.u32 683565275, %v814
  %v818 = vshrl.u32 2475754826, %v815
  %v819 = vor.u32 %v817, %v818
  %v820 = vshll.u32 2475754826, %v814
  %v821 = vshrl.u32 2131351028, %v815
  %v822 = vor.u32 %v820, %v821
  %v823 = vshll.u32 2131351028, %v814
  %v824 = vshrl.u32 2102212464, %v815
  %v825 = vor.u32 %v823, %v824
  %v826 = vshll.u32 2102212464, %v814
  %v827 = vshrl.u32 920167782, %v815
  %v828 = vor.u32 %v826, %v827
  %v829 = vshll.u32 920167782, %v814
  %v830 = vshrl.u32 1326507024, %v815
  %v831 = vor.u32 %v829, %v830
  %vm832 = vcmp.lt.s32.totalorder %v813, 1
  %vm833 = vcmp.lt.s32.totalorder %v813, 2
  %vm834 = vcmp.lt.s32.totalorder %v813, 3
  %vm835 = vcmp.lt.s32.totalorder %v813, 4
  %v836 = vsel %vm832, %v816, %v819
  %v837 = vsel %vm835, %v825, 2102212464
  %v838 = vsel %vm834, %v822, %v837
  %v839 = vsel %vm833, %v836, %v838
  %v840 = vsel %vm832, %v819, %v822
  %v841 = vsel %vm835, %v828, 920167782
  %v842 = vsel %vm834, %v825, %v841
  %v843 = vsel %vm833, %v840, %v842
  %v844 = vsel %vm832, %v822, %v825
  %v845 = vsel %vm835, %v831, 1326507024
  %v846 = vsel %vm834, %v828, %v845
  %v847 = vsel %vm833, %v844, %v846
  %v848 = vshll.u32 %v808, 8
  %v849 = vmul.u32.u64.compose %v848, %v847
  %v850 = vextract.low.u32 %v849
  %v851 = vextract.high.u32 %v849
  %v852 = vmul.u32.u64.compose %v848, %v843
  %v853 = vextract.low.u32 %v852
  %v854 = vextract.high.u32 %v852
  %v855 = vmul.u32 %v848, %v839
  %v856 = vadd.s32 %v851, %v853
  %vm857 = vc.u32 %v851, %v853
  %v858 = vadd.s32 %v854, 1
  %v859 = vsel %vm857, %v858, %v854
  %v860 = vadd.s32 %v855, %v859
  %v861 = vadd.s32 %v860, 536870912
  %v862 = vshrl.u32 %v861, 30
  %v863 = vshll.u32 %v862, 30
  %v864 = vsub.s32 %v860, %v863
  %vm865 = vcmp.lt.s32.totalorder %v864, 0
  %v866 = vsub.s32 0, %v864
  %v867 = vsel %vm865, %v866, %v864
  %v868 = vclz %v867
  %v869 = vsub.s32 %v868, 2
  %vm870 = vcmp.gt.s32.totalorder 0, %v869
  %v871 = vsel %vm870, 0, %v869
  %v872 = vsub.s32 32, %v871
  %v873 = vshll.u32 %v864, %v871
  %v874 = vshrl.u32 %v856, %v872
  %v875 = vor.u32 %v873, %v874
  %v876 = vsub.s32 4294967266, %v871
  %v877 = vadd.s32 %v876, 127
  %v878 = vshll.u32 %v877, 23
  %v879 = vor.u32 4788187, %v878
  %v880 = vand.u32 2147483647, %v879
  %v882 = vcvt.s32.f32 %v875
  %v883 = vmul.f32 %v882, %v880
  %v884 = vxor.u32 %v883, 2147483648
  %v885 = vsel %vm802, %v884, %v883
  %v886 = vsub.s32 4, %v862
  %v887 = vsel %vm802, %v886, %v862
  %v888 = vsel %vm801, %v138, %v885
  %v889 = vsel %vm801, 0, %v887
  %v890 = vcosq.f32.pop %v888
  %v891 = vsinq.f32.pop %v888
  %vm892 = vweird.f32 %v138
  %v893 = vadd.s32 %v889, 3
  %v894 = vand.u32 %v893, 3
  %vm895 = vcmp.lt.s32.totalorder %v894, 2
  %vm896 = vcmp.eq.s32.totalorder %v894, 0
  %v897 = vxor.u32 %v891, 2147483648
  %v898 = vsel %vm896, %v890, %v897
  %vm899 = vcmp.eq.s32.totalorder %v894, 2
  %v900 = vxor.u32 %v890, 2147483648
  %v901 = vsel %vm899, %v900, %v891
  %v902 = vsel %vm895, %v898, %v901
  %v903 = vsel %vm892, nan, %v902
  %v904 = vand.u32 2147483647, %v141
  %vm905 = vcmp.le.f32.partialorder %v904, 0.7853982
  %vm906 = vcmp.lt.s32.totalorder %v141, 0
  %v907 = vand.u32 %v141, 2139095040
  %v908 = vshrl.u32 %v907, 23
  %v909 = vsub.s32 %v908, 127
  %v910 = vand.u32 2147483647, %v141
  %v911 = vand.u32 %v910, 8388607
  %v912 = vor.u32 %v911, 8388608
  %v913 = vsub.s32 0, %v912
  %v914 = vadd.s32 %v909, 1
  %vm915 = vcmp.gt.s32.totalorder %v914, 0
  %v916 = vsel %vm915, %v914, 0
  %v917 = vshrl.u32 %v916, 5
  %v918 = vand.u32 %v916, 31
  %v919 = vsub.s32 32, %v918
  %v920 = vshrl.u32 683565275, %v919
  %v921 = vshll.u32 683565275, %v918
  %v922 = vshrl.u32 2475754826, %v919
  %v923 = vor.u32 %v921, %v922
  %v924 = vshll.u32 2475754826, %v918
  %v925 = vshrl.u32 2131351028, %v919
  %v926 = vor.u32 %v924, %v925
  %v927 = vshll.u32 2131351028, %v918
  %v928 = vshrl.u32 2102212464, %v919
  %v929 = vor.u32 %v927, %v928
  %v930 = vshll.u32 2102212464, %v918
  %v931 = vshrl.u32 920167782, %v919
  %v932 = vor.u32 %v930, %v931
  %v933 = vshll.u32 920167782, %v918
  %v934 = vshrl.u32 1326507024, %v919
  %v935 = vor.u32 %v933, %v934
  %vm936 = vcmp.lt.s32.totalorder %v917, 1
  %vm937 = vcmp.lt.s32.totalorder %v917, 2
  %vm938 = vcmp.lt.s32.totalorder %v917, 3
  %vm939 = vcmp.lt.s32.totalorder %v917, 4
  %v940 = vsel %vm936, %v920, %v923
  %v941 = vsel %vm939, %v929, 2102212464
  %v942 = vsel %vm938, %v926, %v941
  %v943 = vsel %vm937, %v940, %v942
  %v944 = vsel %vm936, %v923, %v926
  %v945 = vsel %vm939, %v932, 920167782
  %v946 = vsel %vm938, %v929, %v945
  %v947 = vsel %vm937, %v944, %v946
  %v948 = vsel %vm936, %v926, %v929
  %v949 = vsel %vm939, %v935, 1326507024
  %v950 = vsel %vm938, %v932, %v949
  %v951 = vsel %vm937, %v948, %v950
  %v952 = vshll.u32 %v912, 8
  %v953 = vmul.u32.u64.compose %v952, %v951
  %v954 = vextract.low.u32 %v953
  %v955 = vextract.high.u32 %v953
  %v956 = vmul.u32.u64.compose %v952, %v947
  %v957 = vextract.low.u32 %v956
  %v958 = vextract.high.u32 %v956
  %v959 = vmul.u32 %v952, %v943
  %v960 = vadd.s32 %v955, %v957
  %vm961 = vc.u32 %v955, %v957
  %v962 = vadd.s32 %v958, 1
  %v963 = vsel %vm961, %v962, %v958
  %v964 = vadd.s32 %v959, %v963
  %v965 = vadd.s32 %v964, 536870912
  %v966 = vshrl.u32 %v965, 30
  %v967 = vshll.u32 %v966, 30
  %v968 = vsub.s32 %v964, %v967
  %vm969 = vcmp.lt.s32.totalorder %v968, 0
  %v970 = vsub.s32 0, %v968
  %v971 = vsel %vm969, %v970, %v968
  %v972 = vclz %v971
  %v973 = vsub.s32 %v972, 2
  %vm974 = vcmp.gt.s32.totalorder 0, %v973
  %v975 = vsel %vm974, 0, %v973
  %v976 = vsub.s32 32, %v975
  %v977 = vshll.u32 %v968, %v975
  %v978 = vshrl.u32 %v960, %v976
  %v979 = vor.u32 %v977, %v978
  %v980 = vsub.s32 4294967266, %v975
  %v981 = vadd.s32 %v980, 127
  %v982 = vshll.u32 %v981, 23
  %v983 = vor.u32 4788187, %v982
  %v984 = vand.u32 2147483647, %v983
  %v986 = vcvt.s32.f32 %v979
  %v987 = vmul.f32 %v986, %v984
  %v988 = vxor.u32 %v987, 2147483648
  %v989 = vsel %vm906, %v988, %v987
  %v990 = vsub.s32 4, %v966
  %v991 = vsel %vm906, %v990, %v966
  %v992 = vsel %vm905, %v141, %v989
  %v993 = vsel %vm905, 0, %v991
  %v994 = vcosq.f32.pop %v992
  %v995 = vsinq.f32.pop %v992
  %vm996 = vweird.f32 %v141
  %v997 = vadd.s32 %v993, 3
  %v998 = vand.u32 %v997, 3
  %vm999 = vcmp.lt.s32.totalorder %v998, 2
  %vm1000 = vcmp.eq.s32.totalorder %v998, 0
  %v1001 = vxor.u32 %v995, 2147483648
  %v1002 = vsel %vm1000, %v994, %v1001
  %vm1003 = vcmp.eq.s32.totalorder %v998, 2
  %v1004 = vxor.u32 %v994, 2147483648
  %v1005 = vsel %vm1003, %v1004, %v995
  %v1006 = vsel %vm999, %v1002, %v1005
  %v1007 = vsel %vm996, nan, %v1006
  %v1008 = vand.u32 2147483647, %v146
  %vm1009 = vcmp.le.f32.partialorder %v1008, 0.7853982
  %vm1010 = vcmp.lt.s32.totalorder %v146, 0
  %v1011 = vand.u32 %v146, 2139095040
  %v1012 = vshrl.u32 %v1011, 23
  %v1013 = vsub.s32 %v1012, 127
  %v1014 = vand.u32 2147483647, %v146
  %v1015 = vand.u32 %v1014, 8388607
  %v1016 = vor.u32 %v1015, 8388608
  %v1017 = vsub.s32 0, %v1016
  %v1018 = vadd.s32 %v1013, 1
  %vm1019 = vcmp.gt.s32.totalorder %v1018, 0
  %v1020 = vsel %vm1019, %v1018, 0
  %v1021 = vshrl.u32 %v1020, 5
  %v1022 = vand.u32 %v1020, 31
  %v1023 = vsub.s32 32, %v1022
  %v1024 = vshrl.u32 683565275, %v1023
  %v1025 = vshll.u32 683565275, %v1022
  %v1026 = vshrl.u32 2475754826, %v1023
  %v1027 = vor.u32 %v1025, %v1026
  %v1028 = vshll.u32 2475754826, %v1022
  %v1029 = vshrl.u32 2131351028, %v1023
  %v1030 = vor.u32 %v1028, %v1029
  %v1031 = vshll.u32 2131351028, %v1022
  %v1032 = vshrl.u32 2102212464, %v1023
  %v1033 = vor.u32 %v1031, %v1032
  %v1034 = vshll.u32 2102212464, %v1022
  %v1035 = vshrl.u32 920167782, %v1023
  %v1036 = vor.u32 %v1034, %v1035
  %v1037 = vshll.u32 920167782, %v1022
  %v1038 = vshrl.u32 1326507024, %v1023
  %v1039 = vor.u32 %v1037, %v1038
  %vm1040 = vcmp.lt.s32.totalorder %v1021, 1
  %vm1041 = vcmp.lt.s32.totalorder %v1021, 2
  %vm1042 = vcmp.lt.s32.totalorder %v1021, 3
  %vm1043 = vcmp.lt.s32.totalorder %v1021, 4
  %v1044 = vsel %vm1040, %v1024, %v1027
  %v1045 = vsel %vm1043, %v1033, 2102212464
  %v1046 = vsel %vm1042, %v1030, %v1045
  %v1047 = vsel %vm1041, %v1044, %v1046
  %v1048 = vsel %vm1040, %v1027, %v1030
  %v1049 = vsel %vm1043, %v1036, 920167782
  %v1050 = vsel %vm1042, %v1033, %v1049
  %v1051 = vsel %vm1041, %v1048, %v1050
  %v1052 = vsel %vm1040, %v1030, %v1033
  %v1053 = vsel %vm1043, %v1039, 1326507024
  %v1054 = vsel %vm1042, %v1036, %v1053
  %v1055 = vsel %vm1041, %v1052, %v1054
  %v1056 = vshll.u32 %v1016, 8
  %v1057 = vmul.u32.u64.compose %v1056, %v1055
  %v1058 = vextract.low.u32 %v1057
  %v1059 = vextract.high.u32 %v1057
  %v1060 = vmul.u32.u64.compose %v1056, %v1051
  %v1061 = vextract.low.u32 %v1060
  %v1062 = vextract.high.u32 %v1060
  %v1063 = vmul.u32 %v1056, %v1047
  %v1064 = vadd.s32 %v1059, %v1061
  %vm1065 = vc.u32 %v1059, %v1061
  %v1066 = vadd.s32 %v1062, 1
  %v1067 = vsel %vm1065, %v1066, %v1062
  %v1068 = vadd.s32 %v1063, %v1067
  %v1069 = vadd.s32 %v1068, 536870912
  %v1070 = vshrl.u32 %v1069, 30
  %v1071 = vshll.u32 %v1070, 30
  %v1072 = vsub.s32 %v1068, %v1071
  %vm1073 = vcmp.lt.s32.totalorder %v1072, 0
  %v1074 = vsub.s32 0, %v1072
  %v1075 = vsel %vm1073, %v1074, %v1072
  %v1076 = vclz %v1075
  %v1077 = vsub.s32 %v1076, 2
  %vm1078 = vcmp.gt.s32.totalorder 0, %v1077
  %v1079 = vsel %vm1078, 0, %v1077
  %v1080 = vsub.s32 32, %v1079
  %v1081 = vshll.u32 %v1072, %v1079
  %v1082 = vshrl.u32 %v1064, %v1080
  %v1083 = vor.u32 %v1081, %v1082
  %v1084 = vsub.s32 4294967266, %v1079
  %v1085 = vadd.s32 %v1084, 127
  %v1086 = vshll.u32 %v1085, 23
  %v1087 = vor.u32 4788187, %v1086
  %v1088 = vand.u32 2147483647, %v1087
  %v1090 = vcvt.s32.f32 %v1083
  %v1091 = vmul.f32 %v1090, %v1088
  %v1092 = vxor.u32 %v1091, 2147483648
  %v1093 = vsel %vm1010, %v1092, %v1091
  %v1094 = vsub.s32 4, %v1070
  %v1095 = vsel %vm1010, %v1094, %v1070
  %v1096 = vsel %vm1009, %v146, %v1093
  %v1097 = vsel %vm1009, 0, %v1095
  %v1098 = vcosq.f32.pop %v1096
  %v1099 = vsinq.f32.pop %v1096
  %vm1100 = vweird.f32 %v146
  %v1101 = vadd.s32 %v1097, 3
  %v1102 = vand.u32 %v1101, 3
  %vm1103 = vcmp.lt.s32.totalorder %v1102, 2
  %vm1104 = vcmp.eq.s32.totalorder %v1102, 0
  %v1105 = vxor.u32 %v1099, 2147483648
  %v1106 = vsel %vm1104, %v1098, %v1105
  %vm1107 = vcmp.eq.s32.totalorder %v1102, 2
  %v1108 = vxor.u32 %v1098, 2147483648
  %v1109 = vsel %vm1107, %v1108, %v1099
  %v1110 = vsel %vm1103, %v1106, %v1109
  %v1111 = vsel %vm1100, nan, %v1110
  %v1112 = vand.u32 2147483647, %v149
  %vm1113 = vcmp.le.f32.partialorder %v1112, 0.7853982
  %vm1114 = vcmp.lt.s32.totalorder %v149, 0
  %v1115 = vand.u32 %v149, 2139095040
  %v1116 = vshrl.u32 %v1115, 23
  %v1117 = vsub.s32 %v1116, 127
  %v1118 = vand.u32 2147483647, %v149
  %v1119 = vand.u32 %v1118, 8388607
  %v1120 = vor.u32 %v1119, 8388608
  %v1121 = vsub.s32 0, %v1120
  %v1122 = vadd.s32 %v1117, 1
  %vm1123 = vcmp.gt.s32.totalorder %v1122, 0
  %v1124 = vsel %vm1123, %v1122, 0
  %v1125 = vshrl.u32 %v1124, 5
  %v1126 = vand.u32 %v1124, 31
  %v1127 = vsub.s32 32, %v1126
  %v1128 = vshrl.u32 683565275, %v1127
  %v1129 = vshll.u32 683565275, %v1126
  %v1130 = vshrl.u32 2475754826, %v1127
  %v1131 = vor.u32 %v1129, %v1130
  %v1132 = vshll.u32 2475754826, %v1126
  %v1133 = vshrl.u32 2131351028, %v1127
  %v1134 = vor.u32 %v1132, %v1133
  %v1135 = vshll.u32 2131351028, %v1126
  %v1136 = vshrl.u32 2102212464, %v1127
  %v1137 = vor.u32 %v1135, %v1136
  %v1138 = vshll.u32 2102212464, %v1126
  %v1139 = vshrl.u32 920167782, %v1127
  %v1140 = vor.u32 %v1138, %v1139
  %v1141 = vshll.u32 920167782, %v1126
  %v1142 = vshrl.u32 1326507024, %v1127
  %v1143 = vor.u32 %v1141, %v1142
  %vm1144 = vcmp.lt.s32.totalorder %v1125, 1
  %vm1145 = vcmp.lt.s32.totalorder %v1125, 2
  %vm1146 = vcmp.lt.s32.totalorder %v1125, 3
  %vm1147 = vcmp.lt.s32.totalorder %v1125, 4
  %v1148 = vsel %vm1144, %v1128, %v1131
  %v1149 = vsel %vm1147, %v1137, 2102212464
  %v1150 = vsel %vm1146, %v1134, %v1149
  %v1151 = vsel %vm1145, %v1148, %v1150
  %v1152 = vsel %vm1144, %v1131, %v1134
  %v1153 = vsel %vm1147, %v1140, 920167782
  %v1154 = vsel %vm1146, %v1137, %v1153
  %v1155 = vsel %vm1145, %v1152, %v1154
  %v1156 = vsel %vm1144, %v1134, %v1137
  %v1157 = vsel %vm1147, %v1143, 1326507024
  %v1158 = vsel %vm1146, %v1140, %v1157
  %v1159 = vsel %vm1145, %v1156, %v1158
  %v1160 = vshll.u32 %v1120, 8
  %v1161 = vmul.u32.u64.compose %v1160, %v1159
  %v1162 = vextract.low.u32 %v1161
  %v1163 = vextract.high.u32 %v1161
  %v1164 = vmul.u32.u64.compose %v1160, %v1155
  %v1165 = vextract.low.u32 %v1164
  %v1166 = vextract.high.u32 %v1164
  %v1167 = vmul.u32 %v1160, %v1151
  %v1168 = vadd.s32 %v1163, %v1165
  %vm1169 = vc.u32 %v1163, %v1165
  %v1170 = vadd.s32 %v1166, 1
  %v1171 = vsel %vm1169, %v1170, %v1166
  %v1172 = vadd.s32 %v1167, %v1171
  %v1173 = vadd.s32 %v1172, 536870912
  %v1174 = vshrl.u32 %v1173, 30
  %v1175 = vshll.u32 %v1174, 30
  %v1176 = vsub.s32 %v1172, %v1175
  %vm1177 = vcmp.lt.s32.totalorder %v1176, 0
  %v1178 = vsub.s32 0, %v1176
  %v1179 = vsel %vm1177, %v1178, %v1176
  %v1180 = vclz %v1179
  %v1181 = vsub.s32 %v1180, 2
  %vm1182 = vcmp.gt.s32.totalorder 0, %v1181
  %v1183 = vsel %vm1182, 0, %v1181
  %v1184 = vsub.s32 32, %v1183
  %v1185 = vshll.u32 %v1176, %v1183
  %v1186 = vshrl.u32 %v1168, %v1184
  %v1187 = vor.u32 %v1185, %v1186
  %v1188 = vsub.s32 4294967266, %v1183
  %v1189 = vadd.s32 %v1188, 127
  %v1190 = vshll.u32 %v1189, 23
  %v1191 = vor.u32 4788187, %v1190
  %v1192 = vand.u32 2147483647, %v1191
  %v1194 = vcvt.s32.f32 %v1187
  %v1195 = vmul.f32 %v1194, %v1192
  %v1196 = vxor.u32 %v1195, 2147483648
  %v1197 = vsel %vm1114, %v1196, %v1195
  %v1198 = vsub.s32 4, %v1174
  %v1199 = vsel %vm1114, %v1198, %v1174
  %v1200 = vsel %vm1113, %v149, %v1197
  %v1201 = vsel %vm1113, 0, %v1199
  %v1202 = vcosq.f32.pop %v1200
  %v1203 = vsinq.f32.pop %v1200
  %vm1204 = vweird.f32 %v149
  %v1205 = vadd.s32 %v1201, 3
  %v1206 = vand.u32 %v1205, 3
  %vm1207 = vcmp.lt.s32.totalorder %v1206, 2
  %vm1208 = vcmp.eq.s32.totalorder %v1206, 0
  %v1209 = vxor.u32 %v1203, 2147483648
  %v1210 = vsel %vm1208, %v1202, %v1209
  %vm1211 = vcmp.eq.s32.totalorder %v1206, 2
  %v1212 = vxor.u32 %v1202, 2147483648
  %v1213 = vsel %vm1211, %v1212, %v1203
  %v1214 = vsel %vm1207, %v1210, %v1213
  %v1215 = vsel %vm1204, nan, %v1214
  %v1216 = vand.u32 2147483647, %v154
  %vm1217 = vcmp.le.f32.partialorder %v1216, 0.7853982
  %vm1218 = vcmp.lt.s32.totalorder %v154, 0
  %v1219 = vand.u32 %v154, 2139095040
  %v1220 = vshrl.u32 %v1219, 23
  %v1221 = vsub.s32 %v1220, 127
  %v1222 = vand.u32 2147483647, %v154
  %v1223 = vand.u32 %v1222, 8388607
  %v1224 = vor.u32 %v1223, 8388608
  %v1225 = vsub.s32 0, %v1224
  %v1226 = vadd.s32 %v1221, 1
  %vm1227 = vcmp.gt.s32.totalorder %v1226, 0
  %v1228 = vsel %vm1227, %v1226, 0
  %v1229 = vshrl.u32 %v1228, 5
  %v1230 = vand.u32 %v1228, 31
  %v1231 = vsub.s32 32, %v1230
  %v1232 = vshrl.u32 683565275, %v1231
  %v1233 = vshll.u32 683565275, %v1230
  %v1234 = vshrl.u32 2475754826, %v1231
  %v1235 = vor.u32 %v1233, %v1234
  %v1236 = vshll.u32 2475754826, %v1230
  %v1237 = vshrl.u32 2131351028, %v1231
  %v1238 = vor.u32 %v1236, %v1237
  %v1239 = vshll.u32 2131351028, %v1230
  %v1240 = vshrl.u32 2102212464, %v1231
  %v1241 = vor.u32 %v1239, %v1240
  %v1242 = vshll.u32 2102212464, %v1230
  %v1243 = vshrl.u32 920167782, %v1231
  %v1244 = vor.u32 %v1242, %v1243
  %v1245 = vshll.u32 920167782, %v1230
  %v1246 = vshrl.u32 1326507024, %v1231
  %v1247 = vor.u32 %v1245, %v1246
  %vm1248 = vcmp.lt.s32.totalorder %v1229, 1
  %vm1249 = vcmp.lt.s32.totalorder %v1229, 2
  %vm1250 = vcmp.lt.s32.totalorder %v1229, 3
  %vm1251 = vcmp.lt.s32.totalorder %v1229, 4
  %v1252 = vsel %vm1248, %v1232, %v1235
  %v1253 = vsel %vm1251, %v1241, 2102212464
  %v1254 = vsel %vm1250, %v1238, %v1253
  %v1255 = vsel %vm1249, %v1252, %v1254
  %v1256 = vsel %vm1248, %v1235, %v1238
  %v1257 = vsel %vm1251, %v1244, 920167782
  %v1258 = vsel %vm1250, %v1241, %v1257
  %v1259 = vsel %vm1249, %v1256, %v1258
  %v1260 = vsel %vm1248, %v1238, %v1241
  %v1261 = vsel %vm1251, %v1247, 1326507024
  %v1262 = vsel %vm1250, %v1244, %v1261
  %v1263 = vsel %vm1249, %v1260, %v1262
  %v1264 = vshll.u32 %v1224, 8
  %v1265 = vmul.u32.u64.compose %v1264, %v1263
  %v1266 = vextract.low.u32 %v1265
  %v1267 = vextract.high.u32 %v1265
  %v1268 = vmul.u32.u64.compose %v1264, %v1259
  %v1269 = vextract.low.u32 %v1268
  %v1270 = vextract.high.u32 %v1268
  %v1271 = vmul.u32 %v1264, %v1255
  %v1272 = vadd.s32 %v1267, %v1269
  %vm1273 = vc.u32 %v1267, %v1269
  %v1274 = vadd.s32 %v1270, 1
  %v1275 = vsel %vm1273, %v1274, %v1270
  %v1276 = vadd.s32 %v1271, %v1275
  %v1277 = vadd.s32 %v1276, 536870912
  %v1278 = vshrl.u32 %v1277, 30
  %v1279 = vshll.u32 %v1278, 30
  %v1280 = vsub.s32 %v1276, %v1279
  %vm1281 = vcmp.lt.s32.totalorder %v1280, 0
  %v1282 = vsub.s32 0, %v1280
  %v1283 = vsel %vm1281, %v1282, %v1280
  %v1284 = vclz %v1283
  %v1285 = vsub.s32 %v1284, 2
  %vm1286 = vcmp.gt.s32.totalorder 0, %v1285
  %v1287 = vsel %vm1286, 0, %v1285
  %v1288 = vsub.s32 32, %v1287
  %v1289 = vshll.u32 %v1280, %v1287
  %v1290 = vshrl.u32 %v1272, %v1288
  %v1291 = vor.u32 %v1289, %v1290
  %v1292 = vsub.s32 4294967266, %v1287
  %v1293 = vadd.s32 %v1292, 127
  %v1294 = vshll.u32 %v1293, 23
  %v1295 = vor.u32 4788187, %v1294
  %v1296 = vand.u32 2147483647, %v1295
  %v1298 = vcvt.s32.f32 %v1291
  %v1299 = vmul.f32 %v1298, %v1296
  %v1300 = vxor.u32 %v1299, 2147483648
  %v1301 = vsel %vm1218, %v1300, %v1299
  %v1302 = vsub.s32 4, %v1278
  %v1303 = vsel %vm1218, %v1302, %v1278
  %v1304 = vsel %vm1217, %v154, %v1301
  %v1305 = vsel %vm1217, 0, %v1303
  %v1306 = vcosq.f32.pop %v1304
  %v1307 = vsinq.f32.pop %v1304
  %vm1308 = vweird.f32 %v154
  %v1309 = vadd.s32 %v1305, 3
  %v1310 = vand.u32 %v1309, 3
  %vm1311 = vcmp.lt.s32.totalorder %v1310, 2
  %vm1312 = vcmp.eq.s32.totalorder %v1310, 0
  %v1313 = vxor.u32 %v1307, 2147483648
  %v1314 = vsel %vm1312, %v1306, %v1313
  %vm1315 = vcmp.eq.s32.totalorder %v1310, 2
  %v1316 = vxor.u32 %v1306, 2147483648
  %v1317 = vsel %vm1315, %v1316, %v1307
  %v1318 = vsel %vm1311, %v1314, %v1317
  %v1319 = vsel %vm1308, nan, %v1318
  %v1320 = vand.u32 2147483647, %v157
  %vm1321 = vcmp.le.f32.partialorder %v1320, 0.7853982
  %vm1322 = vcmp.lt.s32.totalorder %v157, 0
  %v1323 = vand.u32 %v157, 2139095040
  %v1324 = vshrl.u32 %v1323, 23
  %v1325 = vsub.s32 %v1324, 127
  %v1326 = vand.u32 2147483647, %v157
  %v1327 = vand.u32 %v1326, 8388607
  %v1328 = vor.u32 %v1327, 8388608
  %v1329 = vsub.s32 0, %v1328
  %v1330 = vadd.s32 %v1325, 1
  %vm1331 = vcmp.gt.s32.totalorder %v1330, 0
  %v1332 = vsel %vm1331, %v1330, 0
  %v1333 = vshrl.u32 %v1332, 5
  %v1334 = vand.u32 %v1332, 31
  %v1335 = vsub.s32 32, %v1334
  %v1336 = vshrl.u32 683565275, %v1335
  %v1337 = vshll.u32 683565275, %v1334
  %v1338 = vshrl.u32 2475754826, %v1335
  %v1339 = vor.u32 %v1337, %v1338
  %v1340 = vshll.u32 2475754826, %v1334
  %v1341 = vshrl.u32 2131351028, %v1335
  %v1342 = vor.u32 %v1340, %v1341
  %v1343 = vshll.u32 2131351028, %v1334
  %v1344 = vshrl.u32 2102212464, %v1335
  %v1345 = vor.u32 %v1343, %v1344
  %v1346 = vshll.u32 2102212464, %v1334
  %v1347 = vshrl.u32 920167782, %v1335
  %v1348 = vor.u32 %v1346, %v1347
  %v1349 = vshll.u32 920167782, %v1334
  %v1350 = vshrl.u32 1326507024, %v1335
  %v1351 = vor.u32 %v1349, %v1350
  %vm1352 = vcmp.lt.s32.totalorder %v1333, 1
  %vm1353 = vcmp.lt.s32.totalorder %v1333, 2
  %vm1354 = vcmp.lt.s32.totalorder %v1333, 3
  %vm1355 = vcmp.lt.s32.totalorder %v1333, 4
  %v1356 = vsel %vm1352, %v1336, %v1339
  %v1357 = vsel %vm1355, %v1345, 2102212464
  %v1358 = vsel %vm1354, %v1342, %v1357
  %v1359 = vsel %vm1353, %v1356, %v1358
  %v1360 = vsel %vm1352, %v1339, %v1342
  %v1361 = vsel %vm1355, %v1348, 920167782
  %v1362 = vsel %vm1354, %v1345, %v1361
  %v1363 = vsel %vm1353, %v1360, %v1362
  %v1364 = vsel %vm1352, %v1342, %v1345
  %v1365 = vsel %vm1355, %v1351, 1326507024
  %v1366 = vsel %vm1354, %v1348, %v1365
  %v1367 = vsel %vm1353, %v1364, %v1366
  %v1368 = vshll.u32 %v1328, 8
  %v1369 = vmul.u32.u64.compose %v1368, %v1367
  %v1370 = vextract.low.u32 %v1369
  %v1371 = vextract.high.u32 %v1369
  %v1372 = vmul.u32.u64.compose %v1368, %v1363
  %v1373 = vextract.low.u32 %v1372
  %v1374 = vextract.high.u32 %v1372
  %v1375 = vmul.u32 %v1368, %v1359
  %v1376 = vadd.s32 %v1371, %v1373
  %vm1377 = vc.u32 %v1371, %v1373
  %v1378 = vadd.s32 %v1374, 1
  %v1379 = vsel %vm1377, %v1378, %v1374
  %v1380 = vadd.s32 %v1375, %v1379
  %v1381 = vadd.s32 %v1380, 536870912
  %v1382 = vshrl.u32 %v1381, 30
  %v1383 = vshll.u32 %v1382, 30
  %v1384 = vsub.s32 %v1380, %v1383
  %vm1385 = vcmp.lt.s32.totalorder %v1384, 0
  %v1386 = vsub.s32 0, %v1384
  %v1387 = vsel %vm1385, %v1386, %v1384
  %v1388 = vclz %v1387
  %v1389 = vsub.s32 %v1388, 2
  %vm1390 = vcmp.gt.s32.totalorder 0, %v1389
  %v1391 = vsel %vm1390, 0, %v1389
  %v1392 = vsub.s32 32, %v1391
  %v1393 = vshll.u32 %v1384, %v1391
  %v1394 = vshrl.u32 %v1376, %v1392
  %v1395 = vor.u32 %v1393, %v1394
  %v1396 = vsub.s32 4294967266, %v1391
  %v1397 = vadd.s32 %v1396, 127
  %v1398 = vshll.u32 %v1397, 23
  %v1399 = vor.u32 4788187, %v1398
  %v1400 = vand.u32 2147483647, %v1399
  %v1402 = vcvt.s32.f32 %v1395
  %v1403 = vmul.f32 %v1402, %v1400
  %v1404 = vxor.u32 %v1403, 2147483648
  %v1405 = vsel %vm1322, %v1404, %v1403
  %v1406 = vsub.s32 4, %v1382
  %v1407 = vsel %vm1322, %v1406, %v1382
  %v1408 = vsel %vm1321, %v157, %v1405
  %v1409 = vsel %vm1321, 0, %v1407
  %v1410 = vcosq.f32.pop %v1408
  %v1411 = vsinq.f32.pop %v1408
  %vm1412 = vweird.f32 %v157
  %v1413 = vadd.s32 %v1409, 3
  %v1414 = vand.u32 %v1413, 3
  %vm1415 = vcmp.lt.s32.totalorder %v1414, 2
  %vm1416 = vcmp.eq.s32.totalorder %v1414, 0
  %v1417 = vxor.u32 %v1411, 2147483648
  %v1418 = vsel %vm1416, %v1410, %v1417
  %vm1419 = vcmp.eq.s32.totalorder %v1414, 2
  %v1420 = vxor.u32 %v1410, 2147483648
  %v1421 = vsel %vm1419, %v1420, %v1411
  %v1422 = vsel %vm1415, %v1418, %v1421
  %v1423 = vsel %vm1412, nan, %v1422
  %v1424 = vand.u32 2147483647, %v162
  %vm1425 = vcmp.le.f32.partialorder %v1424, 0.7853982
  %vm1426 = vcmp.lt.s32.totalorder %v162, 0
  %v1427 = vand.u32 %v162, 2139095040
  %v1428 = vshrl.u32 %v1427, 23
  %v1429 = vsub.s32 %v1428, 127
  %v1430 = vand.u32 2147483647, %v162
  %v1431 = vand.u32 %v1430, 8388607
  %v1432 = vor.u32 %v1431, 8388608
  %v1433 = vsub.s32 0, %v1432
  %v1434 = vadd.s32 %v1429, 1
  %vm1435 = vcmp.gt.s32.totalorder %v1434, 0
  %v1436 = vsel %vm1435, %v1434, 0
  %v1437 = vshrl.u32 %v1436, 5
  %v1438 = vand.u32 %v1436, 31
  %v1439 = vsub.s32 32, %v1438
  %v1440 = vshrl.u32 683565275, %v1439
  %v1441 = vshll.u32 683565275, %v1438
  %v1442 = vshrl.u32 2475754826, %v1439
  %v1443 = vor.u32 %v1441, %v1442
  %v1444 = vshll.u32 2475754826, %v1438
  %v1445 = vshrl.u32 2131351028, %v1439
  %v1446 = vor.u32 %v1444, %v1445
  %v1447 = vshll.u32 2131351028, %v1438
  %v1448 = vshrl.u32 2102212464, %v1439
  %v1449 = vor.u32 %v1447, %v1448
  %v1450 = vshll.u32 2102212464, %v1438
  %v1451 = vshrl.u32 920167782, %v1439
  %v1452 = vor.u32 %v1450, %v1451
  %v1453 = vshll.u32 920167782, %v1438
  %v1454 = vshrl.u32 1326507024, %v1439
  %v1455 = vor.u32 %v1453, %v1454
  %vm1456 = vcmp.lt.s32.totalorder %v1437, 1
  %vm1457 = vcmp.lt.s32.totalorder %v1437, 2
  %vm1458 = vcmp.lt.s32.totalorder %v1437, 3
  %vm1459 = vcmp.lt.s32.totalorder %v1437, 4
  %v1460 = vsel %vm1456, %v1440, %v1443
  %v1461 = vsel %vm1459, %v1449, 2102212464
  %v1462 = vsel %vm1458, %v1446, %v1461
  %v1463 = vsel %vm1457, %v1460, %v1462
  %v1464 = vsel %vm1456, %v1443, %v1446
  %v1465 = vsel %vm1459, %v1452, 920167782
  %v1466 = vsel %vm1458, %v1449, %v1465
  %v1467 = vsel %vm1457, %v1464, %v1466
  %v1468 = vsel %vm1456, %v1446, %v1449
  %v1469 = vsel %vm1459, %v1455, 1326507024
  %v1470 = vsel %vm1458, %v1452, %v1469
  %v1471 = vsel %vm1457, %v1468, %v1470
  %v1472 = vshll.u32 %v1432, 8
  %v1473 = vmul.u32.u64.compose %v1472, %v1471
  %v1474 = vextract.low.u32 %v1473
  %v1475 = vextract.high.u32 %v1473
  %v1476 = vmul.u32.u64.compose %v1472, %v1467
  %v1477 = vextract.low.u32 %v1476
  %v1478 = vextract.high.u32 %v1476
  %v1479 = vmul.u32 %v1472, %v1463
  %v1480 = vadd.s32 %v1475, %v1477
  %vm1481 = vc.u32 %v1475, %v1477
  %v1482 = vadd.s32 %v1478, 1
  %v1483 = vsel %vm1481, %v1482, %v1478
  %v1484 = vadd.s32 %v1479, %v1483
  %v1485 = vadd.s32 %v1484, 536870912
  %v1486 = vshrl.u32 %v1485, 30
  %v1487 = vshll.u32 %v1486, 30
  %v1488 = vsub.s32 %v1484, %v1487
  %vm1489 = vcmp.lt.s32.totalorder %v1488, 0
  %v1490 = vsub.s32 0, %v1488
  %v1491 = vsel %vm1489, %v1490, %v1488
  %v1492 = vclz %v1491
  %v1493 = vsub.s32 %v1492, 2
  %vm1494 = vcmp.gt.s32.totalorder 0, %v1493
  %v1495 = vsel %vm1494, 0, %v1493
  %v1496 = vsub.s32 32, %v1495
  %v1497 = vshll.u32 %v1488, %v1495
  %v1498 = vshrl.u32 %v1480, %v1496
  %v1499 = vor.u32 %v1497, %v1498
  %v1500 = vsub.s32 4294967266, %v1495
  %v1501 = vadd.s32 %v1500, 127
  %v1502 = vshll.u32 %v1501, 23
  %v1503 = vor.u32 4788187, %v1502
  %v1504 = vand.u32 2147483647, %v1503
  %v1506 = vcvt.s32.f32 %v1499
  %v1507 = vmul.f32 %v1506, %v1504
  %v1508 = vxor.u32 %v1507, 2147483648
  %v1509 = vsel %vm1426, %v1508, %v1507
  %v1510 = vsub.s32 4, %v1486
  %v1511 = vsel %vm1426, %v1510, %v1486
  %v1512 = vsel %vm1425, %v162, %v1509
  %v1513 = vsel %vm1425, 0, %v1511
  %v1514 = vcosq.f32.pop %v1512
  %v1515 = vsinq.f32.pop %v1512
  %vm1516 = vweird.f32 %v162
  %v1517 = vadd.s32 %v1513, 3
  %v1518 = vand.u32 %v1517, 3
  %vm1519 = vcmp.lt.s32.totalorder %v1518, 2
  %vm1520 = vcmp.eq.s32.totalorder %v1518, 0
  %v1521 = vxor.u32 %v1515, 2147483648
  %v1522 = vsel %vm1520, %v1514, %v1521
  %vm1523 = vcmp.eq.s32.totalorder %v1518, 2
  %v1524 = vxor.u32 %v1514, 2147483648
  %v1525 = vsel %vm1523, %v1524, %v1515
  %v1526 = vsel %vm1519, %v1522, %v1525
  %v1527 = vsel %vm1516, nan, %v1526
  %v1528 = vand.u32 2147483647, %v165
  %vm1529 = vcmp.le.f32.partialorder %v1528, 0.7853982
  %vm1530 = vcmp.lt.s32.totalorder %v165, 0
  %v1531 = vand.u32 %v165, 2139095040
  %v1532 = vshrl.u32 %v1531, 23
  %v1533 = vsub.s32 %v1532, 127
  %v1534 = vand.u32 2147483647, %v165
  %v1535 = vand.u32 %v1534, 8388607
  %v1536 = vor.u32 %v1535, 8388608
  %v1537 = vsub.s32 0, %v1536
  %v1538 = vadd.s32 %v1533, 1
  %vm1539 = vcmp.gt.s32.totalorder %v1538, 0
  %v1540 = vsel %vm1539, %v1538, 0
  %v1541 = vshrl.u32 %v1540, 5
  %v1542 = vand.u32 %v1540, 31
  %v1543 = vsub.s32 32, %v1542
  %v1544 = vshrl.u32 683565275, %v1543
  %v1545 = vshll.u32 683565275, %v1542
  %v1546 = vshrl.u32 2475754826, %v1543
  %v1547 = vor.u32 %v1545, %v1546
  %v1548 = vshll.u32 2475754826, %v1542
  %v1549 = vshrl.u32 2131351028, %v1543
  %v1550 = vor.u32 %v1548, %v1549
  %v1551 = vshll.u32 2131351028, %v1542
  %v1552 = vshrl.u32 2102212464, %v1543
  %v1553 = vor.u32 %v1551, %v1552
  %v1554 = vshll.u32 2102212464, %v1542
  %v1555 = vshrl.u32 920167782, %v1543
  %v1556 = vor.u32 %v1554, %v1555
  %v1557 = vshll.u32 920167782, %v1542
  %v1558 = vshrl.u32 1326507024, %v1543
  %v1559 = vor.u32 %v1557, %v1558
  %vm1560 = vcmp.lt.s32.totalorder %v1541, 1
  %vm1561 = vcmp.lt.s32.totalorder %v1541, 2
  %vm1562 = vcmp.lt.s32.totalorder %v1541, 3
  %vm1563 = vcmp.lt.s32.totalorder %v1541, 4
  %v1564 = vsel %vm1560, %v1544, %v1547
  %v1565 = vsel %vm1563, %v1553, 2102212464
  %v1566 = vsel %vm1562, %v1550, %v1565
  %v1567 = vsel %vm1561, %v1564, %v1566
  %v1568 = vsel %vm1560, %v1547, %v1550
  %v1569 = vsel %vm1563, %v1556, 920167782
  %v1570 = vsel %vm1562, %v1553, %v1569
  %v1571 = vsel %vm1561, %v1568, %v1570
  %v1572 = vsel %vm1560, %v1550, %v1553
  %v1573 = vsel %vm1563, %v1559, 1326507024
  %v1574 = vsel %vm1562, %v1556, %v1573
  %v1575 = vsel %vm1561, %v1572, %v1574
  %v1576 = vshll.u32 %v1536, 8
  %v1577 = vmul.u32.u64.compose %v1576, %v1575
  %v1578 = vextract.low.u32 %v1577
  %v1579 = vextract.high.u32 %v1577
  %v1580 = vmul.u32.u64.compose %v1576, %v1571
  %v1581 = vextract.low.u32 %v1580
  %v1582 = vextract.high.u32 %v1580
  %v1583 = vmul.u32 %v1576, %v1567
  %v1584 = vadd.s32 %v1579, %v1581
  %vm1585 = vc.u32 %v1579, %v1581
  %v1586 = vadd.s32 %v1582, 1
  %v1587 = vsel %vm1585, %v1586, %v1582
  %v1588 = vadd.s32 %v1583, %v1587
  %v1589 = vadd.s32 %v1588, 536870912
  %v1590 = vshrl.u32 %v1589, 30
  %v1591 = vshll.u32 %v1590, 30
  %v1592 = vsub.s32 %v1588, %v1591
  %vm1593 = vcmp.lt.s32.totalorder %v1592, 0
  %v1594 = vsub.s32 0, %v1592
  %v1595 = vsel %vm1593, %v1594, %v1592
  %v1596 = vclz %v1595
  %v1597 = vsub.s32 %v1596, 2
  %vm1598 = vcmp.gt.s32.totalorder 0, %v1597
  %v1599 = vsel %vm1598, 0, %v1597
  %v1600 = vsub.s32 32, %v1599
  %v1601 = vshll.u32 %v1592, %v1599
  %v1602 = vshrl.u32 %v1584, %v1600
  %v1603 = vor.u32 %v1601, %v1602
  %v1604 = vsub.s32 4294967266, %v1599
  %v1605 = vadd.s32 %v1604, 127
  %v1606 = vshll.u32 %v1605, 23
  %v1607 = vor.u32 4788187, %v1606
  %v1608 = vand.u32 2147483647, %v1607
  %v1610 = vcvt.s32.f32 %v1603
  %v1611 = vmul.f32 %v1610, %v1608
  %v1612 = vxor.u32 %v1611, 2147483648
  %v1613 = vsel %vm1530, %v1612, %v1611
  %v1614 = vsub.s32 4, %v1590
  %v1615 = vsel %vm1530, %v1614, %v1590
  %v1616 = vsel %vm1529, %v165, %v1613
  %v1617 = vsel %vm1529, 0, %v1615
  %v1618 = vcosq.f32.pop %v1616
  %v1619 = vsinq.f32.pop %v1616
  %vm1620 = vweird.f32 %v165
  %v1621 = vadd.s32 %v1617, 3
  %v1622 = vand.u32 %v1621, 3
  %vm1623 = vcmp.lt.s32.totalorder %v1622, 2
  %vm1624 = vcmp.eq.s32.totalorder %v1622, 0
  %v1625 = vxor.u32 %v1619, 2147483648
  %v1626 = vsel %vm1624, %v1618, %v1625
  %vm1627 = vcmp.eq.s32.totalorder %v1622, 2
  %v1628 = vxor.u32 %v1618, 2147483648
  %v1629 = vsel %vm1627, %v1628, %v1619
  %v1630 = vsel %vm1623, %v1626, %v1629
  %v1631 = vsel %vm1620, nan, %v1630
  %v1632 = vand.u32 2147483647, %v170
  %vm1633 = vcmp.le.f32.partialorder %v1632, 0.7853982
  %vm1634 = vcmp.lt.s32.totalorder %v170, 0
  %v1635 = vand.u32 %v170, 2139095040
  %v1636 = vshrl.u32 %v1635, 23
  %v1637 = vsub.s32 %v1636, 127
  %v1638 = vand.u32 2147483647, %v170
  %v1639 = vand.u32 %v1638, 8388607
  %v1640 = vor.u32 %v1639, 8388608
  %v1641 = vsub.s32 0, %v1640
  %v1642 = vadd.s32 %v1637, 1
  %vm1643 = vcmp.gt.s32.totalorder %v1642, 0
  %v1644 = vsel %vm1643, %v1642, 0
  %v1645 = vshrl.u32 %v1644, 5
  %v1646 = vand.u32 %v1644, 31
  %v1647 = vsub.s32 32, %v1646
  %v1648 = vshrl.u32 683565275, %v1647
  %v1649 = vshll.u32 683565275, %v1646
  %v1650 = vshrl.u32 2475754826, %v1647
  %v1651 = vor.u32 %v1649, %v1650
  %v1652 = vshll.u32 2475754826, %v1646
  %v1653 = vshrl.u32 2131351028, %v1647
  %v1654 = vor.u32 %v1652, %v1653
  %v1655 = vshll.u32 2131351028, %v1646
  %v1656 = vshrl.u32 2102212464, %v1647
  %v1657 = vor.u32 %v1655, %v1656
  %v1658 = vshll.u32 2102212464, %v1646
  %v1659 = vshrl.u32 920167782, %v1647
  %v1660 = vor.u32 %v1658, %v1659
  %v1661 = vshll.u32 920167782, %v1646
  %v1662 = vshrl.u32 1326507024, %v1647
  %v1663 = vor.u32 %v1661, %v1662
  %vm1664 = vcmp.lt.s32.totalorder %v1645, 1
  %vm1665 = vcmp.lt.s32.totalorder %v1645, 2
  %vm1666 = vcmp.lt.s32.totalorder %v1645, 3
  %vm1667 = vcmp.lt.s32.totalorder %v1645, 4
  %v1668 = vsel %vm1664, %v1648, %v1651
  %v1669 = vsel %vm1667, %v1657, 2102212464
  %v1670 = vsel %vm1666, %v1654, %v1669
  %v1671 = vsel %vm1665, %v1668, %v1670
  %v1672 = vsel %vm1664, %v1651, %v1654
  %v1673 = vsel %vm1667, %v1660, 920167782
  %v1674 = vsel %vm1666, %v1657, %v1673
  %v1675 = vsel %vm1665, %v1672, %v1674
  %v1676 = vsel %vm1664, %v1654, %v1657
  %v1677 = vsel %vm1667, %v1663, 1326507024
  %v1678 = vsel %vm1666, %v1660, %v1677
  %v1679 = vsel %vm1665, %v1676, %v1678
  %v1680 = vshll.u32 %v1640, 8
  %v1681 = vmul.u32.u64.compose %v1680, %v1679
  %v1682 = vextract.low.u32 %v1681
  %v1683 = vextract.high.u32 %v1681
  %v1684 = vmul.u32.u64.compose %v1680, %v1675
  %v1685 = vextract.low.u32 %v1684
  %v1686 = vextract.high.u32 %v1684
  %v1687 = vmul.u32 %v1680, %v1671
  %v1688 = vadd.s32 %v1683, %v1685
  %vm1689 = vc.u32 %v1683, %v1685
  %v1690 = vadd.s32 %v1686, 1
  %v1691 = vsel %vm1689, %v1690, %v1686
  %v1692 = vadd.s32 %v1687, %v1691
  %v1693 = vadd.s32 %v1692, 536870912
  %v1694 = vshrl.u32 %v1693, 30
  %v1695 = vshll.u32 %v1694, 30
  %v1696 = vsub.s32 %v1692, %v1695
  %vm1697 = vcmp.lt.s32.totalorder %v1696, 0
  %v1698 = vsub.s32 0, %v1696
  %v1699 = vsel %vm1697, %v1698, %v1696
  %v1700 = vclz %v1699
  %v1701 = vsub.s32 %v1700, 2
  %vm1702 = vcmp.gt.s32.totalorder 0, %v1701
  %v1703 = vsel %vm1702, 0, %v1701
  %v1704 = vsub.s32 32, %v1703
  %v1705 = vshll.u32 %v1696, %v1703
  %v1706 = vshrl.u32 %v1688, %v1704
  %v1707 = vor.u32 %v1705, %v1706
  %v1708 = vsub.s32 4294967266, %v1703
  %v1709 = vadd.s32 %v1708, 127
  %v1710 = vshll.u32 %v1709, 23
  %v1711 = vor.u32 4788187, %v1710
  %v1712 = vand.u32 2147483647, %v1711
  %v1714 = vcvt.s32.f32 %v1707
  %v1715 = vmul.f32 %v1714, %v1712
  %v1716 = vxor.u32 %v1715, 2147483648
  %v1717 = vsel %vm1634, %v1716, %v1715
  %v1718 = vsub.s32 4, %v1694
  %v1719 = vsel %vm1634, %v1718, %v1694
  %v1720 = vsel %vm1633, %v170, %v1717
  %v1721 = vsel %vm1633, 0, %v1719
  %v1722 = vcosq.f32.pop %v1720
  %v1723 = vsinq.f32.pop %v1720
  %vm1724 = vweird.f32 %v170
  %v1725 = vadd.s32 %v1721, 3
  %v1726 = vand.u32 %v1725, 3
  %vm1727 = vcmp.lt.s32.totalorder %v1726, 2
  %vm1728 = vcmp.eq.s32.totalorder %v1726, 0
  %v1729 = vxor.u32 %v1723, 2147483648
  %v1730 = vsel %vm1728, %v1722, %v1729
  %vm1731 = vcmp.eq.s32.totalorder %v1726, 2
  %v1732 = vxor.u32 %v1722, 2147483648
  %v1733 = vsel %vm1731, %v1732, %v1723
  %v1734 = vsel %vm1727, %v1730, %v1733
  %v1735 = vsel %vm1724, nan, %v1734
  %v1736 = vand.u32 2147483647, %v173
  %vm1737 = vcmp.le.f32.partialorder %v1736, 0.7853982
  %vm1738 = vcmp.lt.s32.totalorder %v173, 0
  %v1739 = vand.u32 %v173, 2139095040
  %v1740 = vshrl.u32 %v1739, 23
  %v1741 = vsub.s32 %v1740, 127
  %v1742 = vand.u32 2147483647, %v173
  %v1743 = vand.u32 %v1742, 8388607
  %v1744 = vor.u32 %v1743, 8388608
  %v1745 = vsub.s32 0, %v1744
  %v1746 = vadd.s32 %v1741, 1
  %vm1747 = vcmp.gt.s32.totalorder %v1746, 0
  %v1748 = vsel %vm1747, %v1746, 0
  %v1749 = vshrl.u32 %v1748, 5
  %v1750 = vand.u32 %v1748, 31
  %v1751 = vsub.s32 32, %v1750
  %v1752 = vshrl.u32 683565275, %v1751
  %v1753 = vshll.u32 683565275, %v1750
  %v1754 = vshrl.u32 2475754826, %v1751
  %v1755 = vor.u32 %v1753, %v1754
  %v1756 = vshll.u32 2475754826, %v1750
  %v1757 = vshrl.u32 2131351028, %v1751
  %v1758 = vor.u32 %v1756, %v1757
  %v1759 = vshll.u32 2131351028, %v1750
  %v1760 = vshrl.u32 2102212464, %v1751
  %v1761 = vor.u32 %v1759, %v1760
  %v1762 = vshll.u32 2102212464, %v1750
  %v1763 = vshrl.u32 920167782, %v1751
  %v1764 = vor.u32 %v1762, %v1763
  %v1765 = vshll.u32 920167782, %v1750
  %v1766 = vshrl.u32 1326507024, %v1751
  %v1767 = vor.u32 %v1765, %v1766
  %vm1768 = vcmp.lt.s32.totalorder %v1749, 1
  %vm1769 = vcmp.lt.s32.totalorder %v1749, 2
  %vm1770 = vcmp.lt.s32.totalorder %v1749, 3
  %vm1771 = vcmp.lt.s32.totalorder %v1749, 4
  %v1772 = vsel %vm1768, %v1752, %v1755
  %v1773 = vsel %vm1771, %v1761, 2102212464
  %v1774 = vsel %vm1770, %v1758, %v1773
  %v1775 = vsel %vm1769, %v1772, %v1774
  %v1776 = vsel %vm1768, %v1755, %v1758
  %v1777 = vsel %vm1771, %v1764, 920167782
  %v1778 = vsel %vm1770, %v1761, %v1777
  %v1779 = vsel %vm1769, %v1776, %v1778
  %v1780 = vsel %vm1768, %v1758, %v1761
  %v1781 = vsel %vm1771, %v1767, 1326507024
  %v1782 = vsel %vm1770, %v1764, %v1781
  %v1783 = vsel %vm1769, %v1780, %v1782
  %v1784 = vshll.u32 %v1744, 8
  %v1785 = vmul.u32.u64.compose %v1784, %v1783
  %v1786 = vextract.low.u32 %v1785
  %v1787 = vextract.high.u32 %v1785
  %v1788 = vmul.u32.u64.compose %v1784, %v1779
  %v1789 = vextract.low.u32 %v1788
  %v1790 = vextract.high.u32 %v1788
  %v1791 = vmul.u32 %v1784, %v1775
  %v1792 = vadd.s32 %v1787, %v1789
  %vm1793 = vc.u32 %v1787, %v1789
  %v1794 = vadd.s32 %v1790, 1
  %v1795 = vsel %vm1793, %v1794, %v1790
  %v1796 = vadd.s32 %v1791, %v1795
  %v1797 = vadd.s32 %v1796, 536870912
  %v1798 = vshrl.u32 %v1797, 30
  %v1799 = vshll.u32 %v1798, 30
  %v1800 = vsub.s32 %v1796, %v1799
  %vm1801 = vcmp.lt.s32.totalorder %v1800, 0
  %v1802 = vsub.s32 0, %v1800
  %v1803 = vsel %vm1801, %v1802, %v1800
  %v1804 = vclz %v1803
  %v1805 = vsub.s32 %v1804, 2
  %vm1806 = vcmp.gt.s32.totalorder 0, %v1805
  %v1807 = vsel %vm1806, 0, %v1805
  %v1808 = vsub.s32 32, %v1807
  %v1809 = vshll.u32 %v1800, %v1807
  %v1810 = vshrl.u32 %v1792, %v1808
  %v1811 = vor.u32 %v1809, %v1810
  %v1812 = vsub.s32 4294967266, %v1807
  %v1813 = vadd.s32 %v1812, 127
  %v1814 = vshll.u32 %v1813, 23
  %v1815 = vor.u32 4788187, %v1814
  %v1816 = vand.u32 2147483647, %v1815
  %v1818 = vcvt.s32.f32 %v1811
  %v1819 = vmul.f32 %v1818, %v1816
  %v1820 = vxor.u32 %v1819, 2147483648
  %v1821 = vsel %vm1738, %v1820, %v1819
  %v1822 = vsub.s32 4, %v1798
  %v1823 = vsel %vm1738, %v1822, %v1798
  %v1824 = vsel %vm1737, %v173, %v1821
  %v1825 = vsel %vm1737, 0, %v1823
  %v1826 = vcosq.f32.pop %v1824
  %v1827 = vsinq.f32.pop %v1824
  %vm1828 = vweird.f32 %v173
  %v1829 = vadd.s32 %v1825, 3
  %v1830 = vand.u32 %v1829, 3
  %vm1831 = vcmp.lt.s32.totalorder %v1830, 2
  %vm1832 = vcmp.eq.s32.totalorder %v1830, 0
  %v1833 = vxor.u32 %v1827, 2147483648
  %v1834 = vsel %vm1832, %v1826, %v1833
  %vm1835 = vcmp.eq.s32.totalorder %v1830, 2
  %v1836 = vxor.u32 %v1826, 2147483648
  %v1837 = vsel %vm1835, %v1836, %v1827
  %v1838 = vsel %vm1831, %v1834, %v1837
  %v1839 = vsel %vm1828, nan, %v1838
  %vm1840 = vcmask 261120
  %1841 = vst.msk [vmem:[%s3] sm:$0xff] %vm1840, %v279
  %1842 = vst.msk [vmem:[%s3 + $0x8] sm:$0xff] %vm1840, %v383
  %1843 = vst.msk [vmem:[%s3 + $0x10] sm:$0xff] %vm1840, %v487
  %1844 = vst.msk [vmem:[%s3 + $0x18] sm:$0xff] %vm1840, %v591
  %1845 = vst.msk [vmem:[%s3 + $0x20] sm:$0xff] %vm1840, %v695
  %1846 = vst.msk [vmem:[%s3 + $0x28] sm:$0xff] %vm1840, %v799
  %1847 = vst.msk [vmem:[%s3 + $0x30] sm:$0xff] %vm1840, %v903
  %1848 = vst.msk [vmem:[%s3 + $0x38] sm:$0xff] %vm1840, %v1007
  %1849 = vst.msk [vmem:[%s3 + $0x40] sm:$0xff] %vm1840, %v1111
  %1850 = vst.msk [vmem:[%s3 + $0x48] sm:$0xff] %vm1840, %v1215
  %1851 = vst.msk [vmem:[%s3 + $0x50] sm:$0xff] %vm1840, %v1319
  %1852 = vst.msk [vmem:[%s3 + $0x58] sm:$0xff] %vm1840, %v1423
  %1853 = vst.msk [vmem:[%s3 + $0x60] sm:$0xff] %vm1840, %v1527
  %1854 = vst.msk [vmem:[%s3 + $0x68] sm:$0xff] %vm1840, %v1631
  %1855 = vst.msk [vmem:[%s3 + $0x70] sm:$0xff] %vm1840, %v1735
  %1856 = vst.msk [vmem:[%s3 + $0x78] sm:$0xff] %vm1840, %v1839
  // Predicated region
  $region14: #{tpu_custom_call.1} parent=0 // pred_check
    _
  $region15: #{tpu_custom_call.1} parent=0 // pred_check_branch
    %1858 = sbr.rel (0) target = $region17
  $region16: #{tpu_custom_call.1} parent=0 // pred_region
    _
  $region17: #{tpu_custom_call.1} parent=0 // pred_fallthru
    _
  // Predicated region
  $region18: #{tpu_custom_call.1} parent=0 // pred_check
    _
  $region19: #{tpu_custom_call.1} parent=0 // pred_check_branch
    %1860 = sbr.rel (0) target = $region21
  $region20: #{tpu_custom_call.1} parent=0 // pred_region
    _
  $region21: #{tpu_custom_call.1} parent=0 // pred_fallthru
    _

// kernel: tpu_custom_call.1
$region0: #{tpu_custom_call.1}
  #allocation0 [shape = 'u32[]', space=smem, size = 0x4, offset = 0x4, fixed_abs, tag = 'smem constant byte address 0x4 - core index']
  #allocation1 [shape = 'u32[144,128]{1,0:T(1,128)}', space=vmem, size = 0x12000, scoped, tag = 'internal scratch']
  %s0 = inlined_call_operand.vmem [shape: f32[128,16], index: 0, kind: input, shape index: {}]
  %s1 = inlined_call_operand.vmem [shape: bf16[16,32], index: 1, kind: input, shape index: {}]
  %s2 = inlined_call_operand.vmem [shape: f32[1,32], index: 2, kind: input, shape index: {}]
  %s3 = inlined_call_operand.vmem [shape: f32[128,32], index: 3, kind: output, shape index: {}]
  %s4 = sld [smem:[#allocation0]]
  $region22: #{tpu_custom_call.1} parent=0
    _
  %s6 = ssub.s32 1, %s4
  %s7 = scalar_select 0, %s6, %s4
  // Predicated region
  $region2: #{tpu_custom_call.1} parent=0 // pred_check
    _
  $region3: #{tpu_custom_call.1} parent=0 // pred_check_branch
    %9 = sbr.rel (0) target = $region5
  $region4: #{tpu_custom_call.1} parent=0 // pred_region
    _
  $region5: #{tpu_custom_call.1} parent=0 // pred_fallthru
    _
  // Predicated region
  $region6: #{tpu_custom_call.1} parent=0 // pred_check
    _
  $region7: #{tpu_custom_call.1} parent=0 // pred_check_branch
    %11 = sbr.rel (0) target = $region9
  $region8: #{tpu_custom_call.1} parent=0 // pred_region
    _
  $region9: #{tpu_custom_call.1} parent=0 // pred_fallthru
    _
  // Predicated region
  $region10: #{tpu_custom_call.1} parent=0 // pred_check
    _
  $region11: #{tpu_custom_call.1} parent=0 // pred_check_branch
    %13 = sbr.rel (0) target = $region13
  $region12: #{tpu_custom_call.1} parent=0 // pred_region
    _
  $region13: #{tpu_custom_call.1} parent=0 // pred_fallthru
    _
  %v15 = vld [vmem:[%s0] sm:$0xff]
  %v16 = vld [vmem:[%s0 + $0x8] sm:$0xff]
  %v17 = vld [vmem:[%s0 + $0x10] sm:$0xff]
  %v18 = vld [vmem:[%s0 + $0x18] sm:$0xff]
  %v19 = vld [vmem:[%s0 + $0x20] sm:$0xff]
  %v20 = vld [vmem:[%s0 + $0x28] sm:$0xff]
  %v21 = vld [vmem:[%s0 + $0x30] sm:$0xff]
  %v22 = vld [vmem:[%s0 + $0x38] sm:$0xff]
  %v23 = vld [vmem:[%s0 + $0x40] sm:$0xff]
  %v24 = vld [vmem:[%s0 + $0x48] sm:$0xff]
  %v25 = vld [vmem:[%s0 + $0x50] sm:$0xff]
  %v26 = vld [vmem:[%s0 + $0x58] sm:$0xff]
  %v27 = vld [vmem:[%s0 + $0x60] sm:$0xff]
  %v28 = vld [vmem:[%s0 + $0x68] sm:$0xff]
  %v29 = vld [vmem:[%s0 + $0x70] sm:$0xff]
  %v30 = vld [vmem:[%s0 + $0x78] sm:$0xff]
  %v31 = vpack.c.bf16 %v16, %v15
  %v32 = vpack.c.bf16 %v18, %v17
  %v33 = vpack.c.bf16 %v20, %v19
  %v34 = vpack.c.bf16 %v22, %v21
  %v35 = vpack.c.bf16 %v24, %v23
  %v36 = vpack.c.bf16 %v26, %v25
  %v37 = vpack.c.bf16 %v28, %v27
  %v38 = vpack.c.bf16 %v30, %v29
  %v39 = vld [vmem:[%s1] sm:$0xf]
  %v40 = vld [vmem:[%s1 + $0x4] sm:$0xf]
  %v41 = vld [vmem:[%s2] sm:$0x1]
  %v43 = vlaneseq
  %v44 = vshrl.u32 %v43, 7
  %v45 = vsub.s32 0, %v44
  %v46 = vrot.slane %v41, %v45
  %v50 = vunpack.c.l.b16 %v39
  %v51 = vunpack.c.l.b16 %v40
  %v52 = vpack.c.b16 %v51, %v50
  %vm54 = vcmask 130048
  %v56 = vsel %vm54, %v31, 0
  %v59 = vsel %vm54, %v32, 0
  %v62 = vsel %vm54, %v33, 0
  %v65 = vsel %vm54, %v34, 0
  %v68 = vsel %vm54, %v35, 0
  %v71 = vsel %vm54, %v36, 0
  %v74 = vsel %vm54, %v37, 0
  %v77 = vsel %vm54, %v38, 0
  %79 = vmatprep.subr.bf16.mxu0 0
  %80 = vmatpush1.bf16.msra.mxu0 0
  %81 = vmatprep.subr.bf16.mxu0 0
  %82 = vmatpush1.bf16.msra.mxu0 0
  %83 = vmatprep.subr.bf16.mxu0 0
  %84 = vmatpush1.bf16.msra.mxu0 0
  %85 = vmatprep.subr.bf16.mxu0 0
  %86 = vmatpush1.bf16.msra.mxu0 0
  %87 = vmatprep.subr.bf16.mxu0 0
  %88 = vmatpush1.bf16.msra.mxu0 0
  %89 = vmatprep.subr.bf16.mxu0 0
  %90 = vmatpush1.bf16.msra.mxu0 0
  %91 = vmatprep.subr.bf16.mxu0 0
  %92 = vmatpush1.bf16.msra.mxu0 0
  %93 = vmatprep.subr.bf16.mxu0 0
  %94 = vmatpush1.bf16.msra.mxu0 %v52
  %95 = vmatprep.subr.bf16.mxu0 0
  %96 = vmatpush2.bf16.msra.mxu0 0
  %97 = vmatprep.subr.bf16.mxu0 0
  %98 = vmatpush2.bf16.msra.mxu0 0
  %99 = vmatprep.subr.bf16.mxu0 0
  %100 = vmatpush2.bf16.msra.mxu0 0
  %101 = vmatprep.subr.bf16.mxu0 0
  %102 = vmatpush2.bf16.msra.mxu0 0
  %103 = vmatprep.subr.bf16.mxu0 0
  %104 = vmatpush2.bf16.msra.mxu0 0
  %105 = vmatprep.subr.bf16.mxu0 0
  %106 = vmatpush2.bf16.msra.mxu0 0
  %107 = vmatprep.subr.bf16.mxu0 0
  %108 = vmatpush2.bf16.msra.mxu0 0
  %109 = vmatprep.subr.bf16.mxu0 0
  %110 = vmatpush2.bf16.msra.mxu0 0
  %111 = vmatprep.mubr.bf16.mxu0 0
  %112 = vmatmul.mubr.bf16.gmra.mxu0 %v56
  %v113 = vpop.f32.mrf.mxu0
  %v114 = vadd.f32 %v46, %v113
  %v115 = vpop.f32.mrf.mxu0
  %v116 = vpop.f32.mrf.mxu0
  %v117 = vadd.f32 %v46, %v116
  %v118 = vpop.f32.mrf.mxu0
  %119 = vmatprep.mubr.bf16.mxu0 0
  %120 = vmatmul.mubr.bf16.gmra.mxu0 %v59
  %v121 = vpop.f32.mrf.mxu0
  %v122 = vadd.f32 %v46, %v121
  %v123 = vpop.f32.mrf.mxu0
  %v124 = vpop.f32.mrf.mxu0
  %v125 = vadd.f32 %v46, %v124
  %v126 = vpop.f32.mrf.mxu0
  %127 = vmatprep.mubr.bf16.mxu0 0
  %128 = vmatmul.mubr.bf16.gmra.mxu0 %v62
  %v129 = vpop.f32.mrf.mxu0
  %v130 = vadd.f32 %v46, %v129
  %v131 = vpop.f32.mrf.mxu0
  %v132 = vpop.f32.mrf.mxu0
  %v133 = vadd.f32 %v46, %v132
  %v134 = vpop.f32.mrf.mxu0
  %135 = vmatprep.mubr.bf16.mxu0 0
  %136 = vmatmul.mubr.bf16.gmra.mxu0 %v65
  %v137 = vpop.f32.mrf.mxu0
  %v138 = vadd.f32 %v46, %v137
  %v139 = vpop.f32.mrf.mxu0
  %v140 = vpop.f32.mrf.mxu0
  %v141 = vadd.f32 %v46, %v140
  %v142 = vpop.f32.mrf.mxu0
  %143 = vmatprep.mubr.bf16.mxu0 0
  %144 = vmatmul.mubr.bf16.gmra.mxu0 %v68
  %v145 = vpop.f32.mrf.mxu0
  %v146 = vadd.f32 %v46, %v145
  %v147 = vpop.f32.mrf.mxu0
  %v148 = vpop.f32.mrf.mxu0
  %v149 = vadd.f32 %v46, %v148
  %v150 = vpop.f32.mrf.mxu0
  %151 = vmatprep.mubr.bf16.mxu0 0
  %152 = vmatmul.mubr.bf16.gmra.mxu0 %v71
  %v153 = vpop.f32.mrf.mxu0
  %v154 = vadd.f32 %v46, %v153
  %v155 = vpop.f32.mrf.mxu0
  %v156 = vpop.f32.mrf.mxu0
  %v157 = vadd.f32 %v46, %v156
  %v158 = vpop.f32.mrf.mxu0
  %159 = vmatprep.mubr.bf16.mxu0 0
  %160 = vmatmul.mubr.bf16.gmra.mxu0 %v74
  %v161 = vpop.f32.mrf.mxu0
  %v162 = vadd.f32 %v46, %v161
  %v163 = vpop.f32.mrf.mxu0
  %v164 = vpop.f32.mrf.mxu0
  %v165 = vadd.f32 %v46, %v164
  %v166 = vpop.f32.mrf.mxu0
  %167 = vmatprep.mubr.bf16.mxu0 0
  %168 = vmatmul.mubr.bf16.gmra.mxu0 %v77
  %v169 = vpop.f32.mrf.mxu0
  %v170 = vadd.f32 %v46, %v169
  %v171 = vpop.f32.mrf.mxu0
  %v172 = vpop.f32.mrf.mxu0
  %v173 = vadd.f32 %v46, %v172
  %v174 = vpop.f32.mrf.mxu0
  %175 = vdwg.mxu0
  %v176 = vand.u32 2147483647, %v114
  %vm177 = vcmp.le.f32.partialorder %v176, 0.7853982
  %vm178 = vcmp.lt.s32.totalorder %v114, 0
  %v179 = vand.u32 %v114, 2139095040
  %v180 = vshrl.u32 %v179, 23
  %v181 = vsub.s32 %v180, 127
  %v182 = vand.u32 2147483647, %v114
  %v183 = vand.u32 %v182, 8388607
  %v184 = vor.u32 %v183, 8388608
  %v185 = vsub.s32 0, %v184
  %v186 = vadd.s32 %v181, 1
  %vm187 = vcmp.gt.s32.totalorder %v186, 0
  %v188 = vsel %vm187, %v186, 0
  %v189 = vshrl.u32 %v188, 5
  %v190 = vand.u32 %v188, 31
  %v191 = vsub.s32 32, %v190
  %v192 = vshrl.u32 683565275, %v191
  %v193 = vshll.u32 683565275, %v190
  %v194 = vshrl.u32 2475754826, %v191
  %v195 = vor.u32 %v193, %v194
  %v196 = vshll.u32 2475754826, %v190
  %v197 = vshrl.u32 2131351028, %v191
  %v198 = vor.u32 %v196, %v197
  %v199 = vshll.u32 2131351028, %v190
  %v200 = vshrl.u32 2102212464, %v191
  %v201 = vor.u32 %v199, %v200
  %v202 = vshll.u32 2102212464, %v190
  %v203 = vshrl.u32 920167782, %v191
  %v204 = vor.u32 %v202, %v203
  %v205 = vshll.u32 920167782, %v190
  %v206 = vshrl.u32 1326507024, %v191
  %v207 = vor.u32 %v205, %v206
  %vm208 = vcmp.lt.s32.totalorder %v189, 1
  %vm209 = vcmp.lt.s32.totalorder %v189, 2
  %vm210 = vcmp.lt.s32.totalorder %v189, 3
  %vm211 = vcmp.lt.s32.totalorder %v189, 4
  %v212 = vsel %vm208, %v192, %v195
  %v213 = vsel %vm211, %v201, 2102212464
  %v214 = vsel %vm210, %v198, %v213
  %v215 = vsel %vm209, %v212, %v214
  %v216 = vsel %vm208, %v195, %v198
  %v217 = vsel %vm211, %v204, 920167782
  %v218 = vsel %vm210, %v201, %v217
  %v219 = vsel %vm209, %v216, %v218
  %v220 = vsel %vm208, %v198, %v201
  %v221 = vsel %vm211, %v207, 1326507024
  %v222 = vsel %vm210, %v204, %v221
  %v223 = vsel %vm209, %v220, %v222
  %v224 = vshll.u32 %v184, 8
  %v225 = vmul.u32.u64.compose %v224, %v223
  %v226 = vextract.low.u32 %v225
  %v227 = vextract.high.u32 %v225
  %v228 = vmul.u32.u64.compose %v224, %v219
  %v229 = vextract.low.u32 %v228
  %v230 = vextract.high.u32 %v228
  %v231 = vmul.u32 %v224, %v215
  %v232 = vadd.s32 %v227, %v229
  %vm233 = vc.u32 %v227, %v229
  %v234 = vadd.s32 %v230, 1
  %v235 = vsel %vm233, %v234, %v230
  %v236 = vadd.s32 %v231, %v235
  %v237 = vadd.s32 %v236, 536870912
  %v238 = vshrl.u32 %v237, 30
  %v239 = vshll.u32 %v238, 30
  %v240 = vsub.s32 %v236, %v239
  %vm241 = vcmp.lt.s32.totalorder %v240, 0
  %v242 = vsub.s32 0, %v240
  %v243 = vsel %vm241, %v242, %v240
  %v244 = vclz %v243
  %v245 = vsub.s32 %v244, 2
  %vm246 = vcmp.gt.s32.totalorder 0, %v245
  %v247 = vsel %vm246, 0, %v245
  %v248 = vsub.s32 32, %v247
  %v249 = vshll.u32 %v240, %v247
  %v250 = vshrl.u32 %v232, %v248
  %v251 = vor.u32 %v249, %v250
  %v252 = vsub.s32 4294967266, %v247
  %v253 = vadd.s32 %v252, 127
  %v254 = vshll.u32 %v253, 23
  %v255 = vor.u32 4788187, %v254
  %v256 = vand.u32 2147483647, %v255
  %v258 = vcvt.s32.f32 %v251
  %v259 = vmul.f32 %v258, %v256
  %v260 = vxor.u32 %v259, 2147483648
  %v261 = vsel %vm178, %v260, %v259
  %v262 = vsub.s32 4, %v238
  %v263 = vsel %vm178, %v262, %v238
  %v264 = vsel %vm177, %v114, %v261
  %v265 = vsel %vm177, 0, %v263
  %v266 = vcosq.f32.pop %v264
  %v267 = vsinq.f32.pop %v264
  %vm268 = vweird.f32 %v114
  %v269 = vadd.s32 %v265, 3
  %v270 = vand.u32 %v269, 3
  %vm271 = vcmp.lt.s32.totalorder %v270, 2
  %vm272 = vcmp.eq.s32.totalorder %v270, 0
  %v273 = vxor.u32 %v267, 2147483648
  %v274 = vsel %vm272, %v266, %v273
  %vm275 = vcmp.eq.s32.totalorder %v270, 2
  %v276 = vxor.u32 %v266, 2147483648
  %v277 = vsel %vm275, %v276, %v267
  %v278 = vsel %vm271, %v274, %v277
  %v279 = vsel %vm268, nan, %v278
  %v280 = vand.u32 2147483647, %v117
  %vm281 = vcmp.le.f32.partialorder %v280, 0.7853982
  %vm282 = vcmp.lt.s32.totalorder %v117, 0
  %v283 = vand.u32 %v117, 2139095040
  %v284 = vshrl.u32 %v283, 23
  %v285 = vsub.s32 %v284, 127
  %v286 = vand.u32 2147483647, %v117
  %v287 = vand.u32 %v286, 8388607
  %v288 = vor.u32 %v287, 8388608
  %v289 = vsub.s32 0, %v288
  %v290 = vadd.s32 %v285, 1
  %vm291 = vcmp.gt.s32.totalorder %v290, 0
  %v292 = vsel %vm291, %v290, 0
  %v293 = vshrl.u32 %v292, 5
  %v294 = vand.u32 %v292, 31
  %v295 = vsub.s32 32, %v294
  %v296 = vshrl.u32 683565275, %v295
  %v297 = vshll.u32 683565275, %v294
  %v298 = vshrl.u32 2475754826, %v295
  %v299 = vor.u32 %v297, %v298
  %v300 = vshll.u32 2475754826, %v294
  %v301 = vshrl.u32 2131351028, %v295
  %v302 = vor.u32 %v300, %v301
  %v303 = vshll.u32 2131351028, %v294
  %v304 = vshrl.u32 2102212464, %v295
  %v305 = vor.u32 %v303, %v304
  %v306 = vshll.u32 2102212464, %v294
  %v307 = vshrl.u32 920167782, %v295
  %v308 = vor.u32 %v306, %v307
  %v309 = vshll.u32 920167782, %v294
  %v310 = vshrl.u32 1326507024, %v295
  %v311 = vor.u32 %v309, %v310
  %vm312 = vcmp.lt.s32.totalorder %v293, 1
  %vm313 = vcmp.lt.s32.totalorder %v293, 2
  %vm314 = vcmp.lt.s32.totalorder %v293, 3
  %vm315 = vcmp.lt.s32.totalorder %v293, 4
  %v316 = vsel %vm312, %v296, %v299
  %v317 = vsel %vm315, %v305, 2102212464
  %v318 = vsel %vm314, %v302, %v317
  %v319 = vsel %vm313, %v316, %v318
  %v320 = vsel %vm312, %v299, %v302
  %v321 = vsel %vm315, %v308, 920167782
  %v322 = vsel %vm314, %v305, %v321
  %v323 = vsel %vm313, %v320, %v322
  %v324 = vsel %vm312, %v302, %v305
  %v325 = vsel %vm315, %v311, 1326507024
  %v326 = vsel %vm314, %v308, %v325
  %v327 = vsel %vm313, %v324, %v326
  %v328 = vshll.u32 %v288, 8
  %v329 = vmul.u32.u64.compose %v328, %v327
  %v330 = vextract.low.u32 %v329
  %v331 = vextract.high.u32 %v329
  %v332 = vmul.u32.u64.compose %v328, %v323
  %v333 = vextract.low.u32 %v332
  %v334 = vextract.high.u32 %v332
  %v335 = vmul.u32 %v328, %v319
  %v336 = vadd.s32 %v331, %v333
  %vm337 = vc.u32 %v331, %v333
  %v338 = vadd.s32 %v334, 1
  %v339 = vsel %vm337, %v338, %v334
  %v340 = vadd.s32 %v335, %v339
  %v341 = vadd.s32 %v340, 536870912
  %v342 = vshrl.u32 %v341, 30
  %v343 = vshll.u32 %v342, 30
  %v344 = vsub.s32 %v340, %v343
  %vm345 = vcmp.lt.s32.totalorder %v344, 0
  %v346 = vsub.s32 0, %v344
  %v347 = vsel %vm345, %v346, %v344
  %v348 = vclz %v347
  %v349 = vsub.s32 %v348, 2
  %vm350 = vcmp.gt.s32.totalorder 0, %v349
  %v351 = vsel %vm350, 0, %v349
  %v352 = vsub.s32 32, %v351
  %v353 = vshll.u32 %v344, %v351
  %v354 = vshrl.u32 %v336, %v352
  %v355 = vor.u32 %v353, %v354
  %v356 = vsub.s32 4294967266, %v351
  %v357 = vadd.s32 %v356, 127
  %v358 = vshll.u32 %v357, 23
  %v359 = vor.u32 4788187, %v358
  %v360 = vand.u32 2147483647, %v359
  %v362 = vcvt.s32.f32 %v355
  %v363 = vmul.f32 %v362, %v360
  %v364 = vxor.u32 %v363, 2147483648
  %v365 = vsel %vm282, %v364, %v363
  %v366 = vsub.s32 4, %v342
  %v367 = vsel %vm282, %v366, %v342
  %v368 = vsel %vm281, %v117, %v365
  %v369 = vsel %vm281, 0, %v367
  %v370 = vcosq.f32.pop %v368
  %v371 = vsinq.f32.pop %v368
  %vm372 = vweird.f32 %v117
  %v373 = vadd.s32 %v369, 3
  %v374 = vand.u32 %v373, 3
  %vm375 = vcmp.lt.s32.totalorder %v374, 2
  %vm376 = vcmp.eq.s32.totalorder %v374, 0
  %v377 = vxor.u32 %v371, 2147483648
  %v378 = vsel %vm376, %v370, %v377
  %vm379 = vcmp.eq.s32.totalorder %v374, 2
  %v380 = vxor.u32 %v370, 2147483648
  %v381 = vsel %vm379, %v380, %v371
  %v382 = vsel %vm375, %v378, %v381
  %v383 = vsel %vm372, nan, %v382
  %v384 = vand.u32 2147483647, %v122
  %vm385 = vcmp.le.f32.partialorder %v384, 0.7853982
  %vm386 = vcmp.lt.s32.totalorder %v122, 0
  %v387 = vand.u32 %v122, 2139095040
  %v388 = vshrl.u32 %v387, 23
  %v389 = vsub.s32 %v388, 127
  %v390 = vand.u32 2147483647, %v122
  %v391 = vand.u32 %v390, 8388607
  %v392 = vor.u32 %v391, 8388608
  %v393 = vsub.s32 0, %v392
  %v394 = vadd.s32 %v389, 1
  %vm395 = vcmp.gt.s32.totalorder %v394, 0
  %v396 = vsel %vm395, %v394, 0
  %v397 = vshrl.u32 %v396, 5
  %v398 = vand.u32 %v396, 31
  %v399 = vsub.s32 32, %v398
  %v400 = vshrl.u32 683565275, %v399
  %v401 = vshll.u32 683565275, %v398
  %v402 = vshrl.u32 2475754826, %v399
  %v403 = vor.u32 %v401, %v402
  %v404 = vshll.u32 2475754826, %v398
  %v405 = vshrl.u32 2131351028, %v399
  %v406 = vor.u32 %v404, %v405
  %v407 = vshll.u32 2131351028, %v398
  %v408 = vshrl.u32 2102212464, %v399
  %v409 = vor.u32 %v407, %v408
  %v410 = vshll.u32 2102212464, %v398
  %v411 = vshrl.u32 920167782, %v399
  %v412 = vor.u32 %v410, %v411
  %v413 = vshll.u32 920167782, %v398
  %v414 = vshrl.u32 1326507024, %v399
  %v415 = vor.u32 %v413, %v414
  %vm416 = vcmp.lt.s32.totalorder %v397, 1
  %vm417 = vcmp.lt.s32.totalorder %v397, 2
  %vm418 = vcmp.lt.s32.totalorder %v397, 3
  %vm419 = vcmp.lt.s32.totalorder %v397, 4
  %v420 = vsel %vm416, %v400, %v403
  %v421 = vsel %vm419, %v409, 2102212464
  %v422 = vsel %vm418, %v406, %v421
  %v423 = vsel %vm417, %v420, %v422
  %v424 = vsel %vm416, %v403, %v406
  %v425 = vsel %vm419, %v412, 920167782
  %v426 = vsel %vm418, %v409, %v425
  %v427 = vsel %vm417, %v424, %v426
  %v428 = vsel %vm416, %v406, %v409
  %v429 = vsel %vm419, %v415, 1326507024
  %v430 = vsel %vm418, %v412, %v429
  %v431 = vsel %vm417, %v428, %v430
  %v432 = vshll.u32 %v392, 8
  %v433 = vmul.u32.u64.compose %v432, %v431
  %v434 = vextract.low.u32 %v433
  %v435 = vextract.high.u32 %v433
  %v436 = vmul.u32.u64.compose %v432, %v427
  %v437 = vextract.low.u32 %v436
  %v438 = vextract.high.u32 %v436
  %v439 = vmul.u32 %v432, %v423
  %v440 = vadd.s32 %v435, %v437
  %vm441 = vc.u32 %v435, %v437
  %v442 = vadd.s32 %v438, 1
  %v443 = vsel %vm441, %v442, %v438
  %v444 = vadd.s32 %v439, %v443
  %v445 = vadd.s32 %v444, 536870912
  %v446 = vshrl.u32 %v445, 30
  %v447 = vshll.u32 %v446, 30
  %v448 = vsub.s32 %v444, %v447
  %vm449 = vcmp.lt.s32.totalorder %v448, 0
  %v450 = vsub.s32 0, %v448
  %v451 = vsel %vm449, %v450, %v448
  %v452 = vclz %v451
  %v453 = vsub.s32 %v452, 2
  %vm454 = vcmp.gt.s32.totalorder 0, %v453
  %v455 = vsel %vm454, 0, %v453
  %v456 = vsub.s32 32, %v455
  %v457 = vshll.u32 %v448, %v455
  %v458 = vshrl.u32 %v440, %v456
  %v459 = vor.u32 %v457, %v458
  %v460 = vsub.s32 4294967266, %v455
  %v461 = vadd.s32 %v460, 127
  %v462 = vshll.u32 %v461, 23
  %v463 = vor.u32 4788187, %v462
  %v464 = vand.u32 2147483647, %v463
  %v466 = vcvt.s32.f32 %v459
  %v467 = vmul.f32 %v466, %v464
  %v468 = vxor.u32 %v467, 2147483648
  %v469 = vsel %vm386, %v468, %v467
  %v470 = vsub.s32 4, %v446
  %v471 = vsel %vm386, %v470, %v446
  %v472 = vsel %vm385, %v122, %v469
  %v473 = vsel %vm385, 0, %v471
  %v474 = vcosq.f32.pop %v472
  %v475 = vsinq.f32.pop %v472
  %vm476 = vweird.f32 %v122
  %v477 = vadd.s32 %v473, 3
  %v478 = vand.u32 %v477, 3
  %vm479 = vcmp.lt.s32.totalorder %v478, 2
  %vm480 = vcmp.eq.s32.totalorder %v478, 0
  %v481 = vxor.u32 %v475, 2147483648
  %v482 = vsel %vm480, %v474, %v481
  %vm483 = vcmp.eq.s32.totalorder %v478, 2
  %v484 = vxor.u32 %v474, 2147483648
  %v485 = vsel %vm483, %v484, %v475
  %v486 = vsel %vm479, %v482, %v485
  %v487 = vsel %vm476, nan, %v486
  %v488 = vand.u32 2147483647, %v125
  %vm489 = vcmp.le.f32.partialorder %v488, 0.7853982
  %vm490 = vcmp.lt.s32.totalorder %v125, 0
  %v491 = vand.u32 %v125, 2139095040
  %v492 = vshrl.u32 %v491, 23
  %v493 = vsub.s32 %v492, 127
  %v494 = vand.u32 2147483647, %v125
  %v495 = vand.u32 %v494, 8388607
  %v496 = vor.u32 %v495, 8388608
  %v497 = vsub.s32 0, %v496
  %v498 = vadd.s32 %v493, 1
  %vm499 = vcmp.gt.s32.totalorder %v498, 0
  %v500 = vsel %vm499, %v498, 0
  %v501 = vshrl.u32 %v500, 5
  %v502 = vand.u32 %v500, 31
  %v503 = vsub.s32 32, %v502
  %v504 = vshrl.u32 683565275, %v503
  %v505 = vshll.u32 683565275, %v502
  %v506 = vshrl.u32 2475754826, %v503
  %v507 = vor.u32 %v505, %v506
  %v508 = vshll.u32 2475754826, %v502
  %v509 = vshrl.u32 2131351028, %v503
  %v510 = vor.u32 %v508, %v509
  %v511 = vshll.u32 2131351028, %v502
  %v512 = vshrl.u32 2102212464, %v503
  %v513 = vor.u32 %v511, %v512
  %v514 = vshll.u32 2102212464, %v502
  %v515 = vshrl.u32 920167782, %v503
  %v516 = vor.u32 %v514, %v515
  %v517 = vshll.u32 920167782, %v502
  %v518 = vshrl.u32 1326507024, %v503
  %v519 = vor.u32 %v517, %v518
  %vm520 = vcmp.lt.s32.totalorder %v501, 1
  %vm521 = vcmp.lt.s32.totalorder %v501, 2
  %vm522 = vcmp.lt.s32.totalorder %v501, 3
  %vm523 = vcmp.lt.s32.totalorder %v501, 4
  %v524 = vsel %vm520, %v504, %v507
  %v525 = vsel %vm523, %v513, 2102212464
  %v526 = vsel %vm522, %v510, %v525
  %v527 = vsel %vm521, %v524, %v526
  %v528 = vsel %vm520, %v507, %v510
  %v529 = vsel %vm523, %v516, 920167782
  %v530 = vsel %vm522, %v513, %v529
  %v531 = vsel %vm521, %v528, %v530
  %v532 = vsel %vm520, %v510, %v513
  %v533 = vsel %vm523, %v519, 1326507024
  %v534 = vsel %vm522, %v516, %v533
  %v535 = vsel %vm521, %v532, %v534
  %v536 = vshll.u32 %v496, 8
  %v537 = vmul.u32.u64.compose %v536, %v535
  %v538 = vextract.low.u32 %v537
  %v539 = vextract.high.u32 %v537
  %v540 = vmul.u32.u64.compose %v536, %v531
  %v541 = vextract.low.u32 %v540
  %v542 = vextract.high.u32 %v540
  %v543 = vmul.u32 %v536, %v527
  %v544 = vadd.s32 %v539, %v541
  %vm545 = vc.u32 %v539, %v541
  %v546 = vadd.s32 %v542, 1
  %v547 = vsel %vm545, %v546, %v542
  %v548 = vadd.s32 %v543, %v547
  %v549 = vadd.s32 %v548, 536870912
  %v550 = vshrl.u32 %v549, 30
  %v551 = vshll.u32 %v550, 30
  %v552 = vsub.s32 %v548, %v551
  %vm553 = vcmp.lt.s32.totalorder %v552, 0
  %v554 = vsub.s32 0, %v552
  %v555 = vsel %vm553, %v554, %v552
  %v556 = vclz %v555
  %v557 = vsub.s32 %v556, 2
  %vm558 = vcmp.gt.s32.totalorder 0, %v557
  %v559 = vsel %vm558, 0, %v557
  %v560 = vsub.s32 32, %v559
  %v561 = vshll.u32 %v552, %v559
  %v562 = vshrl.u32 %v544, %v560
  %v563 = vor.u32 %v561, %v562
  %v564 = vsub.s32 4294967266, %v559
  %v565 = vadd.s32 %v564, 127
  %v566 = vshll.u32 %v565, 23
  %v567 = vor.u32 4788187, %v566
  %v568 = vand.u32 2147483647, %v567
  %v570 = vcvt.s32.f32 %v563
  %v571 = vmul.f32 %v570, %v568
  %v572 = vxor.u32 %v571, 2147483648
  %v573 = vsel %vm490, %v572, %v571
  %v574 = vsub.s32 4, %v550
  %v575 = vsel %vm490, %v574, %v550
  %v576 = vsel %vm489, %v125, %v573
  %v577 = vsel %vm489, 0, %v575
  %v578 = vcosq.f32.pop %v576
  %v579 = vsinq.f32.pop %v576
  %vm580 = vweird.f32 %v125
  %v581 = vadd.s32 %v577, 3
  %v582 = vand.u32 %v581, 3
  %vm583 = vcmp.lt.s32.totalorder %v582, 2
  %vm584 = vcmp.eq.s32.totalorder %v582, 0
  %v585 = vxor.u32 %v579, 2147483648
  %v586 = vsel %vm584, %v578, %v585
  %vm587 = vcmp.eq.s32.totalorder %v582, 2
  %v588 = vxor.u32 %v578, 2147483648
  %v589 = vsel %vm587, %v588, %v579
  %v590 = vsel %vm583, %v586, %v589
  %v591 = vsel %vm580, nan, %v590
  %v592 = vand.u32 2147483647, %v130
  %vm593 = vcmp.le.f32.partialorder %v592, 0.7853982
  %vm594 = vcmp.lt.s32.totalorder %v130, 0
  %v595 = vand.u32 %v130, 2139095040
  %v596 = vshrl.u32 %v595, 23
  %v597 = vsub.s32 %v596, 127
  %v598 = vand.u32 2147483647, %v130
  %v599 = vand.u32 %v598, 8388607
  %v600 = vor.u32 %v599, 8388608
  %v601 = vsub.s32 0, %v600
  %v602 = vadd.s32 %v597, 1
  %vm603 = vcmp.gt.s32.totalorder %v602, 0
  %v604 = vsel %vm603, %v602, 0
  %v605 = vshrl.u32 %v604, 5
  %v606 = vand.u32 %v604, 31
  %v607 = vsub.s32 32, %v606
  %v608 = vshrl.u32 683565275, %v607
  %v609 = vshll.u32 683565275, %v606
  %v610 = vshrl.u32 2475754826, %v607
  %v611 = vor.u32 %v609, %v610
  %v612 = vshll.u32 2475754826, %v606
  %v613 = vshrl.u32 2131351028, %v607
  %v614 = vor.u32 %v612, %v613
  %v615 = vshll.u32 2131351028, %v606
  %v616 = vshrl.u32 2102212464, %v607
  %v617 = vor.u32 %v615, %v616
  %v618 = vshll.u32 2102212464, %v606
  %v619 = vshrl.u32 920167782, %v607
  %v620 = vor.u32 %v618, %v619
  %v621 = vshll.u32 920167782, %v606
  %v622 = vshrl.u32 1326507024, %v607
  %v623 = vor.u32 %v621, %v622
  %vm624 = vcmp.lt.s32.totalorder %v605, 1
  %vm625 = vcmp.lt.s32.totalorder %v605, 2
  %vm626 = vcmp.lt.s32.totalorder %v605, 3
  %vm627 = vcmp.lt.s32.totalorder %v605, 4
  %v628 = vsel %vm624, %v608, %v611
  %v629 = vsel %vm627, %v617, 2102212464
  %v630 = vsel %vm626, %v614, %v629
  %v631 = vsel %vm625, %v628, %v630
  %v632 = vsel %vm624, %v611, %v614
  %v633 = vsel %vm627, %v620, 920167782
  %v634 = vsel %vm626, %v617, %v633
  %v635 = vsel %vm625, %v632, %v634
  %v636 = vsel %vm624, %v614, %v617
  %v637 = vsel %vm627, %v623, 1326507024
  %v638 = vsel %vm626, %v620, %v637
  %v639 = vsel %vm625, %v636, %v638
  %v640 = vshll.u32 %v600, 8
  %v641 = vmul.u32.u64.compose %v640, %v639
  %v642 = vextract.low.u32 %v641
  %v643 = vextract.high.u32 %v641
  %v644 = vmul.u32.u64.compose %v640, %v635
  %v645 = vextract.low.u32 %v644
  %v646 = vextract.high.u32 %v644
  %v647 = vmul.u32 %v640, %v631
  %v648 = vadd.s32 %v643, %v645
  %vm649 = vc.u32 %v643, %v645
  %v650 = vadd.s32 %v646, 1
  %v651 = vsel %vm649, %v650, %v646
  %v652 = vadd.s32 %v647, %v651
  %v653 = vadd.s32 %v652, 536870912
  %v654 = vshrl.u32 %v653, 30
  %v655 = vshll.u32 %v654, 30
  %v656 = vsub.s32 %v652, %v655
  %vm657 = vcmp.lt.s32.totalorder %v656, 0
  %v658 = vsub.s32 0, %v656
  %v659 = vsel %vm657, %v658, %v656
  %v660 = vclz %v659
  %v661 = vsub.s32 %v660, 2
  %vm662 = vcmp.gt.s32.totalorder 0, %v661
  %v663 = vsel %vm662, 0, %v661
  %v664 = vsub.s32 32, %v663
  %v665 = vshll.u32 %v656, %v663
  %v666 = vshrl.u32 %v648, %v664
  %v667 = vor.u32 %v665, %v666
  %v668 = vsub.s32 4294967266, %v663
  %v669 = vadd.s32 %v668, 127
  %v670 = vshll.u32 %v669, 23
  %v671 = vor.u32 4788187, %v670
  %v672 = vand.u32 2147483647, %v671
  %v674 = vcvt.s32.f32 %v667
  %v675 = vmul.f32 %v674, %v672
  %v676 = vxor.u32 %v675, 2147483648
  %v677 = vsel %vm594, %v676, %v675
  %v678 = vsub.s32 4, %v654
  %v679 = vsel %vm594, %v678, %v654
  %v680 = vsel %vm593, %v130, %v677
  %v681 = vsel %vm593, 0, %v679
  %v682 = vcosq.f32.pop %v680
  %v683 = vsinq.f32.pop %v680
  %vm684 = vweird.f32 %v130
  %v685 = vadd.s32 %v681, 3
  %v686 = vand.u32 %v685, 3
  %vm687 = vcmp.lt.s32.totalorder %v686, 2
  %vm688 = vcmp.eq.s32.totalorder %v686, 0
  %v689 = vxor.u32 %v683, 2147483648
  %v690 = vsel %vm688, %v682, %v689
  %vm691 = vcmp.eq.s32.totalorder %v686, 2
  %v692 = vxor.u32 %v682, 2147483648
  %v693 = vsel %vm691, %v692, %v683
  %v694 = vsel %vm687, %v690, %v693
  %v695 = vsel %vm684, nan, %v694
  %v696 = vand.u32 2147483647, %v133
  %vm697 = vcmp.le.f32.partialorder %v696, 0.7853982
  %vm698 = vcmp.lt.s32.totalorder %v133, 0
  %v699 = vand.u32 %v133, 2139095040
  %v700 = vshrl.u32 %v699, 23
  %v701 = vsub.s32 %v700, 127
  %v702 = vand.u32 2147483647, %v133
  %v703 = vand.u32 %v702, 8388607
  %v704 = vor.u32 %v703, 8388608
  %v705 = vsub.s32 0, %v704
  %v706 = vadd.s32 %v701, 1
  %vm707 = vcmp.gt.s32.totalorder %v706, 0
  %v708 = vsel %vm707, %v706, 0
  %v709 = vshrl.u32 %v708, 5
  %v710 = vand.u32 %v708, 31
  %v711 = vsub.s32 32, %v710
  %v712 = vshrl.u32 683565275, %v711
  %v713 = vshll.u32 683565275, %v710
  %v714 = vshrl.u32 2475754826, %v711
  %v715 = vor.u32 %v713, %v714
  %v716 = vshll.u32 2475754826, %v710
  %v717 = vshrl.u32 2131351028, %v711
  %v718 = vor.u32 %v716, %v717
  %v719 = vshll.u32 2131351028, %v710
  %v720 = vshrl.u32 2102212464, %v711
  %v721 = vor.u32 %v719, %v720
  %v722 = vshll.u32 2102212464, %v710
  %v723 = vshrl.u32 920167782, %v711
  %v724 = vor.u32 %v722, %v723
  %v725 = vshll.u32 920167782, %v710
  %v726 = vshrl.u32 1326507024, %v711
  %v727 = vor.u32 %v725, %v726
  %vm728 = vcmp.lt.s32.totalorder %v709, 1
  %vm729 = vcmp.lt.s32.totalorder %v709, 2
  %vm730 = vcmp.lt.s32.totalorder %v709, 3
  %vm731 = vcmp.lt.s32.totalorder %v709, 4
  %v732 = vsel %vm728, %v712, %v715
  %v733 = vsel %vm731, %v721, 2102212464
  %v734 = vsel %vm730, %v718, %v733
  %v735 = vsel %vm729, %v732, %v734
  %v736 = vsel %vm728, %v715, %v718
  %v737 = vsel %vm731, %v724, 920167782
  %v738 = vsel %vm730, %v721, %v737
  %v739 = vsel %vm729, %v736, %v738
  %v740 = vsel %vm728, %v718, %v721
  %v741 = vsel %vm731, %v727, 1326507024
  %v742 = vsel %vm730, %v724, %v741
  %v743 = vsel %vm729, %v740, %v742
  %v744 = vshll.u32 %v704, 8
  %v745 = vmul.u32.u64.compose %v744, %v743
  %v746 = vextract.low.u32 %v745
  %v747 = vextract.high.u32 %v745
  %v748 = vmul.u32.u64.compose %v744, %v739
  %v749 = vextract.low.u32 %v748
  %v750 = vextract.high.u32 %v748
  %v751 = vmul.u32 %v744, %v735
  %v752 = vadd.s32 %v747, %v749
  %vm753 = vc.u32 %v747, %v749
  %v754 = vadd.s32 %v750, 1
  %v755 = vsel %vm753, %v754, %v750
  %v756 = vadd.s32 %v751, %v755
  %v757 = vadd.s32 %v756, 536870912
  %v758 = vshrl.u32 %v757, 30
  %v759 = vshll.u32 %v758, 30
  %v760 = vsub.s32 %v756, %v759
  %vm761 = vcmp.lt.s32.totalorder %v760, 0
  %v762 = vsub.s32 0, %v760
  %v763 = vsel %vm761, %v762, %v760
  %v764 = vclz %v763
  %v765 = vsub.s32 %v764, 2
  %vm766 = vcmp.gt.s32.totalorder 0, %v765
  %v767 = vsel %vm766, 0, %v765
  %v768 = vsub.s32 32, %v767
  %v769 = vshll.u32 %v760, %v767
  %v770 = vshrl.u32 %v752, %v768
  %v771 = vor.u32 %v769, %v770
  %v772 = vsub.s32 4294967266, %v767
  %v773 = vadd.s32 %v772, 127
  %v774 = vshll.u32 %v773, 23
  %v775 = vor.u32 4788187, %v774
  %v776 = vand.u32 2147483647, %v775
  %v778 = vcvt.s32.f32 %v771
  %v779 = vmul.f32 %v778, %v776
  %v780 = vxor.u32 %v779, 2147483648
  %v781 = vsel %vm698, %v780, %v779
  %v782 = vsub.s32 4, %v758
  %v783 = vsel %vm698, %v782, %v758
  %v784 = vsel %vm697, %v133, %v781
  %v785 = vsel %vm697, 0, %v783
  %v786 = vcosq.f32.pop %v784
  %v787 = vsinq.f32.pop %v784
  %vm788 = vweird.f32 %v133
  %v789 = vadd.s32 %v785, 3
  %v790 = vand.u32 %v789, 3
  %vm791 = vcmp.lt.s32.totalorder %v790, 2
  %vm792 = vcmp.eq.s32.totalorder %v790, 0
  %v793 = vxor.u32 %v787, 2147483648
  %v794 = vsel %vm792, %v786, %v793
  %vm795 = vcmp.eq.s32.totalorder %v790, 2
  %v796 = vxor.u32 %v786, 2147483648
  %v797 = vsel %vm795, %v796, %v787
  %v798 = vsel %vm791, %v794, %v797
  %v799 = vsel %vm788, nan, %v798
  %v800 = vand.u32 2147483647, %v138
  %vm801 = vcmp.le.f32.partialorder %v800, 0.7853982
  %vm802 = vcmp.lt.s32.totalorder %v138, 0
  %v803 = vand.u32 %v138, 2139095040
  %v804 = vshrl.u32 %v803, 23
  %v805 = vsub.s32 %v804, 127
  %v806 = vand.u32 2147483647, %v138
  %v807 = vand.u32 %v806, 8388607
  %v808 = vor.u32 %v807, 8388608
  %v809 = vsub.s32 0, %v808
  %v810 = vadd.s32 %v805, 1
  %vm811 = vcmp.gt.s32.totalorder %v810, 0
  %v812 = vsel %vm811, %v810, 0
  %v813 = vshrl.u32 %v812, 5
  %v814 = vand.u32 %v812, 31
  %v815 = vsub.s32 32, %v814
  %v816 = vshrl.u32 683565275, %v815
  %v817 = vshll.u32 683565275, %v814
  %v818 = vshrl.u32 2475754826, %v815
  %v819 = vor.u32 %v817, %v818
  %v820 = vshll.u32 2475754826, %v814
  %v821 = vshrl.u32 2131351028, %v815
  %v822 = vor.u32 %v820, %v821
  %v823 = vshll.u32 2131351028, %v814
  %v824 = vshrl.u32 2102212464, %v815
  %v825 = vor.u32 %v823, %v824
  %v826 = vshll.u32 2102212464, %v814
  %v827 = vshrl.u32 920167782, %v815
  %v828 = vor.u32 %v826, %v827
  %v829 = vshll.u32 920167782, %v814
  %v830 = vshrl.u32 1326507024, %v815
  %v831 = vor.u32 %v829, %v830
  %vm832 = vcmp.lt.s32.totalorder %v813, 1
  %vm833 = vcmp.lt.s32.totalorder %v813, 2
  %vm834 = vcmp.lt.s32.totalorder %v813, 3
  %vm835 = vcmp.lt.s32.totalorder %v813, 4
  %v836 = vsel %vm832, %v816, %v819
  %v837 = vsel %vm835, %v825, 2102212464
  %v838 = vsel %vm834, %v822, %v837
  %v839 = vsel %vm833, %v836, %v838
  %v840 = vsel %vm832, %v819, %v822
  %v841 = vsel %vm835, %v828, 920167782
  %v842 = vsel %vm834, %v825, %v841
  %v843 = vsel %vm833, %v840, %v842
  %v844 = vsel %vm832, %v822, %v825
  %v845 = vsel %vm835, %v831, 1326507024
  %v846 = vsel %vm834, %v828, %v845
  %v847 = vsel %vm833, %v844, %v846
  %v848 = vshll.u32 %v808, 8
  %v849 = vmul.u32.u64.compose %v848, %v847
  %v850 = vextract.low.u32 %v849
  %v851 = vextract.high.u32 %v849
  %v852 = vmul.u32.u64.compose %v848, %v843
  %v853 = vextract.low.u32 %v852
  %v854 = vextract.high.u32 %v852
  %v855 = vmul.u32 %v848, %v839
  %v856 = vadd.s32 %v851, %v853
  %vm857 = vc.u32 %v851, %v853
  %v858 = vadd.s32 %v854, 1
  %v859 = vsel %vm857, %v858, %v854
  %v860 = vadd.s32 %v855, %v859
  %v861 = vadd.s32 %v860, 536870912
  %v862 = vshrl.u32 %v861, 30
  %v863 = vshll.u32 %v862, 30
  %v864 = vsub.s32 %v860, %v863
  %vm865 = vcmp.lt.s32.totalorder %v864, 0
  %v866 = vsub.s32 0, %v864
  %v867 = vsel %vm865, %v866, %v864
  %v868 = vclz %v867
  %v869 = vsub.s32 %v868, 2
  %vm870 = vcmp.gt.s32.totalorder 0, %v869
  %v871 = vsel %vm870, 0, %v869
  %v872 = vsub.s32 32, %v871
  %v873 = vshll.u32 %v864, %v871
  %v874 = vshrl.u32 %v856, %v872
  %v875 = vor.u32 %v873, %v874
  %v876 = vsub.s32 4294967266, %v871
  %v877 = vadd.s32 %v876, 127
  %v878 = vshll.u32 %v877, 23
  %v879 = vor.u32 4788187, %v878
  %v880 = vand.u32 2147483647, %v879
  %v882 = vcvt.s32.f32 %v875
  %v883 = vmul.f32 %v882, %v880
  %v884 = vxor.u32 %v883, 2147483648
  %v885 = vsel %vm802, %v884, %v883
  %v886 = vsub.s32 4, %v862
  %v887 = vsel %vm802, %v886, %v862
  %v888 = vsel %vm801, %v138, %v885
  %v889 = vsel %vm801, 0, %v887
  %v890 = vcosq.f32.pop %v888
  %v891 = vsinq.f32.pop %v888
  %vm892 = vweird.f32 %v138
  %v893 = vadd.s32 %v889, 3
  %v894 = vand.u32 %v893, 3
  %vm895 = vcmp.lt.s32.totalorder %v894, 2
  %vm896 = vcmp.eq.s32.totalorder %v894, 0
  %v897 = vxor.u32 %v891, 2147483648
  %v898 = vsel %vm896, %v890, %v897
  %vm899 = vcmp.eq.s32.totalorder %v894, 2
  %v900 = vxor.u32 %v890, 2147483648
  %v901 = vsel %vm899, %v900, %v891
  %v902 = vsel %vm895, %v898, %v901
  %v903 = vsel %vm892, nan, %v902
  %v904 = vand.u32 2147483647, %v141
  %vm905 = vcmp.le.f32.partialorder %v904, 0.7853982
  %vm906 = vcmp.lt.s32.totalorder %v141, 0
  %v907 = vand.u32 %v141, 2139095040
  %v908 = vshrl.u32 %v907, 23
  %v909 = vsub.s32 %v908, 127
  %v910 = vand.u32 2147483647, %v141
  %v911 = vand.u32 %v910, 8388607
  %v912 = vor.u32 %v911, 8388608
  %v913 = vsub.s32 0, %v912
  %v914 = vadd.s32 %v909, 1
  %vm915 = vcmp.gt.s32.totalorder %v914, 0
  %v916 = vsel %vm915, %v914, 0
  %v917 = vshrl.u32 %v916, 5
  %v918 = vand.u32 %v916, 31
  %v919 = vsub.s32 32, %v918
  %v920 = vshrl.u32 683565275, %v919
  %v921 = vshll.u32 683565275, %v918
  %v922 = vshrl.u32 2475754826, %v919
  %v923 = vor.u32 %v921, %v922
  %v924 = vshll.u32 2475754826, %v918
  %v925 = vshrl.u32 2131351028, %v919
  %v926 = vor.u32 %v924, %v925
  %v927 = vshll.u32 2131351028, %v918
  %v928 = vshrl.u32 2102212464, %v919
  %v929 = vor.u32 %v927, %v928
  %v930 = vshll.u32 2102212464, %v918
  %v931 = vshrl.u32 920167782, %v919
  %v932 = vor.u32 %v930, %v931
  %v933 = vshll.u32 920167782, %v918
  %v934 = vshrl.u32 1326507024, %v919
  %v935 = vor.u32 %v933, %v934
  %vm936 = vcmp.lt.s32.totalorder %v917, 1
  %vm937 = vcmp.lt.s32.totalorder %v917, 2
  %vm938 = vcmp.lt.s32.totalorder %v917, 3
  %vm939 = vcmp.lt.s32.totalorder %v917, 4
  %v940 = vsel %vm936, %v920, %v923
  %v941 = vsel %vm939, %v929, 2102212464
  %v942 = vsel %vm938, %v926, %v941
  %v943 = vsel %vm937, %v940, %v942
  %v944 = vsel %vm936, %v923, %v926
  %v945 = vsel %vm939, %v932, 920167782
  %v946 = vsel %vm938, %v929, %v945
  %v947 = vsel %vm937, %v944, %v946
  %v948 = vsel %vm936, %v926, %v929
  %v949 = vsel %vm939, %v935, 1326507024
  %v950 = vsel %vm938, %v932, %v949
  %v951 = vsel %vm937, %v948, %v950
  %v952 = vshll.u32 %v912, 8
  %v953 = vmul.u32.u64.compose %v952, %v951
  %v954 = vextract.low.u32 %v953
  %v955 = vextract.high.u32 %v953
  %v956 = vmul.u32.u64.compose %v952, %v947
  %v957 = vextract.low.u32 %v956
  %v958 = vextract.high.u32 %v956
  %v959 = vmul.u32 %v952, %v943
  %v960 = vadd.s32 %v955, %v957
  %vm961 = vc.u32 %v955, %v957
  %v962 = vadd.s32 %v958, 1
  %v963 = vsel %vm961, %v962, %v958
  %v964 = vadd.s32 %v959, %v963
  %v965 = vadd.s32 %v964, 536870912
  %v966 = vshrl.u32 %v965, 30
  %v967 = vshll.u32 %v966, 30
  %v968 = vsub.s32 %v964, %v967
  %vm969 = vcmp.lt.s32.totalorder %v968, 0
  %v970 = vsub.s32 0, %v968
  %v971 = vsel %vm969, %v970, %v968
  %v972 = vclz %v971
  %v973 = vsub.s32 %v972, 2
  %vm974 = vcmp.gt.s32.totalorder 0, %v973
  %v975 = vsel %vm974, 0, %v973
  %v976 = vsub.s32 32, %v975
  %v977 = vshll.u32 %v968, %v975
  %v978 = vshrl.u32 %v960, %v976
  %v979 = vor.u32 %v977, %v978
  %v980 = vsub.s32 4294967266, %v975
  %v981 = vadd.s32 %v980, 127
  %v982 = vshll.u32 %v981, 23
  %v983 = vor.u32 4788187, %v982
  %v984 = vand.u32 2147483647, %v983
  %v986 = vcvt.s32.f32 %v979
  %v987 = vmul.f32 %v986, %v984
  %v988 = vxor.u32 %v987, 2147483648
  %v989 = vsel %vm906, %v988, %v987
  %v990 = vsub.s32 4, %v966
  %v991 = vsel %vm906, %v990, %v966
  %v992 = vsel %vm905, %v141, %v989
  %v993 = vsel %vm905, 0, %v991
  %v994 = vcosq.f32.pop %v992
  %v995 = vsinq.f32.pop %v992
  %vm996 = vweird.f32 %v141
  %v997 = vadd.s32 %v993, 3
  %v998 = vand.u32 %v997, 3
  %vm999 = vcmp.lt.s32.totalorder %v998, 2
  %vm1000 = vcmp.eq.s32.totalorder %v998, 0
  %v1001 = vxor.u32 %v995, 2147483648
  %v1002 = vsel %vm1000, %v994, %v1001
  %vm1003 = vcmp.eq.s32.totalorder %v998, 2
  %v1004 = vxor.u32 %v994, 2147483648
  %v1005 = vsel %vm1003, %v1004, %v995
  %v1006 = vsel %vm999, %v1002, %v1005
  %v1007 = vsel %vm996, nan, %v1006
  %v1008 = vand.u32 2147483647, %v146
  %vm1009 = vcmp.le.f32.partialorder %v1008, 0.7853982
  %vm1010 = vcmp.lt.s32.totalorder %v146, 0
  %v1011 = vand.u32 %v146, 2139095040
  %v1012 = vshrl.u32 %v1011, 23
  %v1013 = vsub.s32 %v1012, 127
  %v1014 = vand.u32 2147483647, %v146
  %v1015 = vand.u32 %v1014, 8388607
  %v1016 = vor.u32 %v1015, 8388608
  %v1017 = vsub.s32 0, %v1016
  %v1018 = vadd.s32 %v1013, 1
  %vm1019 = vcmp.gt.s32.totalorder %v1018, 0
  %v1020 = vsel %vm1019, %v1018, 0
  %v1021 = vshrl.u32 %v1020, 5
  %v1022 = vand.u32 %v1020, 31
  %v1023 = vsub.s32 32, %v1022
  %v1024 = vshrl.u32 683565275, %v1023
  %v1025 = vshll.u32 683565275, %v1022
  %v1026 = vshrl.u32 2475754826, %v1023
  %v1027 = vor.u32 %v1025, %v1026
  %v1028 = vshll.u32 2475754826, %v1022
  %v1029 = vshrl.u32 2131351028, %v1023
  %v1030 = vor.u32 %v1028, %v1029
  %v1031 = vshll.u32 2131351028, %v1022
  %v1032 = vshrl.u32 2102212464, %v1023
  %v1033 = vor.u32 %v1031, %v1032
  %v1034 = vshll.u32 2102212464, %v1022
  %v1035 = vshrl.u32 920167782, %v1023
  %v1036 = vor.u32 %v1034, %v1035
  %v1037 = vshll.u32 920167782, %v1022
  %v1038 = vshrl.u32 1326507024, %v1023
  %v1039 = vor.u32 %v1037, %v1038
  %vm1040 = vcmp.lt.s32.totalorder %v1021, 1
  %vm1041 = vcmp.lt.s32.totalorder %v1021, 2
  %vm1042 = vcmp.lt.s32.totalorder %v1021, 3
  %vm1043 = vcmp.lt.s32.totalorder %v1021, 4
  %v1044 = vsel %vm1040, %v1024, %v1027
  %v1045 = vsel %vm1043, %v1033, 2102212464
  %v1046 = vsel %vm1042, %v1030, %v1045
  %v1047 = vsel %vm1041, %v1044, %v1046
  %v1048 = vsel %vm1040, %v1027, %v1030
  %v1049 = vsel %vm1043, %v1036, 920167782
  %v1050 = vsel %vm1042, %v1033, %v1049
  %v1051 = vsel %vm1041, %v1048, %v1050
  %v1052 = vsel %vm1040, %v1030, %v1033
  %v1053 = vsel %vm1043, %v1039, 1326507024
  %v1054 = vsel %vm1042, %v1036, %v1053
  %v1055 = vsel %vm1041, %v1052, %v1054
  %v1056 = vshll.u32 %v1016, 8
  %v1057 = vmul.u32.u64.compose %v1056, %v1055
  %v1058 = vextract.low.u32 %v1057
  %v1059 = vextract.high.u32 %v1057
  %v1060 = vmul.u32.u64.compose %v1056, %v1051
  %v1061 = vextract.low.u32 %v1060
  %v1062 = vextract.high.u32 %v1060
  %v1063 = vmul.u32 %v1056, %v1047
  %v1064 = vadd.s32 %v1059, %v1061
  %vm1065 = vc.u32 %v1059, %v1061
  %v1066 = vadd.s32 %v1062, 1
  %v1067 = vsel %vm1065, %v1066, %v1062
  %v1068 = vadd.s32 %v1063, %v1067
  %v1069 = vadd.s32 %v1068, 536870912
  %v1070 = vshrl.u32 %v1069, 30
  %v1071 = vshll.u32 %v1070, 30
  %v1072 = vsub.s32 %v1068, %v1071
  %vm1073 = vcmp.lt.s32.totalorder %v1072, 0
  %v1074 = vsub.s32 0, %v1072
  %v1075 = vsel %vm1073, %v1074, %v1072
  %v1076 = vclz %v1075
  %v1077 = vsub.s32 %v1076, 2
  %vm1078 = vcmp.gt.s32.totalorder 0, %v1077
  %v1079 = vsel %vm1078, 0, %v1077
  %v1080 = vsub.s32 32, %v1079
  %v1081 = vshll.u32 %v1072, %v1079
  %v1082 = vshrl.u32 %v1064, %v1080
  %v1083 = vor.u32 %v1081, %v1082
  %v1084 = vsub.s32 4294967266, %v1079
  %v1085 = vadd.s32 %v1084, 127
  %v1086 = vshll.u32 %v1085, 23
  %v1087 = vor.u32 4788187, %v1086
  %v1088 = vand.u32 2147483647, %v1087
  %v1090 = vcvt.s32.f32 %v1083
  %v1091 = vmul.f32 %v1090, %v1088
  %v1092 = vxor.u32 %v1091, 2147483648
  %v1093 = vsel %vm1010, %v1092, %v1091
  %v1094 = vsub.s32 4, %v1070
  %v1095 = vsel %vm1010, %v1094, %v1070
  %v1096 = vsel %vm1009, %v146, %v1093
  %v1097 = vsel %vm1009, 0, %v1095
  %v1098 = vcosq.f32.pop %v1096
  %v1099 = vsinq.f32.pop %v1096
  %vm1100 = vweird.f32 %v146
  %v1101 = vadd.s32 %v1097, 3
  %v1102 = vand.u32 %v1101, 3
  %vm1103 = vcmp.lt.s32.totalorder %v1102, 2
  %vm1104 = vcmp.eq.s32.totalorder %v1102, 0
  %v1105 = vxor.u32 %v1099, 2147483648
  %v1106 = vsel %vm1104, %v1098, %v1105
  %vm1107 = vcmp.eq.s32.totalorder %v1102, 2
  %v1108 = vxor.u32 %v1098, 2147483648
  %v1109 = vsel %vm1107, %v1108, %v1099
  %v1110 = vsel %vm1103, %v1106, %v1109
  %v1111 = vsel %vm1100, nan, %v1110
  %v1112 = vand.u32 2147483647, %v149
  %vm1113 = vcmp.le.f32.partialorder %v1112, 0.7853982
  %vm1114 = vcmp.lt.s32.totalorder %v149, 0
  %v1115 = vand.u32 %v149, 2139095040
  %v1116 = vshrl.u32 %v1115, 23
  %v1117 = vsub.s32 %v1116, 127
  %v1118 = vand.u32 2147483647, %v149
  %v1119 = vand.u32 %v1118, 8388607
  %v1120 = vor.u32 %v1119, 8388608
  %v1121 = vsub.s32 0, %v1120
  %v1122 = vadd.s32 %v1117, 1
  %vm1123 = vcmp.gt.s32.totalorder %v1122, 0
  %v1124 = vsel %vm1123, %v1122, 0
  %v1125 = vshrl.u32 %v1124, 5
  %v1126 = vand.u32 %v1124, 31
  %v1127 = vsub.s32 32, %v1126
  %v1128 = vshrl.u32 683565275, %v1127
  %v1129 = vshll.u32 683565275, %v1126
  %v1130 = vshrl.u32 2475754826, %v1127
  %v1131 = vor.u32 %v1129, %v1130
  %v1132 = vshll.u32 2475754826, %v1126
  %v1133 = vshrl.u32 2131351028, %v1127
  %v1134 = vor.u32 %v1132, %v1133
  %v1135 = vshll.u32 2131351028, %v1126
  %v1136 = vshrl.u32 2102212464, %v1127
  %v1137 = vor.u32 %v1135, %v1136
  %v1138 = vshll.u32 2102212464, %v1126
  %v1139 = vshrl.u32 920167782, %v1127
  %v1140 = vor.u32 %v1138, %v1139
  %v1141 = vshll.u32 920167782, %v1126
  %v1142 = vshrl.u32 1326507024, %v1127
  %v1143 = vor.u32 %v1141, %v1142
  %vm1144 = vcmp.lt.s32.totalorder %v1125, 1
  %vm1145 = vcmp.lt.s32.totalorder %v1125, 2
  %vm1146 = vcmp.lt.s32.totalorder %v1125, 3
  %vm1147 = vcmp.lt.s32.totalorder %v1125, 4
  %v1148 = vsel %vm1144, %v1128, %v1131
  %v1149 = vsel %vm1147, %v1137, 2102212464
  %v1150 = vsel %vm1146, %v1134, %v1149
  %v1151 = vsel %vm1145, %v1148, %v1150
  %v1152 = vsel %vm1144, %v1131, %v1134
  %v1153 = vsel %vm1147, %v1140, 920167782
  %v1154 = vsel %vm1146, %v1137, %v1153
  %v1155 = vsel %vm1145, %v1152, %v1154
  %v1156 = vsel %vm1144, %v1134, %v1137
  %v1157 = vsel %vm1147, %v1143, 1326507024
  %v1158 = vsel %vm1146, %v1140, %v1157
  %v1159 = vsel %vm1145, %v1156, %v1158
  %v1160 = vshll.u32 %v1120, 8
  %v1161 = vmul.u32.u64.compose %v1160, %v1159
  %v1162 = vextract.low.u32 %v1161
  %v1163 = vextract.high.u32 %v1161
  %v1164 = vmul.u32.u64.compose %v1160, %v1155
  %v1165 = vextract.low.u32 %v1164
  %v1166 = vextract.high.u32 %v1164
  %v1167 = vmul.u32 %v1160, %v1151
  %v1168 = vadd.s32 %v1163, %v1165
  %vm1169 = vc.u32 %v1163, %v1165
  %v1170 = vadd.s32 %v1166, 1
  %v1171 = vsel %vm1169, %v1170, %v1166
  %v1172 = vadd.s32 %v1167, %v1171
  %v1173 = vadd.s32 %v1172, 536870912
  %v1174 = vshrl.u32 %v1173, 30
  %v1175 = vshll.u32 %v1174, 30
  %v1176 = vsub.s32 %v1172, %v1175
  %vm1177 = vcmp.lt.s32.totalorder %v1176, 0
  %v1178 = vsub.s32 0, %v1176
  %v1179 = vsel %vm1177, %v1178, %v1176
  %v1180 = vclz %v1179
  %v1181 = vsub.s32 %v1180, 2
  %vm1182 = vcmp.gt.s32.totalorder 0, %v1181
  %v1183 = vsel %vm1182, 0, %v1181
  %v1184 = vsub.s32 32, %v1183
  %v1185 = vshll.u32 %v1176, %v1183
  %v1186 = vshrl.u32 %v1168, %v1184
  %v1187 = vor.u32 %v1185, %v1186
  %v1188 = vsub.s32 4294967266, %v1183
  %v1189 = vadd.s32 %v1188, 127
  %v1190 = vshll.u32 %v1189, 23
  %v1191 = vor.u32 4788187, %v1190
  %v1192 = vand.u32 2147483647, %v1191
  %v1194 = vcvt.s32.f32 %v1187
  %v1195 = vmul.f32 %v1194, %v1192
  %v1196 = vxor.u32 %v1195, 2147483648
  %v1197 = vsel %vm1114, %v1196, %v1195
  %v1198 = vsub.s32 4, %v1174
  %v1199 = vsel %vm1114, %v1198, %v1174
  %v1200 = vsel %vm1113, %v149, %v1197
  %v1201 = vsel %vm1113, 0, %v1199
  %v1202 = vcosq.f32.pop %v1200
  %v1203 = vsinq.f32.pop %v1200
  %vm1204 = vweird.f32 %v149
  %v1205 = vadd.s32 %v1201, 3
  %v1206 = vand.u32 %v1205, 3
  %vm1207 = vcmp.lt.s32.totalorder %v1206, 2
  %vm1208 = vcmp.eq.s32.totalorder %v1206, 0
  %v1209 = vxor.u32 %v1203, 2147483648
  %v1210 = vsel %vm1208, %v1202, %v1209
  %vm1211 = vcmp.eq.s32.totalorder %v1206, 2
  %v1212 = vxor.u32 %v1202, 2147483648
  %v1213 = vsel %vm1211, %v1212, %v1203
  %v1214 = vsel %vm1207, %v1210, %v1213
  %v1215 = vsel %vm1204, nan, %v1214
  %v1216 = vand.u32 2147483647, %v154
  %vm1217 = vcmp.le.f32.partialorder %v1216, 0.7853982
  %vm1218 = vcmp.lt.s32.totalorder %v154, 0
  %v1219 = vand.u32 %v154, 2139095040
  %v1220 = vshrl.u32 %v1219, 23
  %v1221 = vsub.s32 %v1220, 127
  %v1222 = vand.u32 2147483647, %v154
  %v1223 = vand.u32 %v1222, 8388607
  %v1224 = vor.u32 %v1223, 8388608
  %v1225 = vsub.s32 0, %v1224
  %v1226 = vadd.s32 %v1221, 1
  %vm1227 = vcmp.gt.s32.totalorder %v1226, 0
  %v1228 = vsel %vm1227, %v1226, 0
  %v1229 = vshrl.u32 %v1228, 5
  %v1230 = vand.u32 %v1228, 31
  %v1231 = vsub.s32 32, %v1230
  %v1232 = vshrl.u32 683565275, %v1231
  %v1233 = vshll.u32 683565275, %v1230
  %v1234 = vshrl.u32 2475754826, %v1231
  %v1235 = vor.u32 %v1233, %v1234
  %v1236 = vshll.u32 2475754826, %v1230
  %v1237 = vshrl.u32 2131351028, %v1231
  %v1238 = vor.u32 %v1236, %v1237
  %v1239 = vshll.u32 2131351028, %v1230
  %v1240 = vshrl.u32 2102212464, %v1231
  %v1241 = vor.u32 %v1239, %v1240
  %v1242 = vshll.u32 2102212464, %v1230
  %v1243 = vshrl.u32 920167782, %v1231
  %v1244 = vor.u32 %v1242, %v1243
  %v1245 = vshll.u32 920167782, %v1230
  %v1246 = vshrl.u32 1326507024, %v1231
  %v1247 = vor.u32 %v1245, %v1246
  %vm1248 = vcmp.lt.s32.totalorder %v1229, 1
  %vm1249 = vcmp.lt.s32.totalorder %v1229, 2
  %vm1250 = vcmp.lt.s32.totalorder %v1229, 3
  %vm1251 = vcmp.lt.s32.totalorder %v1229, 4
  %v1252 = vsel %vm1248, %v1232, %v1235
  %v1253 = vsel %vm1251, %v1241, 2102212464
  %v1254 = vsel %vm1250, %v1238, %v1253
  %v1255 = vsel %vm1249, %v1252, %v1254
  %v1256 = vsel %vm1248, %v1235, %v1238
  %v1257 = vsel %vm1251, %v1244, 920167782
  %v1258 = vsel %vm1250, %v1241, %v1257
  %v1259 = vsel %vm1249, %v1256, %v1258
  %v1260 = vsel %vm1248, %v1238, %v1241
  %v1261 = vsel %vm1251, %v1247, 1326507024
  %v1262 = vsel %vm1250, %v1244, %v1261
  %v1263 = vsel %vm1249, %v1260, %v1262
  %v1264 = vshll.u32 %v1224, 8
  %v1265 = vmul.u32.u64.compose %v1264, %v1263
  %v1266 = vextract.low.u32 %v1265
  %v1267 = vextract.high.u32 %v1265
  %v1268 = vmul.u32.u64.compose %v1264, %v1259
  %v1269 = vextract.low.u32 %v1268
  %v1270 = vextract.high.u32 %v1268
  %v1271 = vmul.u32 %v1264, %v1255
  %v1272 = vadd.s32 %v1267, %v1269
  %vm1273 = vc.u32 %v1267, %v1269
  %v1274 = vadd.s32 %v1270, 1
  %v1275 = vsel %vm1273, %v1274, %v1270
  %v1276 = vadd.s32 %v1271, %v1275
  %v1277 = vadd.s32 %v1276, 536870912
  %v1278 = vshrl.u32 %v1277, 30
  %v1279 = vshll.u32 %v1278, 30
  %v1280 = vsub.s32 %v1276, %v1279
  %vm1281 = vcmp.lt.s32.totalorder %v1280, 0
  %v1282 = vsub.s32 0, %v1280
  %v1283 = vsel %vm1281, %v1282, %v1280
  %v1284 = vclz %v1283
  %v1285 = vsub.s32 %v1284, 2
  %vm1286 = vcmp.gt.s32.totalorder 0, %v1285
  %v1287 = vsel %vm1286, 0, %v1285
  %v1288 = vsub.s32 32, %v1287
  %v1289 = vshll.u32 %v1280, %v1287
  %v1290 = vshrl.u32 %v1272, %v1288
  %v1291 = vor.u32 %v1289, %v1290
  %v1292 = vsub.s32 4294967266, %v1287
  %v1293 = vadd.s32 %v1292, 127
  %v1294 = vshll.u32 %v1293, 23
  %v1295 = vor.u32 4788187, %v1294
  %v1296 = vand.u32 2147483647, %v1295
  %v1298 = vcvt.s32.f32 %v1291
  %v1299 = vmul.f32 %v1298, %v1296
  %v1300 = vxor.u32 %v1299, 2147483648
  %v1301 = vsel %vm1218, %v1300, %v1299
  %v1302 = vsub.s32 4, %v1278
  %v1303 = vsel %vm1218, %v1302, %v1278
  %v1304 = vsel %vm1217, %v154, %v1301
  %v1305 = vsel %vm1217, 0, %v1303
  %v1306 = vcosq.f32.pop %v1304
  %v1307 = vsinq.f32.pop %v1304
  %vm1308 = vweird.f32 %v154
  %v1309 = vadd.s32 %v1305, 3
  %v1310 = vand.u32 %v1309, 3
  %vm1311 = vcmp.lt.s32.totalorder %v1310, 2
  %vm1312 = vcmp.eq.s32.totalorder %v1310, 0
  %v1313 = vxor.u32 %v1307, 2147483648
  %v1314 = vsel %vm1312, %v1306, %v1313
  %vm1315 = vcmp.eq.s32.totalorder %v1310, 2
  %v1316 = vxor.u32 %v1306, 2147483648
  %v1317 = vsel %vm1315, %v1316, %v1307
  %v1318 = vsel %vm1311, %v1314, %v1317
  %v1319 = vsel %vm1308, nan, %v1318
  %v1320 = vand.u32 2147483647, %v157
  %vm1321 = vcmp.le.f32.partialorder %v1320, 0.7853982
  %vm1322 = vcmp.lt.s32.totalorder %v157, 0
  %v1323 = vand.u32 %v157, 2139095040
  %v1324 = vshrl.u32 %v1323, 23
  %v1325 = vsub.s32 %v1324, 127
  %v1326 = vand.u32 2147483647, %v157
  %v1327 = vand.u32 %v1326, 8388607
  %v1328 = vor.u32 %v1327, 8388608
  %v1329 = vsub.s32 0, %v1328
  %v1330 = vadd.s32 %v1325, 1
  %vm1331 = vcmp.gt.s32.totalorder %v1330, 0
  %v1332 = vsel %vm1331, %v1330, 0
  %v1333 = vshrl.u32 %v1332, 5
  %v1334 = vand.u32 %v1332, 31
  %v1335 = vsub.s32 32, %v1334
  %v1336 = vshrl.u32 683565275, %v1335
  %v1337 = vshll.u32 683565275, %v1334
  %v1338 = vshrl.u32 2475754826, %v1335
  %v1339 = vor.u32 %v1337, %v1338
  %v1340 = vshll.u32 2475754826, %v1334
  %v1341 = vshrl.u32 2131351028, %v1335
  %v1342 = vor.u32 %v1340, %v1341
  %v1343 = vshll.u32 2131351028, %v1334
  %v1344 = vshrl.u32 2102212464, %v1335
  %v1345 = vor.u32 %v1343, %v1344
  %v1346 = vshll.u32 2102212464, %v1334
  %v1347 = vshrl.u32 920167782, %v1335
  %v1348 = vor.u32 %v1346, %v1347
  %v1349 = vshll.u32 920167782, %v1334
  %v1350 = vshrl.u32 1326507024, %v1335
  %v1351 = vor.u32 %v1349, %v1350
  %vm1352 = vcmp.lt.s32.totalorder %v1333, 1
  %vm1353 = vcmp.lt.s32.totalorder %v1333, 2
  %vm1354 = vcmp.lt.s32.totalorder %v1333, 3
  %vm1355 = vcmp.lt.s32.totalorder %v1333, 4
  %v1356 = vsel %vm1352, %v1336, %v1339
  %v1357 = vsel %vm1355, %v1345, 2102212464
  %v1358 = vsel %vm1354, %v1342, %v1357
  %v1359 = vsel %vm1353, %v1356, %v1358
  %v1360 = vsel %vm1352, %v1339, %v1342
  %v1361 = vsel %vm1355, %v1348, 920167782
  %v1362 = vsel %vm1354, %v1345, %v1361
  %v1363 = vsel %vm1353, %v1360, %v1362
  %v1364 = vsel %vm1352, %v1342, %v1345
  %v1365 = vsel %vm1355, %v1351, 1326507024
  %v1366 = vsel %vm1354, %v1348, %v1365
  %v1367 = vsel %vm1353, %v1364, %v1366
  %v1368 = vshll.u32 %v1328, 8
  %v1369 = vmul.u32.u64.compose %v1368, %v1367
  %v1370 = vextract.low.u32 %v1369
  %v1371 = vextract.high.u32 %v1369
  %v1372 = vmul.u32.u64.compose %v1368, %v1363
  %v1373 = vextract.low.u32 %v1372
  %v1374 = vextract.high.u32 %v1372
  %v1375 = vmul.u32 %v1368, %v1359
  %v1376 = vadd.s32 %v1371, %v1373
  %vm1377 = vc.u32 %v1371, %v1373
  %v1378 = vadd.s32 %v1374, 1
  %v1379 = vsel %vm1377, %v1378, %v1374
  %v1380 = vadd.s32 %v1375, %v1379
  %v1381 = vadd.s32 %v1380, 536870912
  %v1382 = vshrl.u32 %v1381, 30
  %v1383 = vshll.u32 %v1382, 30
  %v1384 = vsub.s32 %v1380, %v1383
  %vm1385 = vcmp.lt.s32.totalorder %v1384, 0
  %v1386 = vsub.s32 0, %v1384
  %v1387 = vsel %vm1385, %v1386, %v1384
  %v1388 = vclz %v1387
  %v1389 = vsub.s32 %v1388, 2
  %vm1390 = vcmp.gt.s32.totalorder 0, %v1389
  %v1391 = vsel %vm1390, 0, %v1389
  %v1392 = vsub.s32 32, %v1391
  %v1393 = vshll.u32 %v1384, %v1391
  %v1394 = vshrl.u32 %v1376, %v1392
  %v1395 = vor.u32 %v1393, %v1394
  %v1396 = vsub.s32 4294967266, %v1391
  %v1397 = vadd.s32 %v1396, 127
  %v1398 = vshll.u32 %v1397, 23
  %v1399 = vor.u32 4788187, %v1398
  %v1400 = vand.u32 2147483647, %v1399
  %v1402 = vcvt.s32.f32 %v1395
  %v1403 = vmul.f32 %v1402, %v1400
  %v1404 = vxor.u32 %v1403, 2147483648
  %v1405 = vsel %vm1322, %v1404, %v1403
  %v1406 = vsub.s32 4, %v1382
  %v1407 = vsel %vm1322, %v1406, %v1382
  %v1408 = vsel %vm1321, %v157, %v1405
  %v1409 = vsel %vm1321, 0, %v1407
  %v1410 = vcosq.f32.pop %v1408
  %v1411 = vsinq.f32.pop %v1408
  %vm1412 = vweird.f32 %v157
  %v1413 = vadd.s32 %v1409, 3
  %v1414 = vand.u32 %v1413, 3
  %vm1415 = vcmp.lt.s32.totalorder %v1414, 2
  %vm1416 = vcmp.eq.s32.totalorder %v1414, 0
  %v1417 = vxor.u32 %v1411, 2147483648
  %v1418 = vsel %vm1416, %v1410, %v1417
  %vm1419 = vcmp.eq.s32.totalorder %v1414, 2
  %v1420 = vxor.u32 %v1410, 2147483648
  %v1421 = vsel %vm1419, %v1420, %v1411
  %v1422 = vsel %vm1415, %v1418, %v1421
  %v1423 = vsel %vm1412, nan, %v1422
  %v1424 = vand.u32 2147483647, %v162
  %vm1425 = vcmp.le.f32.partialorder %v1424, 0.7853982
  %vm1426 = vcmp.lt.s32.totalorder %v162, 0
  %v1427 = vand.u32 %v162, 2139095040
  %v1428 = vshrl.u32 %v1427, 23
  %v1429 = vsub.s32 %v1428, 127
  %v1430 = vand.u32 2147483647, %v162
  %v1431 = vand.u32 %v1430, 8388607
  %v1432 = vor.u32 %v1431, 8388608
  %v1433 = vsub.s32 0, %v1432
  %v1434 = vadd.s32 %v1429, 1
  %vm1435 = vcmp.gt.s32.totalorder %v1434, 0
  %v1436 = vsel %vm1435, %v1434, 0
  %v1437 = vshrl.u32 %v1436, 5
  %v1438 = vand.u32 %v1436, 31
  %v1439 = vsub.s32 32, %v1438
  %v1440 = vshrl.u32 683565275, %v1439
  %v1441 = vshll.u32 683565275, %v1438
  %v1442 = vshrl.u32 2475754826, %v1439
  %v1443 = vor.u32 %v1441, %v1442
  %v1444 = vshll.u32 2475754826, %v1438
  %v1445 = vshrl.u32 2131351028, %v1439
  %v1446 = vor.u32 %v1444, %v1445
  %v1447 = vshll.u32 2131351028, %v1438
  %v1448 = vshrl.u32 2102212464, %v1439
  %v1449 = vor.u32 %v1447, %v1448
  %v1450 = vshll.u32 2102212464, %v1438
  %v1451 = vshrl.u32 920167782, %v1439
  %v1452 = vor.u32 %v1450, %v1451
  %v1453 = vshll.u32 920167782, %v1438
  %v1454 = vshrl.u32 1326507024, %v1439
  %v1455 = vor.u32 %v1453, %v1454
  %vm1456 = vcmp.lt.s32.totalorder %v1437, 1
  %vm1457 = vcmp.lt.s32.totalorder %v1437, 2
  %vm1458 = vcmp.lt.s32.totalorder %v1437, 3
  %vm1459 = vcmp.lt.s32.totalorder %v1437, 4
  %v1460 = vsel %vm1456, %v1440, %v1443
  %v1461 = vsel %vm1459, %v1449, 2102212464
  %v1462 = vsel %vm1458, %v1446, %v1461
  %v1463 = vsel %vm1457, %v1460, %v1462
  %v1464 = vsel %vm1456, %v1443, %v1446
  %v1465 = vsel %vm1459, %v1452, 920167782
  %v1466 = vsel %vm1458, %v1449, %v1465
  %v1467 = vsel %vm1457, %v1464, %v1466
  %v1468 = vsel %vm1456, %v1446, %v1449
  %v1469 = vsel %vm1459, %v1455, 1326507024
  %v1470 = vsel %vm1458, %v1452, %v1469
  %v1471 = vsel %vm1457, %v1468, %v1470
  %v1472 = vshll.u32 %v1432, 8
  %v1473 = vmul.u32.u64.compose %v1472, %v1471
  %v1474 = vextract.low.u32 %v1473
  %v1475 = vextract.high.u32 %v1473
  %v1476 = vmul.u32.u64.compose %v1472, %v1467
  %v1477 = vextract.low.u32 %v1476
  %v1478 = vextract.high.u32 %v1476
  %v1479 = vmul.u32 %v1472, %v1463
  %v1480 = vadd.s32 %v1475, %v1477
  %vm1481 = vc.u32 %v1475, %v1477
  %v1482 = vadd.s32 %v1478, 1
  %v1483 = vsel %vm1481, %v1482, %v1478
  %v1484 = vadd.s32 %v1479, %v1483
  %v1485 = vadd.s32 %v1484, 536870912
  %v1486 = vshrl.u32 %v1485, 30
  %v1487 = vshll.u32 %v1486, 30
  %v1488 = vsub.s32 %v1484, %v1487
  %vm1489 = vcmp.lt.s32.totalorder %v1488, 0
  %v1490 = vsub.s32 0, %v1488
  %v1491 = vsel %vm1489, %v1490, %v1488
  %v1492 = vclz %v1491
  %v1493 = vsub.s32 %v1492, 2
  %vm1494 = vcmp.gt.s32.totalorder 0, %v1493
  %v1495 = vsel %vm1494, 0, %v1493
  %v1496 = vsub.s32 32, %v1495
  %v1497 = vshll.u32 %v1488, %v1495
  %v1498 = vshrl.u32 %v1480, %v1496
  %v1499 = vor.u32 %v1497, %v1498
  %v1500 = vsub.s32 4294967266, %v1495
  %v1501 = vadd.s32 %v1500, 127
  %v1502 = vshll.u32 %v1501, 23
  %v1503 = vor.u32 4788187, %v1502
  %v1504 = vand.u32 2147483647, %v1503
  %v1506 = vcvt.s32.f32 %v1499
  %v1507 = vmul.f32 %v1506, %v1504
  %v1508 = vxor.u32 %v1507, 2147483648
  %v1509 = vsel %vm1426, %v1508, %v1507
  %v1510 = vsub.s32 4, %v1486
  %v1511 = vsel %vm1426, %v1510, %v1486
  %v1512 = vsel %vm1425, %v162, %v1509
  %v1513 = vsel %vm1425, 0, %v1511
  %v1514 = vcosq.f32.pop %v1512
  %v1515 = vsinq.f32.pop %v1512
  %vm1516 = vweird.f32 %v162
  %v1517 = vadd.s32 %v1513, 3
  %v1518 = vand.u32 %v1517, 3
  %vm1519 = vcmp.lt.s32.totalorder %v1518, 2
  %vm1520 = vcmp.eq.s32.totalorder %v1518, 0
  %v1521 = vxor.u32 %v1515, 2147483648
  %v1522 = vsel %vm1520, %v1514, %v1521
  %vm1523 = vcmp.eq.s32.totalorder %v1518, 2
  %v1524 = vxor.u32 %v1514, 2147483648
  %v1525 = vsel %vm1523, %v1524, %v1515
  %v1526 = vsel %vm1519, %v1522, %v1525
  %v1527 = vsel %vm1516, nan, %v1526
  %v1528 = vand.u32 2147483647, %v165
  %vm1529 = vcmp.le.f32.partialorder %v1528, 0.7853982
  %vm1530 = vcmp.lt.s32.totalorder %v165, 0
  %v1531 = vand.u32 %v165, 2139095040
  %v1532 = vshrl.u32 %v1531, 23
  %v1533 = vsub.s32 %v1532, 127
  %v1534 = vand.u32 2147483647, %v165
  %v1535 = vand.u32 %v1534, 8388607
  %v1536 = vor.u32 %v1535, 8388608
  %v1537 = vsub.s32 0, %v1536
  %v1538 = vadd.s32 %v1533, 1
  %vm1539 = vcmp.gt.s32.totalorder %v1538, 0
  %v1540 = vsel %vm1539, %v1538, 0
  %v1541 = vshrl.u32 %v1540, 5
  %v1542 = vand.u32 %v1540, 31
  %v1543 = vsub.s32 32, %v1542
  %v1544 = vshrl.u32 683565275, %v1543
  %v1545 = vshll.u32 683565275, %v1542
  %v1546 = vshrl.u32 2475754826, %v1543
  %v1547 = vor.u32 %v1545, %v1546
  %v1548 = vshll.u32 2475754826, %v1542
  %v1549 = vshrl.u32 2131351028, %v1543
  %v1550 = vor.u32 %v1548, %v1549
  %v1551 = vshll.u32 2131351028, %v1542
  %v1552 = vshrl.u32 2102212464, %v1543
  %v1553 = vor.u32 %v1551, %v1552
  %v1554 = vshll.u32 2102212464, %v1542
  %v1555 = vshrl.u32 920167782, %v1543
  %v1556 = vor.u32 %v1554, %v1555
  %v1557 = vshll.u32 920167782, %v1542
  %v1558 = vshrl.u32 1326507024, %v1543
  %v1559 = vor.u32 %v1557, %v1558
  %vm1560 = vcmp.lt.s32.totalorder %v1541, 1
  %vm1561 = vcmp.lt.s32.totalorder %v1541, 2
  %vm1562 = vcmp.lt.s32.totalorder %v1541, 3
  %vm1563 = vcmp.lt.s32.totalorder %v1541, 4
  %v1564 = vsel %vm1560, %v1544, %v1547
  %v1565 = vsel %vm1563, %v1553, 2102212464
  %v1566 = vsel %vm1562, %v1550, %v1565
  %v1567 = vsel %vm1561, %v1564, %v1566
  %v1568 = vsel %vm1560, %v1547, %v1550
  %v1569 = vsel %vm1563, %v1556, 920167782
  %v1570 = vsel %vm1562, %v1553, %v1569
  %v1571 = vsel %vm1561, %v1568, %v1570
  %v1572 = vsel %vm1560, %v1550, %v1553
  %v1573 = vsel %vm1563, %v1559, 1326507024
  %v1574 = vsel %vm1562, %v1556, %v1573
  %v1575 = vsel %vm1561, %v1572, %v1574
  %v1576 = vshll.u32 %v1536, 8
  %v1577 = vmul.u32.u64.compose %v1576, %v1575
  %v1578 = vextract.low.u32 %v1577
  %v1579 = vextract.high.u32 %v1577
  %v1580 = vmul.u32.u64.compose %v1576, %v1571
  %v1581 = vextract.low.u32 %v1580
  %v1582 = vextract.high.u32 %v1580
  %v1583 = vmul.u32 %v1576, %v1567
  %v1584 = vadd.s32 %v1579, %v1581
  %vm1585 = vc.u32 %v1579, %v1581
  %v1586 = vadd.s32 %v1582, 1
  %v1587 = vsel %vm1585, %v1586, %v1582
  %v1588 = vadd.s32 %v1583, %v1587
  %v1589 = vadd.s32 %v1588, 536870912
  %v1590 = vshrl.u32 %v1589, 30
  %v1591 = vshll.u32 %v1590, 30
  %v1592 = vsub.s32 %v1588, %v1591
  %vm1593 = vcmp.lt.s32.totalorder %v1592, 0
  %v1594 = vsub.s32 0, %v1592
  %v1595 = vsel %vm1593, %v1594, %v1592
  %v1596 = vclz %v1595
  %v1597 = vsub.s32 %v1596, 2
  %vm1598 = vcmp.gt.s32.totalorder 0, %v1597
  %v1599 = vsel %vm1598, 0, %v1597
  %v1600 = vsub.s32 32, %v1599
  %v1601 = vshll.u32 %v1592, %v1599
  %v1602 = vshrl.u32 %v1584, %v1600
  %v1603 = vor.u32 %v1601, %v1602
  %v1604 = vsub.s32 4294967266, %v1599
  %v1605 = vadd.s32 %v1604, 127
  %v1606 = vshll.u32 %v1605, 23
  %v1607 = vor.u32 4788187, %v1606
  %v1608 = vand.u32 2147483647, %v1607
  %v1610 = vcvt.s32.f32 %v1603
  %v1611 = vmul.f32 %v1610, %v1608
  %v1612 = vxor.u32 %v1611, 2147483648
  %v1613 = vsel %vm1530, %v1612, %v1611
  %v1614 = vsub.s32 4, %v1590
  %v1615 = vsel %vm1530, %v1614, %v1590
  %v1616 = vsel %vm1529, %v165, %v1613
  %v1617 = vsel %vm1529, 0, %v1615
  %v1618 = vcosq.f32.pop %v1616
  %v1619 = vsinq.f32.pop %v1616
  %vm1620 = vweird.f32 %v165
  %v1621 = vadd.s32 %v1617, 3
  %v1622 = vand.u32 %v1621, 3
  %vm1623 = vcmp.lt.s32.totalorder %v1622, 2
  %vm1624 = vcmp.eq.s32.totalorder %v1622, 0
  %v1625 = vxor.u32 %v1619, 2147483648
  %v1626 = vsel %vm1624, %v1618, %v1625
  %vm1627 = vcmp.eq.s32.totalorder %v1622, 2
  %v1628 = vxor.u32 %v1618, 2147483648
  %v1629 = vsel %vm1627, %v1628, %v1619
  %v1630 = vsel %vm1623, %v1626, %v1629
  %v1631 = vsel %vm1620, nan, %v1630
  %v1632 = vand.u32 2147483647, %v170
  %vm1633 = vcmp.le.f32.partialorder %v1632, 0.7853982
  %vm1634 = vcmp.lt.s32.totalorder %v170, 0
  %v1635 = vand.u32 %v170, 2139095040
  %v1636 = vshrl.u32 %v1635, 23
  %v1637 = vsub.s32 %v1636, 127
  %v1638 = vand.u32 2147483647, %v170
  %v1639 = vand.u32 %v1638, 8388607
  %v1640 = vor.u32 %v1639, 8388608
  %v1641 = vsub.s32 0, %v1640
  %v1642 = vadd.s32 %v1637, 1
  %vm1643 = vcmp.gt.s32.totalorder %v1642, 0
  %v1644 = vsel %vm1643, %v1642, 0
  %v1645 = vshrl.u32 %v1644, 5
  %v1646 = vand.u32 %v1644, 31
  %v1647 = vsub.s32 32, %v1646
  %v1648 = vshrl.u32 683565275, %v1647
  %v1649 = vshll.u32 683565275, %v1646
  %v1650 = vshrl.u32 2475754826, %v1647
  %v1651 = vor.u32 %v1649, %v1650
  %v1652 = vshll.u32 2475754826, %v1646
  %v1653 = vshrl.u32 2131351028, %v1647
  %v1654 = vor.u32 %v1652, %v1653
  %v1655 = vshll.u32 2131351028, %v1646
  %v1656 = vshrl.u32 2102212464, %v1647
  %v1657 = vor.u32 %v1655, %v1656
  %v1658 = vshll.u32 2102212464, %v1646
  %v1659 = vshrl.u32 920167782, %v1647
  %v1660 = vor.u32 %v1658, %v1659
  %v1661 = vshll.u32 920167782, %v1646
  %v1662 = vshrl.u32 1326507024, %v1647
  %v1663 = vor.u32 %v1661, %v1662
  %vm1664 = vcmp.lt.s32.totalorder %v1645, 1
  %vm1665 = vcmp.lt.s32.totalorder %v1645, 2
  %vm1666 = vcmp.lt.s32.totalorder %v1645, 3
  %vm1667 = vcmp.lt.s32.totalorder %v1645, 4
  %v1668 = vsel %vm1664, %v1648, %v1651
  %v1669 = vsel %vm1667, %v1657, 2102212464
  %v1670 = vsel %vm1666, %v1654, %v1669
  %v1671 = vsel %vm1665, %v1668, %v1670
  %v1672 = vsel %vm1664, %v1651, %v1654
  %v1673 = vsel %vm1667, %v1660, 920167782
  %v1674 = vsel %vm1666, %v1657, %v1673
  %v1675 = vsel %vm1665, %v1672, %v1674
  %v1676 = vsel %vm1664, %v1654, %v1657
  %v1677 = vsel %vm1667, %v1663, 1326507024
  %v1678 = vsel %vm1666, %v1660, %v1677
  %v1679 = vsel %vm1665, %v1676, %v1678
  %v1680 = vshll.u32 %v1640, 8
  %v1681 = vmul.u32.u64.compose %v1680, %v1679
  %v1682 = vextract.low.u32 %v1681
  %v1683 = vextract.high.u32 %v1681
  %v1684 = vmul.u32.u64.compose %v1680, %v1675
  %v1685 = vextract.low.u32 %v1684
  %v1686 = vextract.high.u32 %v1684
  %v1687 = vmul.u32 %v1680, %v1671
  %v1688 = vadd.s32 %v1683, %v1685
  %vm1689 = vc.u32 %v1683, %v1685
  %v1690 = vadd.s32 %v1686, 1
  %v1691 = vsel %vm1689, %v1690, %v1686
  %v1692 = vadd.s32 %v1687, %v1691
  %v1693 = vadd.s32 %v1692, 536870912
  %v1694 = vshrl.u32 %v1693, 30
  %v1695 = vshll.u32 %v1694, 30
  %v1696 = vsub.s32 %v1692, %v1695
  %vm1697 = vcmp.lt.s32.totalorder %v1696, 0
  %v1698 = vsub.s32 0, %v1696
  %v1699 = vsel %vm1697, %v1698, %v1696
  %v1700 = vclz %v1699
  %v1701 = vsub.s32 %v1700, 2
  %vm1702 = vcmp.gt.s32.totalorder 0, %v1701
  %v1703 = vsel %vm1702, 0, %v1701
  %v1704 = vsub.s32 32, %v1703
  %v1705 = vshll.u32 %v1696, %v1703
  %v1706 = vshrl.u32 %v1688, %v1704
  %v1707 = vor.u32 %v1705, %v1706
  %v1708 = vsub.s32 4294967266, %v1703
  %v1709 = vadd.s32 %v1708, 127
  %v1710 = vshll.u32 %v1709, 23
  %v1711 = vor.u32 4788187, %v1710
  %v1712 = vand.u32 2147483647, %v1711
  %v1714 = vcvt.s32.f32 %v1707
  %v1715 = vmul.f32 %v1714, %v1712
  %v1716 = vxor.u32 %v1715, 2147483648
  %v1717 = vsel %vm1634, %v1716, %v1715
  %v1718 = vsub.s32 4, %v1694
  %v1719 = vsel %vm1634, %v1718, %v1694
  %v1720 = vsel %vm1633, %v170, %v1717
  %v1721 = vsel %vm1633, 0, %v1719
  %v1722 = vcosq.f32.pop %v1720
  %v1723 = vsinq.f32.pop %v1720
  %vm1724 = vweird.f32 %v170
  %v1725 = vadd.s32 %v1721, 3
  %v1726 = vand.u32 %v1725, 3
  %vm1727 = vcmp.lt.s32.totalorder %v1726, 2
  %vm1728 = vcmp.eq.s32.totalorder %v1726, 0
  %v1729 = vxor.u32 %v1723, 2147483648
  %v1730 = vsel %vm1728, %v1722, %v1729
  %vm1731 = vcmp.eq.s32.totalorder %v1726, 2
  %v1732 = vxor.u32 %v1722, 2147483648
  %v1733 = vsel %vm1731, %v1732, %v1723
  %v1734 = vsel %vm1727, %v1730, %v1733
  %v1735 = vsel %vm1724, nan, %v1734
  %v1736 = vand.u32 2147483647, %v173
  %vm1737 = vcmp.le.f32.partialorder %v1736, 0.7853982
  %vm1738 = vcmp.lt.s32.totalorder %v173, 0
  %v1739 = vand.u32 %v173, 2139095040
  %v1740 = vshrl.u32 %v1739, 23
  %v1741 = vsub.s32 %v1740, 127
  %v1742 = vand.u32 2147483647, %v173
  %v1743 = vand.u32 %v1742, 8388607
  %v1744 = vor.u32 %v1743, 8388608
  %v1745 = vsub.s32 0, %v1744
  %v1746 = vadd.s32 %v1741, 1
  %vm1747 = vcmp.gt.s32.totalorder %v1746, 0
  %v1748 = vsel %vm1747, %v1746, 0
  %v1749 = vshrl.u32 %v1748, 5
  %v1750 = vand.u32 %v1748, 31
  %v1751 = vsub.s32 32, %v1750
  %v1752 = vshrl.u32 683565275, %v1751
  %v1753 = vshll.u32 683565275, %v1750
  %v1754 = vshrl.u32 2475754826, %v1751
  %v1755 = vor.u32 %v1753, %v1754
  %v1756 = vshll.u32 2475754826, %v1750
  %v1757 = vshrl.u32 2131351028, %v1751
  %v1758 = vor.u32 %v1756, %v1757
  %v1759 = vshll.u32 2131351028, %v1750
  %v1760 = vshrl.u32 2102212464, %v1751
  %v1761 = vor.u32 %v1759, %v1760
  %v1762 = vshll.u32 2102212464, %v1750
  %v1763 = vshrl.u32 920167782, %v1751
  %v1764 = vor.u32 %v1762, %v1763
  %v1765 = vshll.u32 920167782, %v1750
  %v1766 = vshrl.u32 1326507024, %v1751
  %v1767 = vor.u32 %v1765, %v1766
  %vm1768 = vcmp.lt.s32.totalorder %v1749, 1
  %vm1769 = vcmp.lt.s32.totalorder %v1749, 2
  %vm1770 = vcmp.lt.s32.totalorder %v1749, 3
  %vm1771 = vcmp.lt.s32.totalorder %v1749, 4
  %v1772 = vsel %vm1768, %v1752, %v1755
  %v1773 = vsel %vm1771, %v1761, 2102212464
  %v1774 = vsel %vm1770, %v1758, %v1773
  %v1775 = vsel %vm1769, %v1772, %v1774
  %v1776 = vsel %vm1768, %v1755, %v1758
  %v1777 = vsel %vm1771, %v1764, 920167782
  %v1778 = vsel %vm1770, %v1761, %v1777
  %v1779 = vsel %vm1769, %v1776, %v1778
  %v1780 = vsel %vm1768, %v1758, %v1761
  %v1781 = vsel %vm1771, %v1767, 1326507024
  %v1782 = vsel %vm1770, %v1764, %v1781
  %v1783 = vsel %vm1769, %v1780, %v1782
  %v1784 = vshll.u32 %v1744, 8
  %v1785 = vmul.u32.u64.compose %v1784, %v1783
  %v1786 = vextract.low.u32 %v1785
  %v1787 = vextract.high.u32 %v1785
  %v1788 = vmul.u32.u64.compose %v1784, %v1779
  %v1789 = vextract.low.u32 %v1788
  %v1790 = vextract.high.u32 %v1788
  %v1791 = vmul.u32 %v1784, %v1775
  %v1792 = vadd.s32 %v1787, %v1789
  %vm1793 = vc.u32 %v1787, %v1789
  %v1794 = vadd.s32 %v1790, 1
  %v1795 = vsel %vm1793, %v1794, %v1790
  %v1796 = vadd.s32 %v1791, %v1795
  %v1797 = vadd.s32 %v1796, 536870912
  %v1798 = vshrl.u32 %v1797, 30
  %v1799 = vshll.u32 %v1798, 30
  %v1800 = vsub.s32 %v1796, %v1799
  %vm1801 = vcmp.lt.s32.totalorder %v1800, 0
  %v1802 = vsub.s32 0, %v1800
  %v1803 = vsel %vm1801, %v1802, %v1800
  %v1804 = vclz %v1803
  %v1805 = vsub.s32 %v1804, 2
  %vm1806 = vcmp.gt.s32.totalorder 0, %v1805
  %v1807 = vsel %vm1806, 0, %v1805
  %v1808 = vsub.s32 32, %v1807
  %v1809 = vshll.u32 %v1800, %v1807
  %v1810 = vshrl.u32 %v1792, %v1808
  %v1811 = vor.u32 %v1809, %v1810
  %v1812 = vsub.s32 4294967266, %v1807
  %v1813 = vadd.s32 %v1812, 127
  %v1814 = vshll.u32 %v1813, 23
  %v1815 = vor.u32 4788187, %v1814
  %v1816 = vand.u32 2147483647, %v1815
  %v1818 = vcvt.s32.f32 %v1811
  %v1819 = vmul.f32 %v1818, %v1816
  %v1820 = vxor.u32 %v1819, 2147483648
  %v1821 = vsel %vm1738, %v1820, %v1819
  %v1822 = vsub.s32 4, %v1798
  %v1823 = vsel %vm1738, %v1822, %v1798
  %v1824 = vsel %vm1737, %v173, %v1821
  %v1825 = vsel %vm1737, 0, %v1823
  %v1826 = vcosq.f32.pop %v1824
  %v1827 = vsinq.f32.pop %v1824
  %vm1828 = vweird.f32 %v173
  %v1829 = vadd.s32 %v1825, 3
  %v1830 = vand.u32 %v1829, 3
  %vm1831 = vcmp.lt.s32.totalorder %v1830, 2
  %vm1832 = vcmp.eq.s32.totalorder %v1830, 0
  %v1833 = vxor.u32 %v1827, 2147483648
  %v1834 = vsel %vm1832, %v1826, %v1833
  %vm1835 = vcmp.eq.s32.totalorder %v1830, 2
  %v1836 = vxor.u32 %v1826, 2147483648
  %v1837 = vsel %vm1835, %v1836, %v1827
  %v1838 = vsel %vm1831, %v1834, %v1837
  %v1839 = vsel %vm1828, nan, %v1838
  %vm1840 = vcmask 261120
  %1841 = vst.msk [vmem:[%s3] sm:$0xff] %vm1840, %v279
  %1842 = vst.msk [vmem:[%s3 + $0x8] sm:$0xff] %vm1840, %v383
  %1843 = vst.msk [vmem:[%s3 + $0x10] sm:$0xff] %vm1840, %v487
  %1844 = vst.msk [vmem:[%s3 + $0x18] sm:$0xff] %vm1840, %v591
  %1845 = vst.msk [vmem:[%s3 + $0x20] sm:$0xff] %vm1840, %v695
  %1846 = vst.msk [vmem:[%s3 + $0x28] sm:$0xff] %vm1840, %v799
  %1847 = vst.msk [vmem:[%s3 + $0x30] sm:$0xff] %vm1840, %v903
  %1848 = vst.msk [vmem:[%s3 + $0x38] sm:$0xff] %vm1840, %v1007
  %1849 = vst.msk [vmem:[%s3 + $0x40] sm:$0xff] %vm1840, %v1111
  %1850 = vst.msk [vmem:[%s3 + $0x48] sm:$0xff] %vm1840, %v1215
  %1851 = vst.msk [vmem:[%s3 + $0x50] sm:$0xff] %vm1840, %v1319
  %1852 = vst.msk [vmem:[%s3 + $0x58] sm:$0xff] %vm1840, %v1423
  %1853 = vst.msk [vmem:[%s3 + $0x60] sm:$0xff] %vm1840, %v1527
  %1854 = vst.msk [vmem:[%s3 + $0x68] sm:$0xff] %vm1840, %v1631
  %1855 = vst.msk [vmem:[%s3 + $0x70] sm:$0xff] %vm1840, %v1735
  %1856 = vst.msk [vmem:[%s3 + $0x78] sm:$0xff] %vm1840, %v1839
  // Predicated region
  $region14: #{tpu_custom_call.1} parent=0 // pred_check
    _
  $region15: #{tpu_custom_call.1} parent=0 // pred_check_branch
    %1858 = sbr.rel (0) target = $region17
  $region16: #{tpu_custom_call.1} parent=0 // pred_region
    _
  $region17: #{tpu_custom_call.1} parent=0 // pred_fallthru
    _
  // Predicated region
  $region18: #{tpu_custom_call.1} parent=0 // pred_check
    _
  $region19: #{tpu_custom_call.1} parent=0 // pred_check_branch
    %1860 = sbr.rel (0) target = $region21
  $region20: #{tpu_custom_call.1} parent=0 // pred_region
    _
  $region21: #{tpu_custom_call.1} parent=0 // pred_fallthru
    _

</llo_original>
